<compile_context>
chip_gen: v6e
topology: v6e:2x2x1
jax: 0.10.0
libtpu: 0.0.40
codegen_flags: <defaults>
</compile_context>

<pallas_src>
import jax
import jax.numpy as jnp
from jax import lax
from jax.experimental import pallas as pl
from jax.experimental.pallas import tpu as pltpu

EPS = 1e-5


# --------------------------------------------------------------------------- #
# Kernel bodies
# --------------------------------------------------------------------------- #
def _conv3x3_core(a, w_ref, pad_ref, y_ref, s_ref, m2_ref):
    """3x3 / stride-1 / pad-1 conv of `a` (TB,H,W,C), NHWC, channels on lanes.

    Also emits per-tile (sum, tile-centered sum-of-squares) of the f32
    accumulator for the cross-tile (Chan) BatchNorm reduction.
    """
    TB, H, W, C = a.shape
    Cout = y_ref.shape[-1]
    rows = TB * H * W

    # Per-tile halo scratch: zero ONLY the 1-pixel border (scratch persists
    # across grid steps and the batch axis may be core-sharded, so this must
    # run every step), then write the interior once.
    zrow = jnp.zeros((TB, 1, W + 2, C), pad_ref.dtype)
    zcol = jnp.zeros((TB, H, 1, C), pad_ref.dtype)
    pad_ref[:, 0:1, :, :] = zrow
    pad_ref[:, H + 1:H + 2, :, :] = zrow
    pad_ref[:, 1:H + 1, 0:1, :] = zcol
    pad_ref[:, 1:H + 1, W + 1:W + 2, :] = zcol
    pad_ref[:, 1:H + 1, 1:W + 1, :] = a

    if C % 128 == 0:
        # Lane-aligned channels: channel-axis concat is repack-free, a single
        # fused MXU matmul with contraction K = 9*C is best.
        taps = [pad_ref[:, kh:kh + H, kw:kw + W, :]
                for kh in range(3) for kw in range(3)]
        patches = jnp.concatenate(taps, axis=-1).reshape(rows, 9 * C)
        acc = jnp.dot(patches, w_ref[...], preferred_element_type=jnp.float32)
    else:
        # Lane-misaligned channels (4 / 64): skip the lane-axis im2col concat
        # and its 9x-tile patches buffer; accumulate 9 MXU matmuls taken
        # directly on the shifted windows of the halo scratch.
        acc = None
        for kh in range(3):
            for kw in range(3):
                t = kh * 3 + kw
                win = pad_ref[:, kh:kh + H, kw:kw + W, :].reshape(rows, C)
                tap = w_ref[t * C:(t + 1) * C, :]
                p = jnp.dot(win, tap, preferred_element_type=jnp.float32)
                acc = p if acc is None else acc + p

    y_ref[...] = acc.reshape(TB, H, W, Cout).astype(y_ref.dtype)

    # Tile-centered one-pass statistics (avoids sumsq/n - mean^2 cancellation);
    # combined across tiles on the host with Chan's parallel formula.
    s = jnp.sum(acc, axis=0, keepdims=True)            # (1, Cout)
    mean_t = s * (1.0 / rows)
    d = acc - mean_t
    m2 = jnp.sum(d * d, axis=0, keepdims=True)         # (1, Cout)
    s_ref[...] = s.reshape(1, 1, Cout)
    m2_ref[...] = m2.reshape(1, 1, Cout)


def _conv1_kernel(x_ref, w_ref, y_ref, s_ref, m2_ref, pad_ref):
    a = x_ref[...].astype(pad_ref.dtype)
    _conv3x3_core(a, w_ref, pad_ref, y_ref, s_ref, m2_ref)


def _bn_relu_conv2_kernel(y1_ref, scale_ref, shift_ref, w_ref,
                          y_ref, s_ref, m2_ref, pad_ref):
    C = y1_ref.shape[-1]
    a = (y1_ref[...].astype(jnp.float32) * scale_ref[...].reshape(1, 1, 1, C)
         + shift_ref[...].reshape(1, 1, 1, C))
    a = jnp.maximum(a, 0.0).astype(pad_ref.dtype)
    _conv3x3_core(a, w_ref, pad_ref, y_ref, s_ref, m2_ref)


def _bn_add_relu_kernel(y2_ref, x_ref, scale_ref, shift_ref, o_ref):
    C = y2_ref.shape[-1]
    y = (y2_ref[...].astype(jnp.float32) * scale_ref[...].reshape(1, 1, 1, C)
         + shift_ref[...].reshape(1, 1, 1, C))
    o_ref[...] = jnp.maximum(y + x_ref[...].astype(jnp.float32),
                             0.0).astype(o_ref.dtype)


# --------------------------------------------------------------------------- #
# Host-side glue
# --------------------------------------------------------------------------- #
def _bn_scale_shift(part_sum, part_m2, n_tile, n, gamma, beta):
    """Combine per-tile (sum, centered M2) with Chan's formula -> BN affine."""
    s_t = part_sum[:, 0, :].astype(jnp.float32)        # (nbt, C)
    m2_t = part_m2[:, 0, :].astype(jnp.float32)        # (nbt, C)
    mean = jnp.sum(s_t, axis=0) / n                    # (C,)
    mean_t = s_t / n_tile
    m2 = jnp.sum(m2_t, axis=0) + n_tile * jnp.sum(
        (mean_t - mean[None, :]) ** 2, axis=0)
    var = jnp.maximum(m2 / n, 0.0)                     # biased (training) var
    scale = gamma * lax.rsqrt(var + EPS)
    shift = beta - mean * scale
    return (scale.reshape(1, -1).astype(jnp.float32),
            shift.reshape(1, -1).astype(jnp.float32))


def _pick_vmem_limit():
    """~75% of physical VMEM, capped at 96 MiB: v5e/v6e (128 MiB) -> 96 MiB,
    v7x (64 MiB) -> 48 MiB.  Conservative fallback if the query fails."""
    try:
        cap = int(pltpu.get_tpu_info().vmem_capacity_bytes)
    except Exception:
        cap = 64 * 1024 * 1024
    return max(32 * 1024 * 1024, min(96 * 1024 * 1024, cap * 3 // 4))


def _auto_batch_tile(B, H, W, Cin, Cout, act_bytes, cbytes, vmem_limit):
    """Largest batch tile dividing B whose per-step working set fits ~45% of
    the scoped-VMEM budget (fewer, larger grid steps — matters most on v5e)."""
    best = 1
    cmax = max(Cin, Cout)
    hw = H * W
    for tb in range(1, B + 1):
        if B % tb:
            continue
        est = (2 * tb * hw * Cin * 4                       # input tile (2 bufs)
               + 2 * tb * hw * Cout * act_bytes            # output tile (2 bufs)
               + tb * (H + 2) * (W + 2) * cmax * cbytes    # halo scratch
               + tb * hw * Cout * 4                        # f32 accumulator
               + 9 * cmax * Cout * cbytes)                 # weights
        if est <= 0.45 * vmem_limit:
            best = tb
    return best


def basic_block_nhwc(x_nhwc, w1_hwio, w2_hwio, g1, b1, g2, b2, *,
                     batch_tile=None, compute_dtype=jnp.bfloat16,
                     act_dtype=None, deep_buffer=True):
    """BasicBlock forward on NHWC input.

    compute_dtype: MXU operand dtype (bf16 default for v6e/v7x throughput;
      accumulation and BN statistics are always f32).  Pass jnp.float32 for a
      numerically faithful match of the f32 PyTorch module.
    act_dtype: storage dtype of the inter-pass activations y1/y2 (default:
      same as compute_dtype) — bf16 halves inter-pass HBM traffic.
    """
    B, H, W, Cin = x_nhwc.shape
    Cout = w1_hwio.shape[-1]
    assert Cin == Cout, "stride=1 / no-downsample BasicBlock needs Cin == Cout"

    act_dtype = compute_dtype if act_dtype is None else act_dtype
    cbytes = jnp.dtype(compute_dtype).itemsize
    abytes = jnp.dtype(act_dtype).itemsize

    vmem_limit = _pick_vmem_limit()
    tb = batch_tile if batch_tile is not None else _auto_batch_tile(
        B, H, W, Cin, Cout, abytes, cbytes, vmem_limit)
    assert B % tb == 0
    nbt = B // tb
    n = B * H * W
    n_tile = tb * H * W

    # (3,3,Cin,Cout) -> (9*Cin,Cout); row order (kh,kw,cin) matches tap order.
    w1r = w1_hwio.reshape(9 * Cin, Cout).astype(compute_dtype)
    w2r = w2_hwio.reshape(9 * Cout, Cout).astype(compute_dtype)

    cparams = pltpu.CompilerParams(
        dimension_semantics=("parallel",),     # batch axis shardable on v7x
        vmem_limit_bytes=vmem_limit,
    )

    def tile_spec(c):
        return pl.BlockSpec((tb, H, W, c), lambda i: (i, 0, 0, 0))

    def buffered_tile_spec(c, enable):
        # Deeper (3-way) pipelining on the activation inputs of the cheap
        # elementwise pass 3 hides DMA latency double-buffering leaves exposed.
        if enable and hasattr(pl, "Buffered"):
            try:
                return pl.BlockSpec((tb, H, W, c), lambda i: (i, 0, 0, 0),
                                    pipeline_mode=pl.Buffered(3))
            except TypeError:
                pass
        return tile_spec(c)

    def bcast_spec(shape):
        return pl.BlockSpec(shape, lambda i: tuple(0 for _ in shape))

    stats_spec = pl.BlockSpec((1, 1, Cout), lambda i: (i, 0, 0))
    stats_shape = jax.ShapeDtypeStruct((nbt, 1, Cout), jnp.float32)
    act_shape = jax.ShapeDtypeStruct((B, H, W, Cout), act_dtype)

    # ---- pass 1: conv1 + per-tile BN1 partial stats ------------------------
    y1, s1, m21 = pl.pallas_call(
        _conv1_kernel,
        grid=(nbt,),
        in_specs=[tile_spec(Cin), bcast_spec((9 * Cin, Cout))],
        out_specs=(tile_spec(Cout), stats_spec, stats_spec),
        out_shape=(act_shape, stats_shape, stats_shape),
        scratch_shapes=[pltpu.VMEM((tb, H + 2, W + 2, Cin), compute_dtype)],
        compiler_params=cparams,
    )(x_nhwc, w1r)

    scale1, shift1 = _bn_scale_shift(s1, m21, n_tile, n, g1, b1)

    # ---- pass 2: bn1 + relu + conv2 + per-tile BN2 partial stats -----------
    y2, s2, m22 = pl.pallas_call(
        _bn_relu_conv2_kernel,
        grid=(nbt,),
        in_specs=[tile_spec(Cout), bcast_spec((1, Cout)), bcast_spec((1, Cout)),
                  bcast_spec((9 * Cout, Cout))],
        out_specs=(tile_spec(Cout), stats_spec, stats_spec),
        out_shape=(act_shape, stats_shape, stats_shape),
        scratch_shapes=[pltpu.VMEM((tb, H + 2, W + 2, Cout), compute_dtype)],
        compiler_params=cparams,
    )(y1, scale1, shift1, w2r)

    scale2, shift2 = _bn_scale_shift(s2, m22, n_tile, n, g2, b2)

    # ---- pass 3: bn2 + residual add + relu ---------------------------------
    def run_pass3(use_buffered):
        return pl.pallas_call(
            _bn_add_relu_kernel,
            grid=(nbt,),
            in_specs=[buffered_tile_spec(Cout, use_buffered),
                      buffered_tile_spec(Cin, use_buffered),
                      bcast_spec((1, Cout)), bcast_spec((1, Cout))],
            out_specs=tile_spec(Cout),
            out_shape=jax.ShapeDtypeStruct((B, H, W, Cout), x_nhwc.dtype),
            compiler_params=cparams,
        )(y2, x_nhwc, scale2, shift2)

    want_buffered = deep_buffer and nbt >= 2
    try:
        out = run_pass3(want_buffered)
    except Exception:
        if not want_buffered:
            raise
        out = run_pass3(False)        # fall back to default double-buffering
    return out


def basic_block_nchw(x_nchw, w1_hwio, w2_hwio, g1, b1, g2, b2, **kw):
    x_nhwc = jnp.transpose(x_nchw, (0, 2, 3, 1))
    out_nhwc = basic_block_nhwc(x_nhwc, w1_hwio, w2_hwio, g1, b1, g2, b2, **kw)
    return jnp.transpose(out_nhwc, (0, 3, 1, 2))


# --------------------------------------------------------------------------- #
# Plain-JAX reference (same math, XLA conv) for a sanity check
# --------------------------------------------------------------------------- #
def _reference_nchw(x_nchw, w1_hwio, w2_hwio, g1, b1, g2, b2):
    def conv(x, w):
        return lax.conv_general_dilated(
            x, w, window_strides=(1, 1), padding="SAME",
            dimension_numbers=("NHWC", "HWIO", "NHWC"))

    def bn(x, g, b):
        m = jnp.mean(x, axis=(0, 1, 2), keepdims=True)
        v = jnp.mean((x - m) ** 2, axis=(0, 1, 2), keepdims=True)
        return (x - m) * lax.rsqrt(v + EPS) * g + b

    x = jnp.transpose(x_nchw, (0, 2, 3, 1))
    out = jnp.maximum(bn(conv(x, w1_hwio), g1, b1), 0.0)
    out = bn(conv(out, w2_hwio), g2, b2)
    out = jnp.maximum(out + x, 0.0)
    return jnp.transpose(out, (0, 3, 1, 2))


if __name__ == "__main__":
    B, C, H, W = 2, 4, 16, 16          # in_channels == out_channels, stride=1
    key = jax.random.PRNGKey(0)
    kx, kw1, kw2, kg1, kb1, kg2, kb2 = jax.random.split(key, 7)

    x = jax.random.normal(kx, (B, C, H, W), dtype=jnp.float32)           # NCHW
    w1 = 0.3 * jax.random.normal(kw1, (3, 3, C, C), dtype=jnp.float32)   # HWIO
    w2 = 0.3 * jax.random.normal(kw2, (3, 3, C, C), dtype=jnp.float32)   # HWIO
    g1 = 1.0 + 0.1 * jax.random.normal(kg1, (C,), dtype=jnp.float32)
    b1 = 0.1 * jax.random.normal(kb1, (C,), dtype=jnp.float32)
    g2 = 1.0 + 0.1 * jax.random.normal(kg2, (C,), dtype=jnp.float32)
    b2 = 0.1 * jax.random.normal(kb2, (C,), dtype=jnp.float32)

    ref = jax.block_until_ready(_reference_nchw(x, w1, w2, g1, b1, g2, b2))

    # Numerically faithful config (f32 MXU operands, f32 inter-pass acts).
    out_f32 = jax.block_until_ready(
        basic_block_nchw(x, w1, w2, g1, b1, g2, b2,
                         batch_tile=1, compute_dtype=jnp.float32))
    assert out_f32.shape == (B, C, H, W)
    err32 = float(jnp.max(jnp.abs(out_f32 - ref)))
    assert err32 < 1e-3, f"f32 mismatch vs JAX reference: {err32}"

    # Throughput config (default: bf16 MXU operands + bf16 inter-pass acts,
    # f32 accumulation / BN stats) — the v6e/v7x-oriented default.
    out_bf16 = jax.block_until_ready(
        basic_block_nchw(x, w1, w2, g1, b1, g2, b2))
    err16 = float(jnp.max(jnp.abs(out_bf16 - ref)))   # typically ~1e-2
    assert err16 < 1e-1, f"bf16 mismatch vs JAX reference: {err16}"

    print("KERNEL_OK")
</pallas_src>

<mosaic_0001>
module attributes {stable_mosaic.version = 11 : i64} {
  func.func @_conv1_kernel(%arg0: i32, %arg1: memref<1x16x16x4xf32, #tpu.memory_space<vmem>>, %arg2: memref<36x4xf32, #tpu.memory_space<vmem>>, %arg3: memref<1x16x16x4xf32, #tpu.memory_space<vmem>>, %arg4: memref<1x1x4xf32, #tpu.memory_space<vmem>>, %arg5: memref<1x1x4xf32, #tpu.memory_space<vmem>>, %arg6: memref<1x18x18x4xf32, #tpu.memory_space<vmem>>) attributes {dimension_semantics = [#tpu.dimension_semantics<parallel>], iteration_bounds = array<i64: 2>, scalar_prefetch = 0 : i64, scratch_operands = 1 : i64, tpu.core_type = #tpu.core_type<tc>, window_params = [{transform_indices = @transform_0, window_bounds = array<i64: 1, 16, 16, 4>}, {pipeline_mode = #tpu.pipeline_mode<synchronous>, transform_indices = @transform_1, window_bounds = array<i64: 36, 4>}, {transform_indices = @transform_2, window_bounds = array<i64: 1, 16, 16, 4>}, {transform_indices = @transform_3, window_bounds = array<i64: 1, 1, 4>}, {transform_indices = @transform_4, window_bounds = array<i64: 1, 1, 4>}]} {
    %c0 = arith.constant 0 : index
    %c0_0 = arith.constant 0 : index
    %c0_1 = arith.constant 0 : index
    %c0_2 = arith.constant 0 : index
    %0 = vector.load %arg1[%c0, %c0_0, %c0_1, %c0_2] : memref<1x16x16x4xf32, #tpu.memory_space<vmem>>, vector<1x16x16x4xf32>
    %cst = arith.constant 0.000000e+00 : f32
    %1 = vector.broadcast %cst : f32 to vector<1x1x18x4xf32>
    %cst_3 = arith.constant 0.000000e+00 : f32
    %2 = vector.broadcast %cst_3 : f32 to vector<1x16x1x4xf32>
    %c0_4 = arith.constant 0 : index
    %c0_5 = arith.constant 0 : index
    %c0_6 = arith.constant 0 : index
    %c0_7 = arith.constant 0 : index
    %3 = vector.load %arg6[%c0_4, %c0_5, %c0_6, %c0_7] : memref<1x18x18x4xf32, #tpu.memory_space<vmem>>, vector<1x1x18x4xf32>
    tpu.vector_store %arg6[%c0_4, %c0_5, %c0_6, %c0_7], %1 {strides = array<i32>} : memref<1x18x18x4xf32, #tpu.memory_space<vmem>>, vector<1x1x18x4xf32>,
    %c0_8 = arith.constant 0 : index
    %c17 = arith.constant 17 : index
    %c0_9 = arith.constant 0 : index
    %c0_10 = arith.constant 0 : index
    %4 = vector.load %arg6[%c0_8, %c17, %c0_9, %c0_10] : memref<1x18x18x4xf32, #tpu.memory_space<vmem>>, vector<1x1x18x4xf32>
    tpu.vector_store %arg6[%c0_8, %c17, %c0_9, %c0_10], %1 {strides = array<i32>} : memref<1x18x18x4xf32, #tpu.memory_space<vmem>>, vector<1x1x18x4xf32>,
    %c0_11 = arith.constant 0 : index
    %c1 = arith.constant 1 : index
    %c0_12 = arith.constant 0 : index
    %c0_13 = arith.constant 0 : index
    %5 = vector.load %arg6[%c0_11, %c1, %c0_12, %c0_13] : memref<1x18x18x4xf32, #tpu.memory_space<vmem>>, vector<1x16x1x4xf32>
    tpu.vector_store %arg6[%c0_11, %c1, %c0_12, %c0_13], %2 {strides = array<i32>} : memref<1x18x18x4xf32, #tpu.memory_space<vmem>>, vector<1x16x1x4xf32>,
    %c0_14 = arith.constant 0 : index
    %c1_15 = arith.constant 1 : index
    %c17_16 = arith.constant 17 : index
    %c0_17 = arith.constant 0 : index
    %6 = vector.load %arg6[%c0_14, %c1_15, %c17_16, %c0_17] : memref<1x18x18x4xf32, #tpu.memory_space<vmem>>, vector<1x16x1x4xf32>
    tpu.vector_store %arg6[%c0_14, %c1_15, %c17_16, %c0_17], %2 {strides = array<i32>} : memref<1x18x18x4xf32, #tpu.memory_space<vmem>>, vector<1x16x1x4xf32>,
    %c0_18 = arith.constant 0 : index
    %c1_19 = arith.constant 1 : index
    %c1_20 = arith.constant 1 : index
    %c0_21 = arith.constant 0 : index
    %7 = vector.load %arg6[%c0_18, %c1_19, %c1_20, %c0_21] : memref<1x18x18x4xf32, #tpu.memory_space<vmem>>, vector<1x16x16x4xf32>
    tpu.vector_store %arg6[%c0_18, %c1_19, %c1_20, %c0_21], %0 {strides = array<i32>} : memref<1x18x18x4xf32, #tpu.memory_space<vmem>>, vector<1x16x16x4xf32>,
    %c0_22 = arith.constant 0 : index
    %c0_23 = arith.constant 0 : index
    %c0_24 = arith.constant 0 : index
    %c0_25 = arith.constant 0 : index
    %8 = vector.load %arg6[%c0_22, %c0_23, %c0_24, %c0_25] : memref<1x18x18x4xf32, #tpu.memory_space<vmem>>, vector<1x16x16x4xf32>
    %9 = vector.shape_cast %8 : vector<1x16x16x4xf32> to vector<256x4xf32>
    %c0_26 = arith.constant 0 : index
    %c0_27 = arith.constant 0 : index
    %10 = vector.load %arg2[%c0_26, %c0_27] : memref<36x4xf32, #tpu.memory_space<vmem>>, vector<4x4xf32>
    %cst_28 = arith.constant dense<0.000000e+00> : vector<256x4xf32>
    %11 = tpu.matmul %9, %10, %cst_28 {dimension_numbers = #tpu.dot_dimension_numbers<[1], [0], [0], [1], [0, 0, 1, 1], [], []>} : vector<256x4xf32>, vector<4x4xf32>, vector<256x4xf32> -> vector<256x4xf32>
    %c0_29 = arith.constant 0 : index
    %c0_30 = arith.constant 0 : index
    %c1_31 = arith.constant 1 : index
    %c0_32 = arith.constant 0 : index
    %12 = vector.load %arg6[%c0_29, %c0_30, %c1_31, %c0_32] : memref<1x18x18x4xf32, #tpu.memory_space<vmem>>, vector<1x16x16x4xf32>
    %13 = vector.shape_cast %12 : vector<1x16x16x4xf32> to vector<256x4xf32>
    %c4 = arith.constant 4 : index
    %c0_33 = arith.constant 0 : index
    %14 = vector.load %arg2[%c4, %c0_33] : memref<36x4xf32, #tpu.memory_space<vmem>>, vector<4x4xf32>
    %cst_34 = arith.constant dense<0.000000e+00> : vector<256x4xf32>
    %15 = tpu.matmul %13, %14, %cst_34 {dimension_numbers = #tpu.dot_dimension_numbers<[1], [0], [0], [1], [0, 0, 1, 1], [], []>} : vector<256x4xf32>, vector<4x4xf32>, vector<256x4xf32> -> vector<256x4xf32>
    %16 = arith.addf %11, %15 : vector<256x4xf32>
    %c0_35 = arith.constant 0 : index
    %c0_36 = arith.constant 0 : index
    %c2 = arith.constant 2 : index
    %c0_37 = arith.constant 0 : index
    %17 = vector.load %arg6[%c0_35, %c0_36, %c2, %c0_37] : memref<1x18x18x4xf32, #tpu.memory_space<vmem>>, vector<1x16x16x4xf32>
    %18 = vector.shape_cast %17 : vector<1x16x16x4xf32> to vector<256x4xf32>
    %c8 = arith.constant 8 : index
    %c0_38 = arith.constant 0 : index
    %19 = vector.load %arg2[%c8, %c0_38] : memref<36x4xf32, #tpu.memory_space<vmem>>, vector<4x4xf32>
    %cst_39 = arith.constant dense<0.000000e+00> : vector<256x4xf32>
    %20 = tpu.matmul %18, %19, %cst_39 {dimension_numbers = #tpu.dot_dimension_numbers<[1], [0], [0], [1], [0, 0, 1, 1], [], []>} : vector<256x4xf32>, vector<4x4xf32>, vector<256x4xf32> -> vector<256x4xf32>
    %21 = arith.addf %16, %20 : vector<256x4xf32>
    %c0_40 = arith.constant 0 : index
    %c1_41 = arith.constant 1 : index
    %c0_42 = arith.constant 0 : index
    %c0_43 = arith.constant 0 : index
    %22 = vector.load %arg6[%c0_40, %c1_41, %c0_42, %c0_43] : memref<1x18x18x4xf32, #tpu.memory_space<vmem>>, vector<1x16x16x4xf32>
    %23 = vector.shape_cast %22 : vector<1x16x16x4xf32> to vector<256x4xf32>
    %c12 = arith.constant 12 : index
    %c0_44 = arith.constant 0 : index
    %24 = vector.load %arg2[%c12, %c0_44] : memref<36x4xf32, #tpu.memory_space<vmem>>, vector<4x4xf32>
    %cst_45 = arith.constant dense<0.000000e+00> : vector<256x4xf32>
    %25 = tpu.matmul %23, %24, %cst_45 {dimension_numbers = #tpu.dot_dimension_numbers<[1], [0], [0], [1], [0, 0, 1, 1], [], []>} : vector<256x4xf32>, vector<4x4xf32>, vector<256x4xf32> -> vector<256x4xf32>
    %26 = arith.addf %21, %25 : vector<256x4xf32>
    %c0_46 = arith.constant 0 : index
    %c1_47 = arith.constant 1 : index
    %c1_48 = arith.constant 1 : index
    %c0_49 = arith.constant 0 : index
    %27 = vector.load %arg6[%c0_46, %c1_47, %c1_48, %c0_49] : memref<1x18x18x4xf32, #tpu.memory_space<vmem>>, vector<1x16x16x4xf32>
    %28 = vector.shape_cast %27 : vector<1x16x16x4xf32> to vector<256x4xf32>
    %c16 = arith.constant 16 : index
    %c0_50 = arith.constant 0 : index
    %29 = vector.load %arg2[%c16, %c0_50] : memref<36x4xf32, #tpu.memory_space<vmem>>, vector<4x4xf32>
    %cst_51 = arith.constant dense<0.000000e+00> : vector<256x4xf32>
    %30 = tpu.matmul %28, %29, %cst_51 {dimension_numbers = #tpu.dot_dimension_numbers<[1], [0], [0], [1], [0, 0, 1, 1], [], []>} : vector<256x4xf32>, vector<4x4xf32>, vector<256x4xf32> -> vector<256x4xf32>
    %31 = arith.addf %26, %30 : vector<256x4xf32>
    %c0_52 = arith.constant 0 : index
    %c1_53 = arith.constant 1 : index
    %c2_54 = arith.constant 2 : index
    %c0_55 = arith.constant 0 : index
    %32 = vector.load %arg6[%c0_52, %c1_53, %c2_54, %c0_55] : memref<1x18x18x4xf32, #tpu.memory_space<vmem>>, vector<1x16x16x4xf32>
    %33 = vector.shape_cast %32 : vector<1x16x16x4xf32> to vector<256x4xf32>
    %c20 = arith.constant 20 : index
    %c0_56 = arith.constant 0 : index
    %34 = vector.load %arg2[%c20, %c0_56] : memref<36x4xf32, #tpu.memory_space<vmem>>, vector<4x4xf32>
    %cst_57 = arith.constant dense<0.000000e+00> : vector<256x4xf32>
    %35 = tpu.matmul %33, %34, %cst_57 {dimension_numbers = #tpu.dot_dimension_numbers<[1], [0], [0], [1], [0, 0, 1, 1], [], []>} : vector<256x4xf32>, vector<4x4xf32>, vector<256x4xf32> -> vector<256x4xf32>
    %36 = arith.addf %31, %35 : vector<256x4xf32>
    %c0_58 = arith.constant 0 : index
    %c2_59 = arith.constant 2 : index
    %c0_60 = arith.constant 0 : index
    %c0_61 = arith.constant 0 : index
    %37 = vector.load %arg6[%c0_58, %c2_59, %c0_60, %c0_61] : memref<1x18x18x4xf32, #tpu.memory_space<vmem>>, vector<1x16x16x4xf32>
    %38 = vector.shape_cast %37 : vector<1x16x16x4xf32> to vector<256x4xf32>
    %c24 = arith.constant 24 : index
    %c0_62 = arith.constant 0 : index
    %39 = vector.load %arg2[%c24, %c0_62] : memref<36x4xf32, #tpu.memory_space<vmem>>, vector<4x4xf32>
    %cst_63 = arith.constant dense<0.000000e+00> : vector<256x4xf32>
    %40 = tpu.matmul %38, %39, %cst_63 {dimension_numbers = #tpu.dot_dimension_numbers<[1], [0], [0], [1], [0, 0, 1, 1], [], []>} : vector<256x4xf32>, vector<4x4xf32>, vector<256x4xf32> -> vector<256x4xf32>
    %41 = arith.addf %36, %40 : vector<256x4xf32>
    %c0_64 = arith.constant 0 : index
    %c2_65 = arith.constant 2 : index
    %c1_66 = arith.constant 1 : index
    %c0_67 = arith.constant 0 : index
    %42 = vector.load %arg6[%c0_64, %c2_65, %c1_66, %c0_67] : memref<1x18x18x4xf32, #tpu.memory_space<vmem>>, vector<1x16x16x4xf32>
    %43 = vector.shape_cast %42 : vector<1x16x16x4xf32> to vector<256x4xf32>
    %c28 = arith.constant 28 : index
    %c0_68 = arith.constant 0 : index
    %44 = vector.load %arg2[%c28, %c0_68] : memref<36x4xf32, #tpu.memory_space<vmem>>, vector<4x4xf32>
    %cst_69 = arith.constant dense<0.000000e+00> : vector<256x4xf32>
    %45 = tpu.matmul %43, %44, %cst_69 {dimension_numbers = #tpu.dot_dimension_numbers<[1], [0], [0], [1], [0, 0, 1, 1], [], []>} : vector<256x4xf32>, vector<4x4xf32>, vector<256x4xf32> -> vector<256x4xf32>
    %46 = arith.addf %41, %45 : vector<256x4xf32>
    %c0_70 = arith.constant 0 : index
    %c2_71 = arith.constant 2 : index
    %c2_72 = arith.constant 2 : index
    %c0_73 = arith.constant 0 : index
    %47 = vector.load %arg6[%c0_70, %c2_71, %c2_72, %c0_73] : memref<1x18x18x4xf32, #tpu.memory_space<vmem>>, vector<1x16x16x4xf32>
    %48 = vector.shape_cast %47 : vector<1x16x16x4xf32> to vector<256x4xf32>
    %c32 = arith.constant 32 : index
    %c0_74 = arith.constant 0 : index
    %49 = vector.load %arg2[%c32, %c0_74] : memref<36x4xf32, #tpu.memory_space<vmem>>, vector<4x4xf32>
    %cst_75 = arith.constant dense<0.000000e+00> : vector<256x4xf32>
    %50 = tpu.matmul %48, %49, %cst_75 {dimension_numbers = #tpu.dot_dimension_numbers<[1], [0], [0], [1], [0, 0, 1, 1], [], []>} : vector<256x4xf32>, vector<4x4xf32>, vector<256x4xf32> -> vector<256x4xf32>
    %51 = arith.addf %46, %50 : vector<256x4xf32>
    %52 = vector.shape_cast %51 : vector<256x4xf32> to vector<1x16x16x4xf32>
    %c0_76 = arith.constant 0 : index
    %c0_77 = arith.constant 0 : index
    %c0_78 = arith.constant 0 : index
    %c0_79 = arith.constant 0 : index
    %53 = vector.load %arg3[%c0_76, %c0_77, %c0_78, %c0_79] : memref<1x16x16x4xf32, #tpu.memory_space<vmem>>, vector<1x16x16x4xf32>
    tpu.vector_store %arg3[%c0_76, %c0_77, %c0_78, %c0_79], %52 {strides = array<i32>} : memref<1x16x16x4xf32, #tpu.memory_space<vmem>>, vector<1x16x16x4xf32>,
    %cst_80 = arith.constant dense<0.000000e+00> : vector<4xf32>
    %54 = vector.multi_reduction <add>, %51, %cst_80 [0] : vector<256x4xf32> to vector<4xf32>
    %55 = vector.shape_cast %54 : vector<4xf32> to vector<1x4xf32>
    %cst_81 = arith.constant 3.906250e-03 : f32
    %56 = vector.broadcast %cst_81 : f32 to vector<1x4xf32>
    %57 = arith.mulf %55, %56 : vector<1x4xf32>
    %58 = vector.broadcast %57 : vector<1x4xf32> to vector<256x4xf32>
    %59 = arith.subf %51, %58 : vector<256x4xf32>
    %60 = arith.mulf %59, %59 : vector<256x4xf32>
    %cst_82 = arith.constant dense<0.000000e+00> : vector<4xf32>
    %61 = vector.multi_reduction <add>, %60, %cst_82 [0] : vector<256x4xf32> to vector<4xf32>
    %62 = vector.shape_cast %61 : vector<4xf32> to vector<1x4xf32>
    %63 = vector.shape_cast %55 : vector<1x4xf32> to vector<1x1x4xf32>
    %c0_83 = arith.constant 0 : index
    %c0_84 = arith.constant 0 : index
    %c0_85 = arith.constant 0 : index
    %64 = vector.load %arg4[%c0_83, %c0_84, %c0_85] : memref<1x1x4xf32, #tpu.memory_space<vmem>>, vector<1x1x4xf32>
    tpu.vector_store %arg4[%c0_83, %c0_84, %c0_85], %63 {strides = array<i32>} : memref<1x1x4xf32, #tpu.memory_space<vmem>>, vector<1x1x4xf32>,
    %65 = vector.shape_cast %62 : vector<1x4xf32> to vector<1x1x4xf32>
    %c0_86 = arith.constant 0 : index
    %c0_87 = arith.constant 0 : index
    %c0_88 = arith.constant 0 : index
    %66 = vector.load %arg5[%c0_86, %c0_87, %c0_88] : memref<1x1x4xf32, #tpu.memory_space<vmem>>, vector<1x1x4xf32>
    tpu.vector_store %arg5[%c0_86, %c0_87, %c0_88], %65 {strides = array<i32>} : memref<1x1x4xf32, #tpu.memory_space<vmem>>, vector<1x1x4xf32>,
    return
  }
  func.func @transform_0(%arg0: i32) -> (i32, i32, i32, i32) {
    %c0_i32 = arith.constant 0 : i32
    %c0_i32_0 = arith.constant 0 : i32
    %c0_i32_1 = arith.constant 0 : i32
    %c0_i32_2 = arith.constant 0 : i32
    return %arg0, %c0_i32, %c0_i32_0, %c0_i32_1 : i32, i32, i32, i32
  }
  func.func @transform_1(%arg0: i32) -> (i32, i32) {
    %c0_i32 = arith.constant 0 : i32
    %c0_i32_0 = arith.constant 0 : i32
    %c0_i32_1 = arith.constant 0 : i32
    return %c0_i32, %c0_i32_0 : i32, i32
  }
  func.func @transform_2(%arg0: i32) -> (i32, i32, i32, i32) {
    %c0_i32 = arith.constant 0 : i32
    %c0_i32_0 = arith.constant 0 : i32
    %c0_i32_1 = arith.constant 0 : i32
    %c0_i32_2 = arith.constant 0 : i32
    return %arg0, %c0_i32, %c0_i32_0, %c0_i32_1 : i32, i32, i32, i32
  }
  func.func @transform_3(%arg0: i32) -> (i32, i32, i32) {
    %c0_i32 = arith.constant 0 : i32
    %c0_i32_0 = arith.constant 0 : i32
    %c0_i32_1 = arith.constant 0 : i32
    return %arg0, %c0_i32, %c0_i32_0 : i32, i32, i32
  }
  func.func @transform_4(%arg0: i32) -> (i32, i32, i32) {
    %c0_i32 = arith.constant 0 : i32
    %c0_i32_0 = arith.constant 0 : i32
    %c0_i32_1 = arith.constant 0 : i32
    return %arg0, %c0_i32, %c0_i32_0 : i32, i32, i32
  }
}

</mosaic_0001>

<llo_original>
// kernel: tpu_custom_call.1
$region0: #{tpu_custom_call.1}
  #allocation0 [shape = 'u32[]', space=smem, size = 0x4, offset = 0x4, fixed_abs, tag = 'smem constant byte address 0x4 - core index']
  #allocation1 [shape = 'u32[144,128]{1,0:T(1,128)}', space=vmem, size = 0x12000, scoped, tag = 'internal scratch']
  #allocation2 [shape = 'f32[1,18,18,4]{3,2,1,0:T(8,128)}', space=vmem, size = 0x36000, scoped, tag = 'scratch operand']
  %s0 = inlined_call_operand.vmem [shape: f32[2,16,16,4], index: 0, kind: input, shape index: {}]
  %s1 = inlined_call_operand.vmem [shape: f32[36,4], index: 1, kind: input, shape index: {}]
  %s2 = inlined_call_operand.vmem [shape: f32[2,16,16,4], index: 2, kind: output, shape index: {0}]
  %s3 = inlined_call_operand.hbm [shape: f32[2,1,4], index: 3, kind: output, shape index: {1}]
  %s4 = inlined_call_operand.hbm [shape: f32[2,1,4], index: 4, kind: output, shape index: {2}]
  %5 = xla_tuple %s2, %s3, %s4
  %s6 = sld [smem:[#allocation0]]
  $region57: #{tpu_custom_call.1} parent=0
    _
  %s8 = ssub.s32 1, %s6
  %s9 = scalar_select 0, %s8, %s6
  $region1: #{tpu_custom_call.1} parent=0
    #allocation3 [shape = 'u8[1024]{0}', space=vmem, size = 0x400, scoped, tag = 'output window, operand 1']
    #allocation4 [shape = 's32[2]{0}', space=sflag, size = 0x8, scoped, tag = 'scoped memory for tpu_custom_call.1']
    #allocation5 [shape = 'u8[1024]{0}', space=vmem, size = 0x400, scoped, tag = 'output window, operand 2']
    #allocation6 [shape = 's32[2]{0}', space=sflag, size = 0x8, scoped, tag = 'scoped memory for tpu_custom_call.1']
    %10 = vsyncpa [#allocation4], 0
    %s11 = scalar_lea.sflag [#allocation4], 1
    %12 = vsyncpa %s11, 0
    %13 = vsyncpa [#allocation6], 0
    %s14 = scalar_lea.sflag [#allocation6], 1
    %15 = vsyncpa %s14, 0
    loop: start=0, step=1, limit=4
    $region2: #{tpu_custom_call.1} parent=1 // loop_pre_header
      _
    $region3: #{tpu_custom_call.1} parent=1 // loop_header
      %s17 = sphi 0, %s21
      %p18 = scmp.ge.s32.totalorder %s17, 4
      %s27 = sphi 0, %s29
      %s30 = sphi 0, %s27
      %s31 = sphi 0, %s30
      %s47 = sphi 0, %s31
      %s51 = sphi 0, %s51
      %s53 = sphi 0, %s51
      %s54 = sphi 0, %s53
      %s68 = sphi 0, %s54
      %s74 = sphi 0, %s76
      %s77 = sphi 0, %s74
      %s78 = sphi 0, %s77
      %s94 = sphi 0, %s78
      %s100 = sphi 0, %s102
      %s103 = sphi 0, %s100
      %s104 = sphi 0, %s103
      %s120 = sphi 0, %s104
      %s126 = sphi 0, %s128
      %s129 = sphi 0, %s126
      %s130 = sphi 0, %s129
      %s146 = sphi 0, %s130
    $region4: #{tpu_custom_call.1} parent=1 // loop_header_branch
      %20 = sbr.rel (%p18) target = $region8
    $region5: #{tpu_custom_call.1} parent=1 // loop_body
      %s22 = ssub.s32 %s17, 1
      %s23 = ssub.s32 %s17, 2
      %s24 = sadd.s32 %s17, 1
      %s25 = ssub.s32 %s17, %s24
      %p26 = scmp.eq.s32.totalorder %s25, 0
      %s28 = sadd.s32 %s27, 1
      %s29 = scalar_select %p26, %s27, %s28
      %p32 = pneg %p26
      %p33 = scmp.eq.s32.totalorder %s17, 1
      %p34 = por %p32, %p33
      %p35 = scmp.ne.s32.totalorder %s27, %s30
      %p36 = scmp.eq.s32.totalorder %s17, 0
      %p37 = por %p35, %p36
      %p38 = scmp.ne.s32.totalorder %s27, %s30
      %p39 = scmp.eq.s32.totalorder %s22, 1
      %p40 = por %p38, %p39
      %p41 = scmp.ne.s32.totalorder %s30, %s31
      %p42 = scmp.eq.s32.totalorder %s22, 0
      %p43 = por %p41, %p42
      %p44 = scmp.ne.s32.totalorder %s30, %s31
      %p45 = scmp.eq.s32.totalorder %s23, 1
      %p46 = por %p44, %p45
      %p48 = scmp.ne.s32.totalorder %s31, %s47
      %p49 = scmp.eq.s32.totalorder %s23, 0
      %p50 = por %p48, %p49
      %s52 = sadd.s32 %s51, 1
      %p55 = scmp.eq.s32.totalorder %s17, 1
      %p56 = scmp.ne.s32.totalorder %s51, %s53
      %p57 = scmp.eq.s32.totalorder %s17, 0
      %p58 = por %p56, %p57
      %p59 = scmp.ne.s32.totalorder %s51, %s53
      %p60 = scmp.eq.s32.totalorder %s22, 1
      %p61 = por %p59, %p60
      %p62 = scmp.ne.s32.totalorder %s53, %s54
      %p63 = scmp.eq.s32.totalorder %s22, 0
      %p64 = por %p62, %p63
      %p65 = scmp.ne.s32.totalorder %s53, %s54
      %p66 = scmp.eq.s32.totalorder %s23, 1
      %p67 = por %p65, %p66
      %p69 = scmp.ne.s32.totalorder %s54, %s68
      %p70 = scmp.eq.s32.totalorder %s23, 0
      %p71 = por %p69, %p70
      %s72 = ssub.s32 %s17, %s24
      %p73 = scmp.eq.s32.totalorder %s72, 0
      %s75 = sadd.s32 %s74, 1
      %s76 = scalar_select %p73, %s74, %s75
      %p79 = pneg %p73
      %p80 = scmp.eq.s32.totalorder %s17, 1
      %p81 = por %p79, %p80
      %p82 = scmp.ne.s32.totalorder %s74, %s77
      %p83 = scmp.eq.s32.totalorder %s17, 0
      %p84 = por %p82, %p83
      %p85 = scmp.ne.s32.totalorder %s74, %s77
      %p86 = scmp.eq.s32.totalorder %s22, 1
      %p87 = por %p85, %p86
      %p88 = scmp.ne.s32.totalorder %s77, %s78
      %p89 = scmp.eq.s32.totalorder %s22, 0
      %p90 = por %p88, %p89
      %p91 = scmp.ne.s32.totalorder %s77, %s78
      %p92 = scmp.eq.s32.totalorder %s23, 1
      %p93 = por %p91, %p92
      %p95 = scmp.ne.s32.totalorder %s78, %s94
      %p96 = scmp.eq.s32.totalorder %s23, 0
      %p97 = por %p95, %p96
      %s98 = ssub.s32 %s17, %s24
      %p99 = scmp.eq.s32.totalorder %s98, 0
      %s101 = sadd.s32 %s100, 1
      %s102 = scalar_select %p99, %s100, %s101
      %p105 = pneg %p99
      %p106 = scmp.eq.s32.totalorder %s17, 1
      %p107 = por %p105, %p106
      %p108 = scmp.ne.s32.totalorder %s100, %s103
      %p109 = scmp.eq.s32.totalorder %s17, 0
      %p110 = por %p108, %p109
      %p111 = scmp.ne.s32.totalorder %s100, %s103
      %p112 = scmp.eq.s32.totalorder %s22, 1
      %p113 = por %p111, %p112
      %p114 = scmp.ne.s32.totalorder %s103, %s104
      %p115 = scmp.eq.s32.totalorder %s22, 0
      %p116 = por %p114, %p115
      %p117 = scmp.ne.s32.totalorder %s103, %s104
      %p118 = scmp.eq.s32.totalorder %s23, 1
      %p119 = por %p117, %p118
      %p121 = scmp.ne.s32.totalorder %s104, %s120
      %p122 = scmp.eq.s32.totalorder %s23, 0
      %p123 = por %p121, %p122
      %s124 = ssub.s32 %s17, %s24
      %p125 = scmp.eq.s32.totalorder %s124, 0
      %s127 = sadd.s32 %s126, 1
      %s128 = scalar_select %p125, %s126, %s127
      %p131 = pneg %p125
      %p132 = scmp.eq.s32.totalorder %s17, 1
      %p133 = por %p131, %p132
      %p134 = scmp.ne.s32.totalorder %s126, %s129
      %p135 = scmp.eq.s32.totalorder %s17, 0
      %p136 = por %p134, %p135
      %p137 = scmp.ne.s32.totalorder %s126, %s129
      %p138 = scmp.eq.s32.totalorder %s22, 1
      %p139 = por %p137, %p138
      %p140 = scmp.ne.s32.totalorder %s129, %s130
      %p141 = scmp.eq.s32.totalorder %s22, 0
      %p142 = por %p140, %p141
      %p143 = scmp.ne.s32.totalorder %s129, %s130
      %p144 = scmp.eq.s32.totalorder %s23, 1
      %p145 = por %p143, %p144
      %p147 = scmp.ne.s32.totalorder %s130, %s146
      %p148 = scmp.eq.s32.totalorder %s23, 0
      %p149 = por %p147, %p148
      %p150 = scmp.le.s32.totalorder 1, %s17
      %p151 = scmp.lt.s32.totalorder %s17, 3
      %p152 = pnand %p150, %p151
      %p153 = pneg %p152
      // Predicated region
      $region9: #{tpu_custom_call.1} parent=5 // pred_check
        _
      $region10: #{tpu_custom_call.1} parent=5 // pred_check_branch
        %155 = sbr.rel (%p152) target = $region12
      $region11: #{tpu_custom_call.1} parent=5 // pred_region
        %s156 = ssub.s32 %s17, 1
        // Predicated region
        $region13: #{tpu_custom_call.1} parent=11 // pred_check
          %p157 = pneg %p64
        $region14: #{tpu_custom_call.1} parent=11 // pred_check_branch
          %159 = sbr.rel (%p157) target = $region16
        $region15: #{tpu_custom_call.1} parent=11 // pred_region
          _
        $region16: #{tpu_custom_call.1} parent=11 // pred_fallthru
          _
      $region12: #{tpu_custom_call.1} parent=5 // pred_fallthru
        _
      %p160 = scmp.lt.s32.totalorder %s17, 2
      // Predicated region
      $region17: #{tpu_custom_call.1} parent=5 // pred_check
        %p161 = pneg %p160
      $region18: #{tpu_custom_call.1} parent=5 // pred_check_branch
        %163 = sbr.rel (%p161) target = $region20
      $region19: #{tpu_custom_call.1} parent=5 // pred_region
        // Predicated region
        $region21: #{tpu_custom_call.1} parent=19 // pred_check
          %p164 = pneg %p37
        $region22: #{tpu_custom_call.1} parent=19 // pred_check_branch
          %166 = sbr.rel (%p164) target = $region24
        $region23: #{tpu_custom_call.1} parent=19 // pred_region
          %p167 = scmp.lt.s32.totalorder %s17, 1
          %s168 = scalar_select %p167, %s17, 1
          %s169 = smul.addr %s168, 32
          %s170 = smul.addr %s169, 8
          %s171 = scalar_lea.vmem %s0, %s170
        $region24: #{tpu_custom_call.1} parent=19 // pred_fallthru
          _
      $region20: #{tpu_custom_call.1} parent=5 // pred_fallthru
        _
      %p172 = scmp.le.s32.totalorder 1, %s17
      %p173 = scmp.lt.s32.totalorder %s17, 3
      %p174 = pnand %p172, %p173
      %p175 = pneg %p174
      // Predicated region
      $region25: #{tpu_custom_call.1} parent=5 // pred_check
        _
      $region26: #{tpu_custom_call.1} parent=5 // pred_check_branch
        %177 = sbr.rel (%p174) target = $region28
      $region27: #{tpu_custom_call.1} parent=5 // pred_region
        %s178 = ssub.s32 %s17, 1
        %p179 = scmp.lt.s32.totalorder %s22, 1
        %s180 = scalar_select %p179, %s22, 1
        %s181 = smul.addr %s180, 32
        %s182 = smul.addr %s181, 8
        %s183 = scalar_lea.vmem %s0, %s182
        %p184 = pneg %p43
        %p185 = pneg %p40
        %p186 = pneg %p64
        %p187 = pneg %p61
        %p188 = pneg %p90
        %p189 = pneg %p87
        %p190 = scmp.lt.s32.totalorder %s22, 1
        %s191 = scalar_select %p190, %s22, 1
        %s192 = smul.addr %s191, 32
        %s193 = smul.addr %s192, 8
        %s194 = scalar_lea.vmem %s2, %s193
        %p195 = pneg %p116
        %p196 = pneg %p113
        %s197 = sand.u32 %s103, 1
        %s198 = scalar_lea.sflag [#allocation4], %s197
        %s199 = sand.u32 %s103, 1
        %s200 = scalar_lea.vmem [#allocation3], %s199
        %p201 = pneg %p142
        %p202 = pneg %p139
        %s203 = sand.u32 %s129, 1
        %s204 = scalar_lea.sflag [#allocation6], %s203
        %s205 = sand.u32 %s129, 1
        %s206 = scalar_lea.vmem [#allocation5], %s205
        %p207 = scmp.lt.s32.totalorder %s22, 1
        %s208 = scalar_select %p207, %s22, 1
        %s209 = smul.addr %s208, 32
        %s210 = smul.addr %s209, 8
        %s211 = scalar_lea.vmem %s0, %s210
        %p212 = scmp.lt.s32.totalorder %s22, 1
        %s213 = scalar_select %p212, %s22, 1
        %s214 = smul.addr %s213, 32
        %s215 = smul.addr %s214, 8
        %s216 = scalar_lea.vmem %s2, %s215
        %v217 = vld [vmem:[%s211] sm:$0xff]
        %v218 = vld [vmem:[%s211 + $0x8] sm:$0xff]
        %v219 = vld [vmem:[%s211 + $0x10] sm:$0xff]
        %v220 = vld [vmem:[%s211 + $0x18] sm:$0xff]
        %v221 = vld [vmem:[%s211 + $0x20] sm:$0xff]
        %v222 = vld [vmem:[%s211 + $0x28] sm:$0xff]
        %v223 = vld [vmem:[%s211 + $0x30] sm:$0xff]
        %v224 = vld [vmem:[%s211 + $0x38] sm:$0xff]
        %v225 = vld [vmem:[%s211 + $0x40] sm:$0xff]
        %v226 = vld [vmem:[%s211 + $0x48] sm:$0xff]
        %v227 = vld [vmem:[%s211 + $0x50] sm:$0xff]
        %v228 = vld [vmem:[%s211 + $0x58] sm:$0xff]
        %v229 = vld [vmem:[%s211 + $0x60] sm:$0xff]
        %v230 = vld [vmem:[%s211 + $0x68] sm:$0xff]
        %v231 = vld [vmem:[%s211 + $0x70] sm:$0xff]
        %v232 = vld [vmem:[%s211 + $0x78] sm:$0xff]
        %v233 = vld [vmem:[%s211 + $0x80] sm:$0xff]
        %v234 = vld [vmem:[%s211 + $0x88] sm:$0xff]
        %v235 = vld [vmem:[%s211 + $0x90] sm:$0xff]
        %v236 = vld [vmem:[%s211 + $0x98] sm:$0xff]
        %v237 = vld [vmem:[%s211 + $0xa0] sm:$0xff]
        %v238 = vld [vmem:[%s211 + $0xa8] sm:$0xff]
        %v239 = vld [vmem:[%s211 + $0xb0] sm:$0xff]
        %v240 = vld [vmem:[%s211 + $0xb8] sm:$0xff]
        %v241 = vld [vmem:[%s211 + $0xc0] sm:$0xff]
        %v242 = vld [vmem:[%s211 + $0xc8] sm:$0xff]
        %v243 = vld [vmem:[%s211 + $0xd0] sm:$0xff]
        %v244 = vld [vmem:[%s211 + $0xd8] sm:$0xff]
        %v245 = vld [vmem:[%s211 + $0xe0] sm:$0xff]
        %v246 = vld [vmem:[%s211 + $0xe8] sm:$0xff]
        %v247 = vld [vmem:[%s211 + $0xf0] sm:$0xff]
        %v248 = vld [vmem:[%s211 + $0xf8] sm:$0xff]
        %vm249 = vcmask 31744
        %250 = vst.msk [vmem:[#allocation2] sm:$0xff] %vm249, 0.0
        %251 = vst.msk [vmem:[#allocation2 + $0x8] sm:$0xff] %vm249, 0.0
        %vm252 = vcmask 25600
        %253 = vst.msk [vmem:[#allocation2 + $0x10] sm:$0x3] %vm252, 0.0
        %s254 = scalar_lea.vmem [#allocation2], 408
        %255 = vst.msk [vmem:[%s254] sm:$0xff] %vm249, 0.0
        %256 = vst.msk [vmem:[%s254 + $0x8] sm:$0xff] %vm249, 0.0
        %257 = vst.msk [vmem:[%s254 + $0x10] sm:$0x3] %vm252, 0.0
        %s258 = scalar_lea.vmem [#allocation2], 24
        %vm259 = vcmask 24576
        %260 = vst.msk [vmem:[%s258] sm:$0x1] %vm259, 0.0
        %261 = vst.msk [vmem:[%s258 + $0x18] sm:$0x1] %vm259, 0.0
        %262 = vst.msk [vmem:[%s258 + $0x30] sm:$0x1] %vm259, 0.0
        %263 = vst.msk [vmem:[%s258 + $0x48] sm:$0x1] %vm259, 0.0
        %264 = vst.msk [vmem:[%s258 + $0x60] sm:$0x1] %vm259, 0.0
        %265 = vst.msk [vmem:[%s258 + $0x78] sm:$0x1] %vm259, 0.0
        %266 = vst.msk [vmem:[%s258 + $0x90] sm:$0x1] %vm259, 0.0
        %267 = vst.msk [vmem:[%s258 + $0xa8] sm:$0x1] %vm259, 0.0
        %268 = vst.msk [vmem:[%s258 + $0xc0] sm:$0x1] %vm259, 0.0
        %269 = vst.msk [vmem:[%s258 + $0xd8] sm:$0x1] %vm259, 0.0
        %270 = vst.msk [vmem:[%s258 + $0xf0] sm:$0x1] %vm259, 0.0
        %271 = vst.msk [vmem:[%s258 + $0x108] sm:$0x1] %vm259, 0.0
        %272 = vst.msk [vmem:[%s258 + $0x120] sm:$0x1] %vm259, 0.0
        %273 = vst.msk [vmem:[%s258 + $0x138] sm:$0x1] %vm259, 0.0
        %274 = vst.msk [vmem:[%s258 + $0x150] sm:$0x1] %vm259, 0.0
        %275 = vst.msk [vmem:[%s258 + $0x168] sm:$0x1] %vm259, 0.0
        %276 = vst.msk [vmem:[%s258 + $0x11] sm:$0x1] %vm259, 0.0
        %277 = vst.msk [vmem:[%s258 + $0x29] sm:$0x1] %vm259, 0.0
        %278 = vst.msk [vmem:[%s258 + $0x41] sm:$0x1] %vm259, 0.0
        %279 = vst.msk [vmem:[%s258 + $0x59] sm:$0x1] %vm259, 0.0
        %280 = vst.msk [vmem:[%s258 + $0x71] sm:$0x1] %vm259, 0.0
        %281 = vst.msk [vmem:[%s258 + $0x89] sm:$0x1] %vm259, 0.0
        %282 = vst.msk [vmem:[%s258 + $0xa1] sm:$0x1] %vm259, 0.0
        %283 = vst.msk [vmem:[%s258 + $0xb9] sm:$0x1] %vm259, 0.0
        %284 = vst.msk [vmem:[%s258 + $0xd1] sm:$0x1] %vm259, 0.0
        %285 = vst.msk [vmem:[%s258 + $0xe9] sm:$0x1] %vm259, 0.0
        %286 = vst.msk [vmem:[%s258 + $0x101] sm:$0x1] %vm259, 0.0
        %287 = vst.msk [vmem:[%s258 + $0x119] sm:$0x1] %vm259, 0.0
        %288 = vst.msk [vmem:[%s258 + $0x131] sm:$0x1] %vm259, 0.0
        %289 = vst.msk [vmem:[%s258 + $0x149] sm:$0x1] %vm259, 0.0
        %290 = vst.msk [vmem:[%s258 + $0x161] sm:$0x1] %vm259, 0.0
        %291 = vst.msk [vmem:[%s258 + $0x179] sm:$0x1] %vm259, 0.0
        %292 = vst.msk [vmem:[%s258 + $0x1] sm:$0xff] %vm249, %v217
        %293 = vst.msk [vmem:[%s258 + $0x9] sm:$0xff] %vm249, %v218
        %294 = vst.msk [vmem:[%s258 + $0x19] sm:$0xff] %vm249, %v219
        %295 = vst.msk [vmem:[%s258 + $0x21] sm:$0xff] %vm249, %v220
        %296 = vst.msk [vmem:[%s258 + $0x31] sm:$0xff] %vm249, %v221
        %297 = vst.msk [vmem:[%s258 + $0x39] sm:$0xff] %vm249, %v222
        %298 = vst.msk [vmem:[%s258 + $0x49] sm:$0xff] %vm249, %v223
        %299 = vst.msk [vmem:[%s258 + $0x51] sm:$0xff] %vm249, %v224
        %300 = vst.msk [vmem:[%s258 + $0x61] sm:$0xff] %vm249, %v225
        %301 = vst.msk [vmem:[%s258 + $0x69] sm:$0xff] %vm249, %v226
        %302 = vst.msk [vmem:[%s258 + $0x79] sm:$0xff] %vm249, %v227
        %303 = vst.msk [vmem:[%s258 + $0x81] sm:$0xff] %vm249, %v228
        %304 = vst.msk [vmem:[%s258 + $0x91] sm:$0xff] %vm249, %v229
        %305 = vst.msk [vmem:[%s258 + $0x99] sm:$0xff] %vm249, %v230
        %306 = vst.msk [vmem:[%s258 + $0xa9] sm:$0xff] %vm249, %v231
        %307 = vst.msk [vmem:[%s258 + $0xb1] sm:$0xff] %vm249, %v232
        %308 = vst.msk [vmem:[%s258 + $0xc1] sm:$0xff] %vm249, %v233
        %309 = vst.msk [vmem:[%s258 + $0xc9] sm:$0xff] %vm249, %v234
        %310 = vst.msk [vmem:[%s258 + $0xd9] sm:$0xff] %vm249, %v235
        %311 = vst.msk [vmem:[%s258 + $0xe1] sm:$0xff] %vm249, %v236
        %312 = vst.msk [vmem:[%s258 + $0xf1] sm:$0xff] %vm249, %v237
        %313 = vst.msk [vmem:[%s258 + $0xf9] sm:$0xff] %vm249, %v238
        %314 = vst.msk [vmem:[%s258 + $0x109] sm:$0xff] %vm249, %v239
        %315 = vst.msk [vmem:[%s258 + $0x111] sm:$0xff] %vm249, %v240
        %316 = vst.msk [vmem:[%s258 + $0x121] sm:$0xff] %vm249, %v241
        %317 = vst.msk [vmem:[%s258 + $0x129] sm:$0xff] %vm249, %v242
        %318 = vst.msk [vmem:[%s258 + $0x139] sm:$0xff] %vm249, %v243
        %319 = vst.msk [vmem:[%s258 + $0x141] sm:$0xff] %vm249, %v244
        %320 = vst.msk [vmem:[%s258 + $0x151] sm:$0xff] %vm249, %v245
        %321 = vst.msk [vmem:[%s258 + $0x159] sm:$0xff] %vm249, %v246
        %322 = vst.msk [vmem:[%s258 + $0x169] sm:$0xff] %vm249, %v247
        %323 = vst.msk [vmem:[%s258 + $0x171] sm:$0xff] %vm249, %v248
        %v324 = vld [vmem:[#allocation2] sm:$0xff]
        %v325 = vld [vmem:[#allocation2 + $0x8] sm:$0xff]
        %v326 = vld [vmem:[#allocation2 + $0x18] sm:$0xff]
        %v327 = vld [vmem:[#allocation2 + $0x20] sm:$0xff]
        %v328 = vld [vmem:[#allocation2 + $0x30] sm:$0xff]
        %v329 = vld [vmem:[#allocation2 + $0x38] sm:$0xff]
        %v330 = vld [vmem:[#allocation2 + $0x48] sm:$0xff]
        %v331 = vld [vmem:[#allocation2 + $0x50] sm:$0xff]
        %v332 = vld [vmem:[#allocation2 + $0x60] sm:$0xff]
        %v333 = vld [vmem:[#allocation2 + $0x68] sm:$0xff]
        %v334 = vld [vmem:[#allocation2 + $0x78] sm:$0xff]
        %v335 = vld [vmem:[#allocation2 + $0x80] sm:$0xff]
        %v336 = vld [vmem:[#allocation2 + $0x90] sm:$0xff]
        %v337 = vld [vmem:[#allocation2 + $0x98] sm:$0xff]
        %v338 = vld [vmem:[#allocation2 + $0xa8] sm:$0xff]
        %v339 = vld [vmem:[#allocation2 + $0xb0] sm:$0xff]
        %v340 = vld [vmem:[#allocation2 + $0xc0] sm:$0xff]
        %v341 = vld [vmem:[#allocation2 + $0xc8] sm:$0xff]
        %v342 = vld [vmem:[#allocation2 + $0xd8] sm:$0xff]
        %v343 = vld [vmem:[#allocation2 + $0xe0] sm:$0xff]
        %v344 = vld [vmem:[#allocation2 + $0xf0] sm:$0xff]
        %v345 = vld [vmem:[#allocation2 + $0xf8] sm:$0xff]
        %v346 = vld [vmem:[#allocation2 + $0x108] sm:$0xff]
        %v347 = vld [vmem:[#allocation2 + $0x110] sm:$0xff]
        %v348 = vld [vmem:[#allocation2 + $0x120] sm:$0xff]
        %v349 = vld [vmem:[#allocation2 + $0x128] sm:$0xff]
        %v350 = vld [vmem:[#allocation2 + $0x138] sm:$0xff]
        %v351 = vld [vmem:[#allocation2 + $0x140] sm:$0xff]
        %v352 = vld [vmem:[#allocation2 + $0x150] sm:$0xff]
        %v353 = vld [vmem:[#allocation2 + $0x158] sm:$0xff]
        %v354 = vld [vmem:[#allocation2 + $0x168] sm:$0xff]
        %v355 = vld [vmem:[#allocation2 + $0x170] sm:$0xff]
        %v356 = vld [vmem:[%s1] sm:$0xf]
        %v357 = vld [vmem:[#allocation2 + $0x1] sm:$0xff]
        %v358 = vld [vmem:[#allocation2 + $0x9] sm:$0xff]
        %v359 = vld [vmem:[#allocation2 + $0x19] sm:$0xff]
        %v360 = vld [vmem:[#allocation2 + $0x21] sm:$0xff]
        %v361 = vld [vmem:[#allocation2 + $0x31] sm:$0xff]
        %v362 = vld [vmem:[#allocation2 + $0x39] sm:$0xff]
        %v363 = vld [vmem:[#allocation2 + $0x49] sm:$0xff]
        %v364 = vld [vmem:[#allocation2 + $0x51] sm:$0xff]
        %v365 = vld [vmem:[#allocation2 + $0x61] sm:$0xff]
        %v366 = vld [vmem:[#allocation2 + $0x69] sm:$0xff]
        %v367 = vld [vmem:[#allocation2 + $0x79] sm:$0xff]
        %v368 = vld [vmem:[#allocation2 + $0x81] sm:$0xff]
        %v369 = vld [vmem:[#allocation2 + $0x91] sm:$0xff]
        %v370 = vld [vmem:[#allocation2 + $0x99] sm:$0xff]
        %v371 = vld [vmem:[#allocation2 + $0xa9] sm:$0xff]
        %v372 = vld [vmem:[#allocation2 + $0xb1] sm:$0xff]
        %v373 = vld [vmem:[#allocation2 + $0xc1] sm:$0xff]
        %v374 = vld [vmem:[#allocation2 + $0xc9] sm:$0xff]
        %v375 = vld [vmem:[#allocation2 + $0xd9] sm:$0xff]
        %v376 = vld [vmem:[#allocation2 + $0xe1] sm:$0xff]
        %v377 = vld [vmem:[#allocation2 + $0xf1] sm:$0xff]
        %v378 = vld [vmem:[#allocation2 + $0xf9] sm:$0xff]
        %v379 = vld [vmem:[#allocation2 + $0x109] sm:$0xff]
        %v380 = vld [vmem:[#allocation2 + $0x111] sm:$0xff]
        %v381 = vld [vmem:[#allocation2 + $0x121] sm:$0xff]
        %v382 = vld [vmem:[#allocation2 + $0x129] sm:$0xff]
        %v383 = vld [vmem:[#allocation2 + $0x139] sm:$0xff]
        %v384 = vld [vmem:[#allocation2 + $0x141] sm:$0xff]
        %v385 = vld [vmem:[#allocation2 + $0x151] sm:$0xff]
        %v386 = vld [vmem:[#allocation2 + $0x159] sm:$0xff]
        %v387 = vld [vmem:[#allocation2 + $0x169] sm:$0xff]
        %v388 = vld [vmem:[#allocation2 + $0x171] sm:$0xff]
        %v389 = vld [vmem:[%s1 + $0x4] sm:$0xf]
        %v391 = vsel %vm249, %v357, 0
        %v394 = vsel %vm249, %v358, 0
        %v397 = vsel %vm249, %v359, 0
        %v400 = vsel %vm249, %v360, 0
        %v403 = vsel %vm249, %v361, 0
        %v406 = vsel %vm249, %v362, 0
        %v409 = vsel %vm249, %v363, 0
        %v412 = vsel %vm249, %v364, 0
        %v415 = vsel %vm249, %v365, 0
        %v418 = vsel %vm249, %v366, 0
        %v421 = vsel %vm249, %v367, 0
        %v424 = vsel %vm249, %v368, 0
        %v427 = vsel %vm249, %v369, 0
        %v430 = vsel %vm249, %v370, 0
        %v433 = vsel %vm249, %v371, 0
        %v436 = vsel %vm249, %v372, 0
        %v439 = vsel %vm249, %v373, 0
        %v442 = vsel %vm249, %v374, 0
        %v445 = vsel %vm249, %v375, 0
        %v448 = vsel %vm249, %v376, 0
        %v451 = vsel %vm249, %v377, 0
        %v454 = vsel %vm249, %v378, 0
        %v457 = vsel %vm249, %v379, 0
        %v460 = vsel %vm249, %v380, 0
        %v463 = vsel %vm249, %v381, 0
        %v466 = vsel %vm249, %v382, 0
        %v469 = vsel %vm249, %v383, 0
        %v472 = vsel %vm249, %v384, 0
        %v475 = vsel %vm249, %v385, 0
        %v478 = vsel %vm249, %v386, 0
        %v481 = vsel %vm249, %v387, 0
        %v484 = vsel %vm249, %v388, 0
        %vm486 = vcmask 1043456
        %v488 = vsel %vm486, %v389, 0
        %490 = vmatprep.subr.mxu0 0.0
        %491 = vmatpush1.msra.mxu0 0.0
        %492 = vmatprep.subr.mxu0 0.0
        %493 = vmatpush1.msra.mxu0 0.0
        %494 = vmatprep.subr.mxu0 0.0
        %495 = vmatpush1.msra.mxu0 0.0
        %496 = vmatprep.subr.mxu0 0.0
        %497 = vmatpush1.msra.mxu0 0.0
        %498 = vmatprep.subr.mxu0 0.0
        %499 = vmatpush1.msra.mxu0 0.0
        %500 = vmatprep.subr.mxu0 0.0
        %501 = vmatpush1.msra.mxu0 0.0
        %502 = vmatprep.subr.mxu0 0.0
        %503 = vmatpush1.msra.mxu0 0.0
        %504 = vmatprep.subr.mxu0 0.0
        %505 = vmatpush1.msra.mxu0 0.0
        %506 = vmatprep.subr.mxu0 0.0
        %507 = vmatpush1.msra.mxu0 0.0
        %508 = vmatprep.subr.mxu0 0.0
        %509 = vmatpush1.msra.mxu0 0.0
        %510 = vmatprep.subr.mxu0 0.0
        %511 = vmatpush1.msra.mxu0 0.0
        %512 = vmatprep.subr.mxu0 0.0
        %513 = vmatpush1.msra.mxu0 0.0
        %514 = vmatprep.subr.mxu0 0.0
        %515 = vmatpush1.msra.mxu0 0.0
        %516 = vmatprep.subr.mxu0 0.0
        %517 = vmatpush1.msra.mxu0 0.0
        %518 = vmatprep.subr.mxu0 0.0
        %519 = vmatpush1.msra.mxu0 0.0
        %520 = vmatprep.subr.mxu0 0.0
        %521 = vmatpush1.msra.mxu0 %v488
        %522 = vmatprep.subr.mxu0 0.0
        %523 = vmatpush2.msra.mxu0 0.0
        %524 = vmatprep.subr.mxu0 0.0
        %525 = vmatpush2.msra.mxu0 0.0
        %526 = vmatprep.subr.mxu0 0.0
        %527 = vmatpush2.msra.mxu0 0.0
        %528 = vmatprep.subr.mxu0 0.0
        %529 = vmatpush2.msra.mxu0 0.0
        %530 = vmatprep.subr.mxu0 0.0
        %531 = vmatpush2.msra.mxu0 0.0
        %532 = vmatprep.subr.mxu0 0.0
        %533 = vmatpush2.msra.mxu0 0.0
        %534 = vmatprep.subr.mxu0 0.0
        %535 = vmatpush2.msra.mxu0 0.0
        %536 = vmatprep.subr.mxu0 0.0
        %537 = vmatpush2.msra.mxu0 0.0
        %538 = vmatprep.subr.mxu0 0.0
        %539 = vmatpush2.msra.mxu0 0.0
        %540 = vmatprep.subr.mxu0 0.0
        %541 = vmatpush2.msra.mxu0 0.0
        %542 = vmatprep.subr.mxu0 0.0
        %543 = vmatpush2.msra.mxu0 0.0
        %544 = vmatprep.subr.mxu0 0.0
        %545 = vmatpush2.msra.mxu0 0.0
        %546 = vmatprep.subr.mxu0 0.0
        %547 = vmatpush2.msra.mxu0 0.0
        %548 = vmatprep.subr.mxu0 0.0
        %549 = vmatpush2.msra.mxu0 0.0
        %550 = vmatprep.subr.mxu0 0.0
        %551 = vmatpush2.msra.mxu0 0.0
        %552 = vmatprep.subr.mxu0 0.0
        %553 = vmatpush2.msra.mxu0 0.0
        %554 = vmatprep.mubr.f32.mxu0 0.0
        %555 = vmatmul.mubr.f32.gmra.mxu0 %v391
        %v556 = vpop.f32.mrf.mxu0
        %v557 = vadd.f32 0.0, %v556
        %v558 = vpop.f32.mrf.mxu0
        %559 = vmatprep.mubr.f32.mxu0 0.0
        %560 = vmatmul.mubr.f32.gmra.mxu0 %v394
        %v561 = vpop.f32.mrf.mxu0
        %v562 = vadd.f32 0.0, %v561
        %v563 = vpop.f32.mrf.mxu0
        %564 = vmatprep.mubr.f32.mxu0 0.0
        %565 = vmatmul.mubr.f32.gmra.mxu0 %v397
        %v566 = vpop.f32.mrf.mxu0
        %v567 = vadd.f32 0.0, %v566
        %v568 = vpop.f32.mrf.mxu0
        %569 = vmatprep.mubr.f32.mxu0 0.0
        %570 = vmatmul.mubr.f32.gmra.mxu0 %v400
        %v571 = vpop.f32.mrf.mxu0
        %v572 = vadd.f32 0.0, %v571
        %v573 = vpop.f32.mrf.mxu0
        %574 = vmatprep.mubr.f32.mxu0 0.0
        %575 = vmatmul.mubr.f32.gmra.mxu0 %v403
        %v576 = vpop.f32.mrf.mxu0
        %v577 = vadd.f32 0.0, %v576
        %v578 = vpop.f32.mrf.mxu0
        %579 = vmatprep.mubr.f32.mxu0 0.0
        %580 = vmatmul.mubr.f32.gmra.mxu0 %v406
        %v581 = vpop.f32.mrf.mxu0
        %v582 = vadd.f32 0.0, %v581
        %v583 = vpop.f32.mrf.mxu0
        %584 = vmatprep.mubr.f32.mxu0 0.0
        %585 = vmatmul.mubr.f32.gmra.mxu0 %v409
        %v586 = vpop.f32.mrf.mxu0
        %v587 = vadd.f32 0.0, %v586
        %v588 = vpop.f32.mrf.mxu0
        %589 = vmatprep.mubr.f32.mxu0 0.0
        %590 = vmatmul.mubr.f32.gmra.mxu0 %v412
        %v591 = vpop.f32.mrf.mxu0
        %v592 = vadd.f32 0.0, %v591
        %v593 = vpop.f32.mrf.mxu0
        %594 = vmatprep.mubr.f32.mxu0 0.0
        %595 = vmatmul.mubr.f32.gmra.mxu0 %v415
        %v596 = vpop.f32.mrf.mxu0
        %v597 = vadd.f32 0.0, %v596
        %v598 = vpop.f32.mrf.mxu0
        %599 = vmatprep.mubr.f32.mxu0 0.0
        %600 = vmatmul.mubr.f32.gmra.mxu0 %v418
        %v601 = vpop.f32.mrf.mxu0
        %v602 = vadd.f32 0.0, %v601
        %v603 = vpop.f32.mrf.mxu0
        %604 = vmatprep.mubr.f32.mxu0 0.0
        %605 = vmatmul.mubr.f32.gmra.mxu0 %v421
        %v606 = vpop.f32.mrf.mxu0
        %v607 = vadd.f32 0.0, %v606
        %v608 = vpop.f32.mrf.mxu0
        %609 = vmatprep.mubr.f32.mxu0 0.0
        %610 = vmatmul.mubr.f32.gmra.mxu0 %v424
        %v611 = vpop.f32.mrf.mxu0
        %v612 = vadd.f32 0.0, %v611
        %v613 = vpop.f32.mrf.mxu0
        %614 = vmatprep.mubr.f32.mxu0 0.0
        %615 = vmatmul.mubr.f32.gmra.mxu0 %v427
        %v616 = vpop.f32.mrf.mxu0
        %v617 = vadd.f32 0.0, %v616
        %v618 = vpop.f32.mrf.mxu0
        %619 = vmatprep.mubr.f32.mxu0 0.0
        %620 = vmatmul.mubr.f32.gmra.mxu0 %v430
        %v621 = vpop.f32.mrf.mxu0
        %v622 = vadd.f32 0.0, %v621
        %v623 = vpop.f32.mrf.mxu0
        %624 = vmatprep.mubr.f32.mxu0 0.0
        %625 = vmatmul.mubr.f32.gmra.mxu0 %v433
        %v626 = vpop.f32.mrf.mxu0
        %v627 = vadd.f32 0.0, %v626
        %v628 = vpop.f32.mrf.mxu0
        %629 = vmatprep.mubr.f32.mxu0 0.0
        %630 = vmatmul.mubr.f32.gmra.mxu0 %v436
        %v631 = vpop.f32.mrf.mxu0
        %v632 = vadd.f32 0.0, %v631
        %v633 = vpop.f32.mrf.mxu0
        %634 = vmatprep.mubr.f32.mxu0 0.0
        %635 = vmatmul.mubr.f32.gmra.mxu0 %v439
        %v636 = vpop.f32.mrf.mxu0
        %v637 = vadd.f32 0.0, %v636
        %v638 = vpop.f32.mrf.mxu0
        %639 = vmatprep.mubr.f32.mxu0 0.0
        %640 = vmatmul.mubr.f32.gmra.mxu0 %v442
        %v641 = vpop.f32.mrf.mxu0
        %v642 = vadd.f32 0.0, %v641
        %v643 = vpop.f32.mrf.mxu0
        %644 = vmatprep.mubr.f32.mxu0 0.0
        %645 = vmatmul.mubr.f32.gmra.mxu0 %v445
        %v646 = vpop.f32.mrf.mxu0
        %v647 = vadd.f32 0.0, %v646
        %v648 = vpop.f32.mrf.mxu0
        %649 = vmatprep.mubr.f32.mxu0 0.0
        %650 = vmatmul.mubr.f32.gmra.mxu0 %v448
        %v651 = vpop.f32.mrf.mxu0
        %v652 = vadd.f32 0.0, %v651
        %v653 = vpop.f32.mrf.mxu0
        %654 = vmatprep.mubr.f32.mxu0 0.0
        %655 = vmatmul.mubr.f32.gmra.mxu0 %v451
        %v656 = vpop.f32.mrf.mxu0
        %v657 = vadd.f32 0.0, %v656
        %v658 = vpop.f32.mrf.mxu0
        %659 = vmatprep.mubr.f32.mxu0 0.0
        %660 = vmatmul.mubr.f32.gmra.mxu0 %v454
        %v661 = vpop.f32.mrf.mxu0
        %v662 = vadd.f32 0.0, %v661
        %v663 = vpop.f32.mrf.mxu0
        %664 = vmatprep.mubr.f32.mxu0 0.0
        %665 = vmatmul.mubr.f32.gmra.mxu0 %v457
        %v666 = vpop.f32.mrf.mxu0
        %v667 = vadd.f32 0.0, %v666
        %v668 = vpop.f32.mrf.mxu0
        %669 = vmatprep.mubr.f32.mxu0 0.0
        %670 = vmatmul.mubr.f32.gmra.mxu0 %v460
        %v671 = vpop.f32.mrf.mxu0
        %v672 = vadd.f32 0.0, %v671
        %v673 = vpop.f32.mrf.mxu0
        %674 = vmatprep.mubr.f32.mxu0 0.0
        %675 = vmatmul.mubr.f32.gmra.mxu0 %v463
        %v676 = vpop.f32.mrf.mxu0
        %v677 = vadd.f32 0.0, %v676
        %v678 = vpop.f32.mrf.mxu0
        %679 = vmatprep.mubr.f32.mxu0 0.0
        %680 = vmatmul.mubr.f32.gmra.mxu0 %v466
        %v681 = vpop.f32.mrf.mxu0
        %v682 = vadd.f32 0.0, %v681
        %v683 = vpop.f32.mrf.mxu0
        %684 = vmatprep.mubr.f32.mxu0 0.0
        %685 = vmatmul.mubr.f32.gmra.mxu0 %v469
        %v686 = vpop.f32.mrf.mxu0
        %v687 = vadd.f32 0.0, %v686
        %v688 = vpop.f32.mrf.mxu0
        %689 = vmatprep.mubr.f32.mxu0 0.0
        %690 = vmatmul.mubr.f32.gmra.mxu0 %v472
        %v691 = vpop.f32.mrf.mxu0
        %v692 = vadd.f32 0.0, %v691
        %v693 = vpop.f32.mrf.mxu0
        %694 = vmatprep.mubr.f32.mxu0 0.0
        %695 = vmatmul.mubr.f32.gmra.mxu0 %v475
        %v696 = vpop.f32.mrf.mxu0
        %v697 = vadd.f32 0.0, %v696
        %v698 = vpop.f32.mrf.mxu0
        %699 = vmatprep.mubr.f32.mxu0 0.0
        %700 = vmatmul.mubr.f32.gmra.mxu0 %v478
        %v701 = vpop.f32.mrf.mxu0
        %v702 = vadd.f32 0.0, %v701
        %v703 = vpop.f32.mrf.mxu0
        %704 = vmatprep.mubr.f32.mxu0 0.0
        %705 = vmatmul.mubr.f32.gmra.mxu0 %v481
        %v706 = vpop.f32.mrf.mxu0
        %v707 = vadd.f32 0.0, %v706
        %v708 = vpop.f32.mrf.mxu0
        %709 = vmatprep.mubr.f32.mxu0 0.0
        %710 = vmatmul.mubr.f32.gmra.mxu0 %v484
        %v711 = vpop.f32.mrf.mxu0
        %v712 = vadd.f32 0.0, %v711
        %v713 = vpop.f32.mrf.mxu0
        %714 = vdwg.mxu0
        %v716 = vsel %vm249, %v324, 0
        %v719 = vsel %vm249, %v325, 0
        %v722 = vsel %vm249, %v326, 0
        %v725 = vsel %vm249, %v327, 0
        %v728 = vsel %vm249, %v328, 0
        %v731 = vsel %vm249, %v329, 0
        %v734 = vsel %vm249, %v330, 0
        %v737 = vsel %vm249, %v331, 0
        %v740 = vsel %vm249, %v332, 0
        %v743 = vsel %vm249, %v333, 0
        %v746 = vsel %vm249, %v334, 0
        %v749 = vsel %vm249, %v335, 0
        %v752 = vsel %vm249, %v336, 0
        %v755 = vsel %vm249, %v337, 0
        %v758 = vsel %vm249, %v338, 0
        %v761 = vsel %vm249, %v339, 0
        %v764 = vsel %vm249, %v340, 0
        %v767 = vsel %vm249, %v341, 0
        %v770 = vsel %vm249, %v342, 0
        %v773 = vsel %vm249, %v343, 0
        %v776 = vsel %vm249, %v344, 0
        %v779 = vsel %vm249, %v345, 0
        %v782 = vsel %vm249, %v346, 0
        %v785 = vsel %vm249, %v347, 0
        %v788 = vsel %vm249, %v348, 0
        %v791 = vsel %vm249, %v349, 0
        %v794 = vsel %vm249, %v350, 0
        %v797 = vsel %vm249, %v351, 0
        %v800 = vsel %vm249, %v352, 0
        %v803 = vsel %vm249, %v353, 0
        %v806 = vsel %vm249, %v354, 0
        %v809 = vsel %vm249, %v355, 0
        %v812 = vsel %vm486, %v356, 0
        %814 = vmatprep.subr.mxu0 0.0
        %815 = vmatpush1.msra.mxu0 0.0
        %816 = vmatprep.subr.mxu0 0.0
        %817 = vmatpush1.msra.mxu0 0.0
        %818 = vmatprep.subr.mxu0 0.0
        %819 = vmatpush1.msra.mxu0 0.0
        %820 = vmatprep.subr.mxu0 0.0
        %821 = vmatpush1.msra.mxu0 0.0
        %822 = vmatprep.subr.mxu0 0.0
        %823 = vmatpush1.msra.mxu0 0.0
        %824 = vmatprep.subr.mxu0 0.0
        %825 = vmatpush1.msra.mxu0 0.0
        %826 = vmatprep.subr.mxu0 0.0
        %827 = vmatpush1.msra.mxu0 0.0
        %828 = vmatprep.subr.mxu0 0.0
        %829 = vmatpush1.msra.mxu0 0.0
        %830 = vmatprep.subr.mxu0 0.0
        %831 = vmatpush1.msra.mxu0 0.0
        %832 = vmatprep.subr.mxu0 0.0
        %833 = vmatpush1.msra.mxu0 0.0
        %834 = vmatprep.subr.mxu0 0.0
        %835 = vmatpush1.msra.mxu0 0.0
        %836 = vmatprep.subr.mxu0 0.0
        %837 = vmatpush1.msra.mxu0 0.0
        %838 = vmatprep.subr.mxu0 0.0
        %839 = vmatpush1.msra.mxu0 0.0
        %840 = vmatprep.subr.mxu0 0.0
        %841 = vmatpush1.msra.mxu0 0.0
        %842 = vmatprep.subr.mxu0 0.0
        %843 = vmatpush1.msra.mxu0 0.0
        %844 = vmatprep.subr.mxu0 0.0
        %845 = vmatpush1.msra.mxu0 %v812
        %846 = vmatprep.subr.mxu0 0.0
        %847 = vmatpush2.msra.mxu0 0.0
        %848 = vmatprep.subr.mxu0 0.0
        %849 = vmatpush2.msra.mxu0 0.0
        %850 = vmatprep.subr.mxu0 0.0
        %851 = vmatpush2.msra.mxu0 0.0
        %852 = vmatprep.subr.mxu0 0.0
        %853 = vmatpush2.msra.mxu0 0.0
        %854 = vmatprep.subr.mxu0 0.0
        %855 = vmatpush2.msra.mxu0 0.0
        %856 = vmatprep.subr.mxu0 0.0
        %857 = vmatpush2.msra.mxu0 0.0
        %858 = vmatprep.subr.mxu0 0.0
        %859 = vmatpush2.msra.mxu0 0.0
        %860 = vmatprep.subr.mxu0 0.0
        %861 = vmatpush2.msra.mxu0 0.0
        %862 = vmatprep.subr.mxu0 0.0
        %863 = vmatpush2.msra.mxu0 0.0
        %864 = vmatprep.subr.mxu0 0.0
        %865 = vmatpush2.msra.mxu0 0.0
        %866 = vmatprep.subr.mxu0 0.0
        %867 = vmatpush2.msra.mxu0 0.0
        %868 = vmatprep.subr.mxu0 0.0
        %869 = vmatpush2.msra.mxu0 0.0
        %870 = vmatprep.subr.mxu0 0.0
        %871 = vmatpush2.msra.mxu0 0.0
        %872 = vmatprep.subr.mxu0 0.0
        %873 = vmatpush2.msra.mxu0 0.0
        %874 = vmatprep.subr.mxu0 0.0
        %875 = vmatpush2.msra.mxu0 0.0
        %876 = vmatprep.subr.mxu0 0.0
        %877 = vmatpush2.msra.mxu0 0.0
        %878 = vmatprep.mubr.f32.mxu0 0.0
        %879 = vmatmul.mubr.f32.gmra.mxu0 %v716
        %v880 = vpop.f32.mrf.mxu0
        %v881 = vadd.f32 %v557, %v880
        %v882 = vpop.f32.mrf.mxu0
        %883 = vmatprep.mubr.f32.mxu0 0.0
        %884 = vmatmul.mubr.f32.gmra.mxu0 %v719
        %v885 = vpop.f32.mrf.mxu0
        %v886 = vadd.f32 %v562, %v885
        %v887 = vpop.f32.mrf.mxu0
        %888 = vmatprep.mubr.f32.mxu0 0.0
        %889 = vmatmul.mubr.f32.gmra.mxu0 %v722
        %v890 = vpop.f32.mrf.mxu0
        %v891 = vadd.f32 %v567, %v890
        %v892 = vpop.f32.mrf.mxu0
        %893 = vmatprep.mubr.f32.mxu0 0.0
        %894 = vmatmul.mubr.f32.gmra.mxu0 %v725
        %v895 = vpop.f32.mrf.mxu0
        %v896 = vadd.f32 %v572, %v895
        %v897 = vpop.f32.mrf.mxu0
        %898 = vmatprep.mubr.f32.mxu0 0.0
        %899 = vmatmul.mubr.f32.gmra.mxu0 %v728
        %v900 = vpop.f32.mrf.mxu0
        %v901 = vadd.f32 %v577, %v900
        %v902 = vpop.f32.mrf.mxu0
        %903 = vmatprep.mubr.f32.mxu0 0.0
        %904 = vmatmul.mubr.f32.gmra.mxu0 %v731
        %v905 = vpop.f32.mrf.mxu0
        %v906 = vadd.f32 %v582, %v905
        %v907 = vpop.f32.mrf.mxu0
        %908 = vmatprep.mubr.f32.mxu0 0.0
        %909 = vmatmul.mubr.f32.gmra.mxu0 %v734
        %v910 = vpop.f32.mrf.mxu0
        %v911 = vadd.f32 %v587, %v910
        %v912 = vpop.f32.mrf.mxu0
        %913 = vmatprep.mubr.f32.mxu0 0.0
        %914 = vmatmul.mubr.f32.gmra.mxu0 %v737
        %v915 = vpop.f32.mrf.mxu0
        %v916 = vadd.f32 %v592, %v915
        %v917 = vpop.f32.mrf.mxu0
        %918 = vmatprep.mubr.f32.mxu0 0.0
        %919 = vmatmul.mubr.f32.gmra.mxu0 %v740
        %v920 = vpop.f32.mrf.mxu0
        %v921 = vadd.f32 %v597, %v920
        %v922 = vpop.f32.mrf.mxu0
        %923 = vmatprep.mubr.f32.mxu0 0.0
        %924 = vmatmul.mubr.f32.gmra.mxu0 %v743
        %v925 = vpop.f32.mrf.mxu0
        %v926 = vadd.f32 %v602, %v925
        %v927 = vpop.f32.mrf.mxu0
        %928 = vmatprep.mubr.f32.mxu0 0.0
        %929 = vmatmul.mubr.f32.gmra.mxu0 %v746
        %v930 = vpop.f32.mrf.mxu0
        %v931 = vadd.f32 %v607, %v930
        %v932 = vpop.f32.mrf.mxu0
        %933 = vmatprep.mubr.f32.mxu0 0.0
        %934 = vmatmul.mubr.f32.gmra.mxu0 %v749
        %v935 = vpop.f32.mrf.mxu0
        %v936 = vadd.f32 %v612, %v935
        %v937 = vpop.f32.mrf.mxu0
        %938 = vmatprep.mubr.f32.mxu0 0.0
        %939 = vmatmul.mubr.f32.gmra.mxu0 %v752
        %v940 = vpop.f32.mrf.mxu0
        %v941 = vadd.f32 %v617, %v940
        %v942 = vpop.f32.mrf.mxu0
        %943 = vmatprep.mubr.f32.mxu0 0.0
        %944 = vmatmul.mubr.f32.gmra.mxu0 %v755
        %v945 = vpop.f32.mrf.mxu0
        %v946 = vadd.f32 %v622, %v945
        %v947 = vpop.f32.mrf.mxu0
        %948 = vmatprep.mubr.f32.mxu0 0.0
        %949 = vmatmul.mubr.f32.gmra.mxu0 %v758
        %v950 = vpop.f32.mrf.mxu0
        %v951 = vadd.f32 %v627, %v950
        %v952 = vpop.f32.mrf.mxu0
        %953 = vmatprep.mubr.f32.mxu0 0.0
        %954 = vmatmul.mubr.f32.gmra.mxu0 %v761
        %v955 = vpop.f32.mrf.mxu0
        %v956 = vadd.f32 %v632, %v955
        %v957 = vpop.f32.mrf.mxu0
        %958 = vmatprep.mubr.f32.mxu0 0.0
        %959 = vmatmul.mubr.f32.gmra.mxu0 %v764
        %v960 = vpop.f32.mrf.mxu0
        %v961 = vadd.f32 %v637, %v960
        %v962 = vpop.f32.mrf.mxu0
        %963 = vmatprep.mubr.f32.mxu0 0.0
        %964 = vmatmul.mubr.f32.gmra.mxu0 %v767
        %v965 = vpop.f32.mrf.mxu0
        %v966 = vadd.f32 %v642, %v965
        %v967 = vpop.f32.mrf.mxu0
        %968 = vmatprep.mubr.f32.mxu0 0.0
        %969 = vmatmul.mubr.f32.gmra.mxu0 %v770
        %v970 = vpop.f32.mrf.mxu0
        %v971 = vadd.f32 %v647, %v970
        %v972 = vpop.f32.mrf.mxu0
        %973 = vmatprep.mubr.f32.mxu0 0.0
        %974 = vmatmul.mubr.f32.gmra.mxu0 %v773
        %v975 = vpop.f32.mrf.mxu0
        %v976 = vadd.f32 %v652, %v975
        %v977 = vpop.f32.mrf.mxu0
        %978 = vmatprep.mubr.f32.mxu0 0.0
        %979 = vmatmul.mubr.f32.gmra.mxu0 %v776
        %v980 = vpop.f32.mrf.mxu0
        %v981 = vadd.f32 %v657, %v980
        %v982 = vpop.f32.mrf.mxu0
        %983 = vmatprep.mubr.f32.mxu0 0.0
        %984 = vmatmul.mubr.f32.gmra.mxu0 %v779
        %v985 = vpop.f32.mrf.mxu0
        %v986 = vadd.f32 %v662, %v985
        %v987 = vpop.f32.mrf.mxu0
        %988 = vmatprep.mubr.f32.mxu0 0.0
        %989 = vmatmul.mubr.f32.gmra.mxu0 %v782
        %v990 = vpop.f32.mrf.mxu0
        %v991 = vadd.f32 %v667, %v990
        %v992 = vpop.f32.mrf.mxu0
        %993 = vmatprep.mubr.f32.mxu0 0.0
        %994 = vmatmul.mubr.f32.gmra.mxu0 %v785
        %v995 = vpop.f32.mrf.mxu0
        %v996 = vadd.f32 %v672, %v995
        %v997 = vpop.f32.mrf.mxu0
        %998 = vmatprep.mubr.f32.mxu0 0.0
        %999 = vmatmul.mubr.f32.gmra.mxu0 %v788
        %v1000 = vpop.f32.mrf.mxu0
        %v1001 = vadd.f32 %v677, %v1000
        %v1002 = vpop.f32.mrf.mxu0
        %1003 = vmatprep.mubr.f32.mxu0 0.0
        %1004 = vmatmul.mubr.f32.gmra.mxu0 %v791
        %v1005 = vpop.f32.mrf.mxu0
        %v1006 = vadd.f32 %v682, %v1005
        %v1007 = vpop.f32.mrf.mxu0
        %1008 = vmatprep.mubr.f32.mxu0 0.0
        %1009 = vmatmul.mubr.f32.gmra.mxu0 %v794
        %v1010 = vpop.f32.mrf.mxu0
        %v1011 = vadd.f32 %v687, %v1010
        %v1012 = vpop.f32.mrf.mxu0
        %1013 = vmatprep.mubr.f32.mxu0 0.0
        %1014 = vmatmul.mubr.f32.gmra.mxu0 %v797
        %v1015 = vpop.f32.mrf.mxu0
        %v1016 = vadd.f32 %v692, %v1015
        %v1017 = vpop.f32.mrf.mxu0
        %1018 = vmatprep.mubr.f32.mxu0 0.0
        %1019 = vmatmul.mubr.f32.gmra.mxu0 %v800
        %v1020 = vpop.f32.mrf.mxu0
        %v1021 = vadd.f32 %v697, %v1020
        %v1022 = vpop.f32.mrf.mxu0
        %1023 = vmatprep.mubr.f32.mxu0 0.0
        %1024 = vmatmul.mubr.f32.gmra.mxu0 %v803
        %v1025 = vpop.f32.mrf.mxu0
        %v1026 = vadd.f32 %v702, %v1025
        %v1027 = vpop.f32.mrf.mxu0
        %1028 = vmatprep.mubr.f32.mxu0 0.0
        %1029 = vmatmul.mubr.f32.gmra.mxu0 %v806
        %v1030 = vpop.f32.mrf.mxu0
        %v1031 = vadd.f32 %v707, %v1030
        %v1032 = vpop.f32.mrf.mxu0
        %1033 = vmatprep.mubr.f32.mxu0 0.0
        %1034 = vmatmul.mubr.f32.gmra.mxu0 %v809
        %v1035 = vpop.f32.mrf.mxu0
        %v1036 = vadd.f32 %v712, %v1035
        %v1037 = vpop.f32.mrf.mxu0
        %1038 = vdwg.mxu0
        %v1039 = vld [vmem:[#allocation2 + $0x2] sm:$0xff]
        %v1040 = vld [vmem:[#allocation2 + $0xa] sm:$0xff]
        %v1041 = vld [vmem:[#allocation2 + $0x1a] sm:$0xff]
        %v1042 = vld [vmem:[#allocation2 + $0x22] sm:$0xff]
        %v1043 = vld [vmem:[#allocation2 + $0x32] sm:$0xff]
        %v1044 = vld [vmem:[#allocation2 + $0x3a] sm:$0xff]
        %v1045 = vld [vmem:[#allocation2 + $0x4a] sm:$0xff]
        %v1046 = vld [vmem:[#allocation2 + $0x52] sm:$0xff]
        %v1047 = vld [vmem:[#allocation2 + $0x62] sm:$0xff]
        %v1048 = vld [vmem:[#allocation2 + $0x6a] sm:$0xff]
        %v1049 = vld [vmem:[#allocation2 + $0x7a] sm:$0xff]
        %v1050 = vld [vmem:[#allocation2 + $0x82] sm:$0xff]
        %v1051 = vld [vmem:[#allocation2 + $0x92] sm:$0xff]
        %v1052 = vld [vmem:[#allocation2 + $0x9a] sm:$0xff]
        %v1053 = vld [vmem:[#allocation2 + $0xaa] sm:$0xff]
        %v1054 = vld [vmem:[#allocation2 + $0xb2] sm:$0xff]
        %v1055 = vld [vmem:[#allocation2 + $0xc2] sm:$0xff]
        %v1056 = vld [vmem:[#allocation2 + $0xca] sm:$0xff]
        %v1057 = vld [vmem:[#allocation2 + $0xda] sm:$0xff]
        %v1058 = vld [vmem:[#allocation2 + $0xe2] sm:$0xff]
        %v1059 = vld [vmem:[#allocation2 + $0xf2] sm:$0xff]
        %v1060 = vld [vmem:[#allocation2 + $0xfa] sm:$0xff]
        %v1061 = vld [vmem:[#allocation2 + $0x10a] sm:$0xff]
        %v1062 = vld [vmem:[#allocation2 + $0x112] sm:$0xff]
        %v1063 = vld [vmem:[#allocation2 + $0x122] sm:$0xff]
        %v1064 = vld [vmem:[#allocation2 + $0x12a] sm:$0xff]
        %v1065 = vld [vmem:[#allocation2 + $0x13a] sm:$0xff]
        %v1066 = vld [vmem:[#allocation2 + $0x142] sm:$0xff]
        %v1067 = vld [vmem:[#allocation2 + $0x152] sm:$0xff]
        %v1068 = vld [vmem:[#allocation2 + $0x15a] sm:$0xff]
        %v1069 = vld [vmem:[#allocation2 + $0x16a] sm:$0xff]
        %v1070 = vld [vmem:[#allocation2 + $0x172] sm:$0xff]
        %v1071 = vld [vmem:[%s1 + $0x8] sm:$0xf]
        %v1073 = vsel %vm249, %v1039, 0
        %v1076 = vsel %vm249, %v1040, 0
        %v1079 = vsel %vm249, %v1041, 0
        %v1082 = vsel %vm249, %v1042, 0
        %v1085 = vsel %vm249, %v1043, 0
        %v1088 = vsel %vm249, %v1044, 0
        %v1091 = vsel %vm249, %v1045, 0
        %v1094 = vsel %vm249, %v1046, 0
        %v1097 = vsel %vm249, %v1047, 0
        %v1100 = vsel %vm249, %v1048, 0
        %v1103 = vsel %vm249, %v1049, 0
        %v1106 = vsel %vm249, %v1050, 0
        %v1109 = vsel %vm249, %v1051, 0
        %v1112 = vsel %vm249, %v1052, 0
        %v1115 = vsel %vm249, %v1053, 0
        %v1118 = vsel %vm249, %v1054, 0
        %v1121 = vsel %vm249, %v1055, 0
        %v1124 = vsel %vm249, %v1056, 0
        %v1127 = vsel %vm249, %v1057, 0
        %v1130 = vsel %vm249, %v1058, 0
        %v1133 = vsel %vm249, %v1059, 0
        %v1136 = vsel %vm249, %v1060, 0
        %v1139 = vsel %vm249, %v1061, 0
        %v1142 = vsel %vm249, %v1062, 0
        %v1145 = vsel %vm249, %v1063, 0
        %v1148 = vsel %vm249, %v1064, 0
        %v1151 = vsel %vm249, %v1065, 0
        %v1154 = vsel %vm249, %v1066, 0
        %v1157 = vsel %vm249, %v1067, 0
        %v1160 = vsel %vm249, %v1068, 0
        %v1163 = vsel %vm249, %v1069, 0
        %v1166 = vsel %vm249, %v1070, 0
        %v1169 = vsel %vm486, %v1071, 0
        %1171 = vmatprep.subr.mxu0 0.0
        %1172 = vmatpush1.msra.mxu0 0.0
        %1173 = vmatprep.subr.mxu0 0.0
        %1174 = vmatpush1.msra.mxu0 0.0
        %1175 = vmatprep.subr.mxu0 0.0
        %1176 = vmatpush1.msra.mxu0 0.0
        %1177 = vmatprep.subr.mxu0 0.0
        %1178 = vmatpush1.msra.mxu0 0.0
        %1179 = vmatprep.subr.mxu0 0.0
        %1180 = vmatpush1.msra.mxu0 0.0
        %1181 = vmatprep.subr.mxu0 0.0
        %1182 = vmatpush1.msra.mxu0 0.0
        %1183 = vmatprep.subr.mxu0 0.0
        %1184 = vmatpush1.msra.mxu0 0.0
        %1185 = vmatprep.subr.mxu0 0.0
        %1186 = vmatpush1.msra.mxu0 0.0
        %1187 = vmatprep.subr.mxu0 0.0
        %1188 = vmatpush1.msra.mxu0 0.0
        %1189 = vmatprep.subr.mxu0 0.0
        %1190 = vmatpush1.msra.mxu0 0.0
        %1191 = vmatprep.subr.mxu0 0.0
        %1192 = vmatpush1.msra.mxu0 0.0
        %1193 = vmatprep.subr.mxu0 0.0
        %1194 = vmatpush1.msra.mxu0 0.0
        %1195 = vmatprep.subr.mxu0 0.0
        %1196 = vmatpush1.msra.mxu0 0.0
        %1197 = vmatprep.subr.mxu0 0.0
        %1198 = vmatpush1.msra.mxu0 0.0
        %1199 = vmatprep.subr.mxu0 0.0
        %1200 = vmatpush1.msra.mxu0 0.0
        %1201 = vmatprep.subr.mxu0 0.0
        %1202 = vmatpush1.msra.mxu0 %v1169
        %1203 = vmatprep.subr.mxu0 0.0
        %1204 = vmatpush2.msra.mxu0 0.0
        %1205 = vmatprep.subr.mxu0 0.0
        %1206 = vmatpush2.msra.mxu0 0.0
        %1207 = vmatprep.subr.mxu0 0.0
        %1208 = vmatpush2.msra.mxu0 0.0
        %1209 = vmatprep.subr.mxu0 0.0
        %1210 = vmatpush2.msra.mxu0 0.0
        %1211 = vmatprep.subr.mxu0 0.0
        %1212 = vmatpush2.msra.mxu0 0.0
        %1213 = vmatprep.subr.mxu0 0.0
        %1214 = vmatpush2.msra.mxu0 0.0
        %1215 = vmatprep.subr.mxu0 0.0
        %1216 = vmatpush2.msra.mxu0 0.0
        %1217 = vmatprep.subr.mxu0 0.0
        %1218 = vmatpush2.msra.mxu0 0.0
        %1219 = vmatprep.subr.mxu0 0.0
        %1220 = vmatpush2.msra.mxu0 0.0
        %1221 = vmatprep.subr.mxu0 0.0
        %1222 = vmatpush2.msra.mxu0 0.0
        %1223 = vmatprep.subr.mxu0 0.0
        %1224 = vmatpush2.msra.mxu0 0.0
        %1225 = vmatprep.subr.mxu0 0.0
        %1226 = vmatpush2.msra.mxu0 0.0
        %1227 = vmatprep.subr.mxu0 0.0
        %1228 = vmatpush2.msra.mxu0 0.0
        %1229 = vmatprep.subr.mxu0 0.0
        %1230 = vmatpush2.msra.mxu0 0.0
        %1231 = vmatprep.subr.mxu0 0.0
        %1232 = vmatpush2.msra.mxu0 0.0
        %1233 = vmatprep.subr.mxu0 0.0
        %1234 = vmatpush2.msra.mxu0 0.0
        %1235 = vmatprep.mubr.f32.mxu0 0.0
        %1236 = vmatmul.mubr.f32.gmra.mxu0 %v1073
        %v1237 = vpop.f32.mrf.mxu0
        %v1238 = vadd.f32 0.0, %v1237
        %v1239 = vpop.f32.mrf.mxu0
        %1240 = vmatprep.mubr.f32.mxu0 0.0
        %1241 = vmatmul.mubr.f32.gmra.mxu0 %v1076
        %v1242 = vpop.f32.mrf.mxu0
        %v1243 = vadd.f32 0.0, %v1242
        %v1244 = vpop.f32.mrf.mxu0
        %1245 = vmatprep.mubr.f32.mxu0 0.0
        %1246 = vmatmul.mubr.f32.gmra.mxu0 %v1079
        %v1247 = vpop.f32.mrf.mxu0
        %v1248 = vadd.f32 0.0, %v1247
        %v1249 = vpop.f32.mrf.mxu0
        %1250 = vmatprep.mubr.f32.mxu0 0.0
        %1251 = vmatmul.mubr.f32.gmra.mxu0 %v1082
        %v1252 = vpop.f32.mrf.mxu0
        %v1253 = vadd.f32 0.0, %v1252
        %v1254 = vpop.f32.mrf.mxu0
        %1255 = vmatprep.mubr.f32.mxu0 0.0
        %1256 = vmatmul.mubr.f32.gmra.mxu0 %v1085
        %v1257 = vpop.f32.mrf.mxu0
        %v1258 = vadd.f32 0.0, %v1257
        %v1259 = vpop.f32.mrf.mxu0
        %1260 = vmatprep.mubr.f32.mxu0 0.0
        %1261 = vmatmul.mubr.f32.gmra.mxu0 %v1088
        %v1262 = vpop.f32.mrf.mxu0
        %v1263 = vadd.f32 0.0, %v1262
        %v1264 = vpop.f32.mrf.mxu0
        %1265 = vmatprep.mubr.f32.mxu0 0.0
        %1266 = vmatmul.mubr.f32.gmra.mxu0 %v1091
        %v1267 = vpop.f32.mrf.mxu0
        %v1268 = vadd.f32 0.0, %v1267
        %v1269 = vpop.f32.mrf.mxu0
        %1270 = vmatprep.mubr.f32.mxu0 0.0
        %1271 = vmatmul.mubr.f32.gmra.mxu0 %v1094
        %v1272 = vpop.f32.mrf.mxu0
        %v1273 = vadd.f32 0.0, %v1272
        %v1274 = vpop.f32.mrf.mxu0
        %1275 = vmatprep.mubr.f32.mxu0 0.0
        %1276 = vmatmul.mubr.f32.gmra.mxu0 %v1097
        %v1277 = vpop.f32.mrf.mxu0
        %v1278 = vadd.f32 0.0, %v1277
        %v1279 = vpop.f32.mrf.mxu0
        %1280 = vmatprep.mubr.f32.mxu0 0.0
        %1281 = vmatmul.mubr.f32.gmra.mxu0 %v1100
        %v1282 = vpop.f32.mrf.mxu0
        %v1283 = vadd.f32 0.0, %v1282
        %v1284 = vpop.f32.mrf.mxu0
        %1285 = vmatprep.mubr.f32.mxu0 0.0
        %1286 = vmatmul.mubr.f32.gmra.mxu0 %v1103
        %v1287 = vpop.f32.mrf.mxu0
        %v1288 = vadd.f32 0.0, %v1287
        %v1289 = vpop.f32.mrf.mxu0
        %1290 = vmatprep.mubr.f32.mxu0 0.0
        %1291 = vmatmul.mubr.f32.gmra.mxu0 %v1106
        %v1292 = vpop.f32.mrf.mxu0
        %v1293 = vadd.f32 0.0, %v1292
        %v1294 = vpop.f32.mrf.mxu0
        %1295 = vmatprep.mubr.f32.mxu0 0.0
        %1296 = vmatmul.mubr.f32.gmra.mxu0 %v1109
        %v1297 = vpop.f32.mrf.mxu0
        %v1298 = vadd.f32 0.0, %v1297
        %v1299 = vpop.f32.mrf.mxu0
        %1300 = vmatprep.mubr.f32.mxu0 0.0
        %1301 = vmatmul.mubr.f32.gmra.mxu0 %v1112
        %v1302 = vpop.f32.mrf.mxu0
        %v1303 = vadd.f32 0.0, %v1302
        %v1304 = vpop.f32.mrf.mxu0
        %1305 = vmatprep.mubr.f32.mxu0 0.0
        %1306 = vmatmul.mubr.f32.gmra.mxu0 %v1115
        %v1307 = vpop.f32.mrf.mxu0
        %v1308 = vadd.f32 0.0, %v1307
        %v1309 = vpop.f32.mrf.mxu0
        %1310 = vmatprep.mubr.f32.mxu0 0.0
        %1311 = vmatmul.mubr.f32.gmra.mxu0 %v1118
        %v1312 = vpop.f32.mrf.mxu0
        %v1313 = vadd.f32 0.0, %v1312
        %v1314 = vpop.f32.mrf.mxu0
        %1315 = vmatprep.mubr.f32.mxu0 0.0
        %1316 = vmatmul.mubr.f32.gmra.mxu0 %v1121
        %v1317 = vpop.f32.mrf.mxu0
        %v1318 = vadd.f32 0.0, %v1317
        %v1319 = vpop.f32.mrf.mxu0
        %1320 = vmatprep.mubr.f32.mxu0 0.0
        %1321 = vmatmul.mubr.f32.gmra.mxu0 %v1124
        %v1322 = vpop.f32.mrf.mxu0
        %v1323 = vadd.f32 0.0, %v1322
        %v1324 = vpop.f32.mrf.mxu0
        %1325 = vmatprep.mubr.f32.mxu0 0.0
        %1326 = vmatmul.mubr.f32.gmra.mxu0 %v1127
        %v1327 = vpop.f32.mrf.mxu0
        %v1328 = vadd.f32 0.0, %v1327
        %v1329 = vpop.f32.mrf.mxu0
        %1330 = vmatprep.mubr.f32.mxu0 0.0
        %1331 = vmatmul.mubr.f32.gmra.mxu0 %v1130
        %v1332 = vpop.f32.mrf.mxu0
        %v1333 = vadd.f32 0.0, %v1332
        %v1334 = vpop.f32.mrf.mxu0
        %1335 = vmatprep.mubr.f32.mxu0 0.0
        %1336 = vmatmul.mubr.f32.gmra.mxu0 %v1133
        %v1337 = vpop.f32.mrf.mxu0
        %v1338 = vadd.f32 0.0, %v1337
        %v1339 = vpop.f32.mrf.mxu0
        %1340 = vmatprep.mubr.f32.mxu0 0.0
        %1341 = vmatmul.mubr.f32.gmra.mxu0 %v1136
        %v1342 = vpop.f32.mrf.mxu0
        %v1343 = vadd.f32 0.0, %v1342
        %v1344 = vpop.f32.mrf.mxu0
        %1345 = vmatprep.mubr.f32.mxu0 0.0
        %1346 = vmatmul.mubr.f32.gmra.mxu0 %v1139
        %v1347 = vpop.f32.mrf.mxu0
        %v1348 = vadd.f32 0.0, %v1347
        %v1349 = vpop.f32.mrf.mxu0
        %1350 = vmatprep.mubr.f32.mxu0 0.0
        %1351 = vmatmul.mubr.f32.gmra.mxu0 %v1142
        %v1352 = vpop.f32.mrf.mxu0
        %v1353 = vadd.f32 0.0, %v1352
        %v1354 = vpop.f32.mrf.mxu0
        %1355 = vmatprep.mubr.f32.mxu0 0.0
        %1356 = vmatmul.mubr.f32.gmra.mxu0 %v1145
        %v1357 = vpop.f32.mrf.mxu0
        %v1358 = vadd.f32 0.0, %v1357
        %v1359 = vpop.f32.mrf.mxu0
        %1360 = vmatprep.mubr.f32.mxu0 0.0
        %1361 = vmatmul.mubr.f32.gmra.mxu0 %v1148
        %v1362 = vpop.f32.mrf.mxu0
        %v1363 = vadd.f32 0.0, %v1362
        %v1364 = vpop.f32.mrf.mxu0
        %1365 = vmatprep.mubr.f32.mxu0 0.0
        %1366 = vmatmul.mubr.f32.gmra.mxu0 %v1151
        %v1367 = vpop.f32.mrf.mxu0
        %v1368 = vadd.f32 0.0, %v1367
        %v1369 = vpop.f32.mrf.mxu0
        %1370 = vmatprep.mubr.f32.mxu0 0.0
        %1371 = vmatmul.mubr.f32.gmra.mxu0 %v1154
        %v1372 = vpop.f32.mrf.mxu0
        %v1373 = vadd.f32 0.0, %v1372
        %v1374 = vpop.f32.mrf.mxu0
        %1375 = vmatprep.mubr.f32.mxu0 0.0
        %1376 = vmatmul.mubr.f32.gmra.mxu0 %v1157
        %v1377 = vpop.f32.mrf.mxu0
        %v1378 = vadd.f32 0.0, %v1377
        %v1379 = vpop.f32.mrf.mxu0
        %1380 = vmatprep.mubr.f32.mxu0 0.0
        %1381 = vmatmul.mubr.f32.gmra.mxu0 %v1160
        %v1382 = vpop.f32.mrf.mxu0
        %v1383 = vadd.f32 0.0, %v1382
        %v1384 = vpop.f32.mrf.mxu0
        %1385 = vmatprep.mubr.f32.mxu0 0.0
        %1386 = vmatmul.mubr.f32.gmra.mxu0 %v1163
        %v1387 = vpop.f32.mrf.mxu0
        %v1388 = vadd.f32 0.0, %v1387
        %v1389 = vpop.f32.mrf.mxu0
        %1390 = vmatprep.mubr.f32.mxu0 0.0
        %1391 = vmatmul.mubr.f32.gmra.mxu0 %v1166
        %v1392 = vpop.f32.mrf.mxu0
        %v1393 = vadd.f32 0.0, %v1392
        %v1394 = vpop.f32.mrf.mxu0
        %1395 = vdwg.mxu0
        %v1396 = vadd.f32 %v881, %v1238
        %v1397 = vadd.f32 %v886, %v1243
        %v1398 = vadd.f32 %v891, %v1248
        %v1399 = vadd.f32 %v896, %v1253
        %v1400 = vadd.f32 %v901, %v1258
        %v1401 = vadd.f32 %v906, %v1263
        %v1402 = vadd.f32 %v911, %v1268
        %v1403 = vadd.f32 %v916, %v1273
        %v1404 = vadd.f32 %v921, %v1278
        %v1405 = vadd.f32 %v926, %v1283
        %v1406 = vadd.f32 %v931, %v1288
        %v1407 = vadd.f32 %v936, %v1293
        %v1408 = vadd.f32 %v941, %v1298
        %v1409 = vadd.f32 %v946, %v1303
        %v1410 = vadd.f32 %v951, %v1308
        %v1411 = vadd.f32 %v956, %v1313
        %v1412 = vadd.f32 %v961, %v1318
        %v1413 = vadd.f32 %v966, %v1323
        %v1414 = vadd.f32 %v971, %v1328
        %v1415 = vadd.f32 %v976, %v1333
        %v1416 = vadd.f32 %v981, %v1338
        %v1417 = vadd.f32 %v986, %v1343
        %v1418 = vadd.f32 %v991, %v1348
        %v1419 = vadd.f32 %v996, %v1353
        %v1420 = vadd.f32 %v1001, %v1358
        %v1421 = vadd.f32 %v1006, %v1363
        %v1422 = vadd.f32 %v1011, %v1368
        %v1423 = vadd.f32 %v1016, %v1373
        %v1424 = vadd.f32 %v1021, %v1378
        %v1425 = vadd.f32 %v1026, %v1383
        %v1426 = vadd.f32 %v1031, %v1388
        %v1427 = vadd.f32 %v1036, %v1393
        %v1428 = vld [vmem:[%s258] sm:$0xff]
        %v1429 = vld [vmem:[%s258 + $0x8] sm:$0xff]
        %v1430 = vld [vmem:[%s258 + $0x18] sm:$0xff]
        %v1431 = vld [vmem:[%s258 + $0x20] sm:$0xff]
        %v1432 = vld [vmem:[%s258 + $0x30] sm:$0xff]
        %v1433 = vld [vmem:[%s258 + $0x38] sm:$0xff]
        %v1434 = vld [vmem:[%s258 + $0x48] sm:$0xff]
        %v1435 = vld [vmem:[%s258 + $0x50] sm:$0xff]
        %v1436 = vld [vmem:[%s258 + $0x60] sm:$0xff]
        %v1437 = vld [vmem:[%s258 + $0x68] sm:$0xff]
        %v1438 = vld [vmem:[%s258 + $0x78] sm:$0xff]
        %v1439 = vld [vmem:[%s258 + $0x80] sm:$0xff]
        %v1440 = vld [vmem:[%s258 + $0x90] sm:$0xff]
        %v1441 = vld [vmem:[%s258 + $0x98] sm:$0xff]
        %v1442 = vld [vmem:[%s258 + $0xa8] sm:$0xff]
        %v1443 = vld [vmem:[%s258 + $0xb0] sm:$0xff]
        %v1444 = vld [vmem:[%s258 + $0xc0] sm:$0xff]
        %v1445 = vld [vmem:[%s258 + $0xc8] sm:$0xff]
        %v1446 = vld [vmem:[%s258 + $0xd8] sm:$0xff]
        %v1447 = vld [vmem:[%s258 + $0xe0] sm:$0xff]
        %v1448 = vld [vmem:[%s258 + $0xf0] sm:$0xff]
        %v1449 = vld [vmem:[%s258 + $0xf8] sm:$0xff]
        %v1450 = vld [vmem:[%s258 + $0x108] sm:$0xff]
        %v1451 = vld [vmem:[%s258 + $0x110] sm:$0xff]
        %v1452 = vld [vmem:[%s258 + $0x120] sm:$0xff]
        %v1453 = vld [vmem:[%s258 + $0x128] sm:$0xff]
        %v1454 = vld [vmem:[%s258 + $0x138] sm:$0xff]
        %v1455 = vld [vmem:[%s258 + $0x140] sm:$0xff]
        %v1456 = vld [vmem:[%s258 + $0x150] sm:$0xff]
        %v1457 = vld [vmem:[%s258 + $0x158] sm:$0xff]
        %v1458 = vld [vmem:[%s258 + $0x168] sm:$0xff]
        %v1459 = vld [vmem:[%s258 + $0x170] sm:$0xff]
        %v1460 = vld [vmem:[%s1 + $0xc] sm:$0xf]
        %v1462 = vsel %vm249, %v1428, 0
        %v1465 = vsel %vm249, %v1429, 0
        %v1468 = vsel %vm249, %v1430, 0
        %v1471 = vsel %vm249, %v1431, 0
        %v1474 = vsel %vm249, %v1432, 0
        %v1477 = vsel %vm249, %v1433, 0
        %v1480 = vsel %vm249, %v1434, 0
        %v1483 = vsel %vm249, %v1435, 0
        %v1486 = vsel %vm249, %v1436, 0
        %v1489 = vsel %vm249, %v1437, 0
        %v1492 = vsel %vm249, %v1438, 0
        %v1495 = vsel %vm249, %v1439, 0
        %v1498 = vsel %vm249, %v1440, 0
        %v1501 = vsel %vm249, %v1441, 0
        %v1504 = vsel %vm249, %v1442, 0
        %v1507 = vsel %vm249, %v1443, 0
        %v1510 = vsel %vm249, %v1444, 0
        %v1513 = vsel %vm249, %v1445, 0
        %v1516 = vsel %vm249, %v1446, 0
        %v1519 = vsel %vm249, %v1447, 0
        %v1522 = vsel %vm249, %v1448, 0
        %v1525 = vsel %vm249, %v1449, 0
        %v1528 = vsel %vm249, %v1450, 0
        %v1531 = vsel %vm249, %v1451, 0
        %v1534 = vsel %vm249, %v1452, 0
        %v1537 = vsel %vm249, %v1453, 0
        %v1540 = vsel %vm249, %v1454, 0
        %v1543 = vsel %vm249, %v1455, 0
        %v1546 = vsel %vm249, %v1456, 0
        %v1549 = vsel %vm249, %v1457, 0
        %v1552 = vsel %vm249, %v1458, 0
        %v1555 = vsel %vm249, %v1459, 0
        %v1558 = vsel %vm486, %v1460, 0
        %1560 = vmatprep.subr.mxu0 0.0
        %1561 = vmatpush1.msra.mxu0 0.0
        %1562 = vmatprep.subr.mxu0 0.0
        %1563 = vmatpush1.msra.mxu0 0.0
        %1564 = vmatprep.subr.mxu0 0.0
        %1565 = vmatpush1.msra.mxu0 0.0
        %1566 = vmatprep.subr.mxu0 0.0
        %1567 = vmatpush1.msra.mxu0 0.0
        %1568 = vmatprep.subr.mxu0 0.0
        %1569 = vmatpush1.msra.mxu0 0.0
        %1570 = vmatprep.subr.mxu0 0.0
        %1571 = vmatpush1.msra.mxu0 0.0
        %1572 = vmatprep.subr.mxu0 0.0
        %1573 = vmatpush1.msra.mxu0 0.0
        %1574 = vmatprep.subr.mxu0 0.0
        %1575 = vmatpush1.msra.mxu0 0.0
        %1576 = vmatprep.subr.mxu0 0.0
        %1577 = vmatpush1.msra.mxu0 0.0
        %1578 = vmatprep.subr.mxu0 0.0
        %1579 = vmatpush1.msra.mxu0 0.0
        %1580 = vmatprep.subr.mxu0 0.0
        %1581 = vmatpush1.msra.mxu0 0.0
        %1582 = vmatprep.subr.mxu0 0.0
        %1583 = vmatpush1.msra.mxu0 0.0
        %1584 = vmatprep.subr.mxu0 0.0
        %1585 = vmatpush1.msra.mxu0 0.0
        %1586 = vmatprep.subr.mxu0 0.0
        %1587 = vmatpush1.msra.mxu0 0.0
        %1588 = vmatprep.subr.mxu0 0.0
        %1589 = vmatpush1.msra.mxu0 0.0
        %1590 = vmatprep.subr.mxu0 0.0
        %1591 = vmatpush1.msra.mxu0 %v1558
        %1592 = vmatprep.subr.mxu0 0.0
        %1593 = vmatpush2.msra.mxu0 0.0
        %1594 = vmatprep.subr.mxu0 0.0
        %1595 = vmatpush2.msra.mxu0 0.0
        %1596 = vmatprep.subr.mxu0 0.0
        %1597 = vmatpush2.msra.mxu0 0.0
        %1598 = vmatprep.subr.mxu0 0.0
        %1599 = vmatpush2.msra.mxu0 0.0
        %1600 = vmatprep.subr.mxu0 0.0
        %1601 = vmatpush2.msra.mxu0 0.0
        %1602 = vmatprep.subr.mxu0 0.0
        %1603 = vmatpush2.msra.mxu0 0.0
        %1604 = vmatprep.subr.mxu0 0.0
        %1605 = vmatpush2.msra.mxu0 0.0
        %1606 = vmatprep.subr.mxu0 0.0
        %1607 = vmatpush2.msra.mxu0 0.0
        %1608 = vmatprep.subr.mxu0 0.0
        %1609 = vmatpush2.msra.mxu0 0.0
        %1610 = vmatprep.subr.mxu0 0.0
        %1611 = vmatpush2.msra.mxu0 0.0
        %1612 = vmatprep.subr.mxu0 0.0
        %1613 = vmatpush2.msra.mxu0 0.0
        %1614 = vmatprep.subr.mxu0 0.0
        %1615 = vmatpush2.msra.mxu0 0.0
        %1616 = vmatprep.subr.mxu0 0.0
        %1617 = vmatpush2.msra.mxu0 0.0
        %1618 = vmatprep.subr.mxu0 0.0
        %1619 = vmatpush2.msra.mxu0 0.0
        %1620 = vmatprep.subr.mxu0 0.0
        %1621 = vmatpush2.msra.mxu0 0.0
        %1622 = vmatprep.subr.mxu0 0.0
        %1623 = vmatpush2.msra.mxu0 0.0
        %1624 = vmatprep.mubr.f32.mxu0 0.0
        %1625 = vmatmul.mubr.f32.gmra.mxu0 %v1462
        %v1626 = vpop.f32.mrf.mxu0
        %v1627 = vadd.f32 0.0, %v1626
        %v1628 = vpop.f32.mrf.mxu0
        %1629 = vmatprep.mubr.f32.mxu0 0.0
        %1630 = vmatmul.mubr.f32.gmra.mxu0 %v1465
        %v1631 = vpop.f32.mrf.mxu0
        %v1632 = vadd.f32 0.0, %v1631
        %v1633 = vpop.f32.mrf.mxu0
        %1634 = vmatprep.mubr.f32.mxu0 0.0
        %1635 = vmatmul.mubr.f32.gmra.mxu0 %v1468
        %v1636 = vpop.f32.mrf.mxu0
        %v1637 = vadd.f32 0.0, %v1636
        %v1638 = vpop.f32.mrf.mxu0
        %1639 = vmatprep.mubr.f32.mxu0 0.0
        %1640 = vmatmul.mubr.f32.gmra.mxu0 %v1471
        %v1641 = vpop.f32.mrf.mxu0
        %v1642 = vadd.f32 0.0, %v1641
        %v1643 = vpop.f32.mrf.mxu0
        %1644 = vmatprep.mubr.f32.mxu0 0.0
        %1645 = vmatmul.mubr.f32.gmra.mxu0 %v1474
        %v1646 = vpop.f32.mrf.mxu0
        %v1647 = vadd.f32 0.0, %v1646
        %v1648 = vpop.f32.mrf.mxu0
        %1649 = vmatprep.mubr.f32.mxu0 0.0
        %1650 = vmatmul.mubr.f32.gmra.mxu0 %v1477
        %v1651 = vpop.f32.mrf.mxu0
        %v1652 = vadd.f32 0.0, %v1651
        %v1653 = vpop.f32.mrf.mxu0
        %1654 = vmatprep.mubr.f32.mxu0 0.0
        %1655 = vmatmul.mubr.f32.gmra.mxu0 %v1480
        %v1656 = vpop.f32.mrf.mxu0
        %v1657 = vadd.f32 0.0, %v1656
        %v1658 = vpop.f32.mrf.mxu0
        %1659 = vmatprep.mubr.f32.mxu0 0.0
        %1660 = vmatmul.mubr.f32.gmra.mxu0 %v1483
        %v1661 = vpop.f32.mrf.mxu0
        %v1662 = vadd.f32 0.0, %v1661
        %v1663 = vpop.f32.mrf.mxu0
        %1664 = vmatprep.mubr.f32.mxu0 0.0
        %1665 = vmatmul.mubr.f32.gmra.mxu0 %v1486
        %v1666 = vpop.f32.mrf.mxu0
        %v1667 = vadd.f32 0.0, %v1666
        %v1668 = vpop.f32.mrf.mxu0
        %1669 = vmatprep.mubr.f32.mxu0 0.0
        %1670 = vmatmul.mubr.f32.gmra.mxu0 %v1489
        %v1671 = vpop.f32.mrf.mxu0
        %v1672 = vadd.f32 0.0, %v1671
        %v1673 = vpop.f32.mrf.mxu0
        %1674 = vmatprep.mubr.f32.mxu0 0.0
        %1675 = vmatmul.mubr.f32.gmra.mxu0 %v1492
        %v1676 = vpop.f32.mrf.mxu0
        %v1677 = vadd.f32 0.0, %v1676
        %v1678 = vpop.f32.mrf.mxu0
        %1679 = vmatprep.mubr.f32.mxu0 0.0
        %1680 = vmatmul.mubr.f32.gmra.mxu0 %v1495
        %v1681 = vpop.f32.mrf.mxu0
        %v1682 = vadd.f32 0.0, %v1681
        %v1683 = vpop.f32.mrf.mxu0
        %1684 = vmatprep.mubr.f32.mxu0 0.0
        %1685 = vmatmul.mubr.f32.gmra.mxu0 %v1498
        %v1686 = vpop.f32.mrf.mxu0
        %v1687 = vadd.f32 0.0, %v1686
        %v1688 = vpop.f32.mrf.mxu0
        %1689 = vmatprep.mubr.f32.mxu0 0.0
        %1690 = vmatmul.mubr.f32.gmra.mxu0 %v1501
        %v1691 = vpop.f32.mrf.mxu0
        %v1692 = vadd.f32 0.0, %v1691
        %v1693 = vpop.f32.mrf.mxu0
        %1694 = vmatprep.mubr.f32.mxu0 0.0
        %1695 = vmatmul.mubr.f32.gmra.mxu0 %v1504
        %v1696 = vpop.f32.mrf.mxu0
        %v1697 = vadd.f32 0.0, %v1696
        %v1698 = vpop.f32.mrf.mxu0
        %1699 = vmatprep.mubr.f32.mxu0 0.0
        %1700 = vmatmul.mubr.f32.gmra.mxu0 %v1507
        %v1701 = vpop.f32.mrf.mxu0
        %v1702 = vadd.f32 0.0, %v1701
        %v1703 = vpop.f32.mrf.mxu0
        %1704 = vmatprep.mubr.f32.mxu0 0.0
        %1705 = vmatmul.mubr.f32.gmra.mxu0 %v1510
        %v1706 = vpop.f32.mrf.mxu0
        %v1707 = vadd.f32 0.0, %v1706
        %v1708 = vpop.f32.mrf.mxu0
        %1709 = vmatprep.mubr.f32.mxu0 0.0
        %1710 = vmatmul.mubr.f32.gmra.mxu0 %v1513
        %v1711 = vpop.f32.mrf.mxu0
        %v1712 = vadd.f32 0.0, %v1711
        %v1713 = vpop.f32.mrf.mxu0
        %1714 = vmatprep.mubr.f32.mxu0 0.0
        %1715 = vmatmul.mubr.f32.gmra.mxu0 %v1516
        %v1716 = vpop.f32.mrf.mxu0
        %v1717 = vadd.f32 0.0, %v1716
        %v1718 = vpop.f32.mrf.mxu0
        %1719 = vmatprep.mubr.f32.mxu0 0.0
        %1720 = vmatmul.mubr.f32.gmra.mxu0 %v1519
        %v1721 = vpop.f32.mrf.mxu0
        %v1722 = vadd.f32 0.0, %v1721
        %v1723 = vpop.f32.mrf.mxu0
        %1724 = vmatprep.mubr.f32.mxu0 0.0
        %1725 = vmatmul.mubr.f32.gmra.mxu0 %v1522
        %v1726 = vpop.f32.mrf.mxu0
        %v1727 = vadd.f32 0.0, %v1726
        %v1728 = vpop.f32.mrf.mxu0
        %1729 = vmatprep.mubr.f32.mxu0 0.0
        %1730 = vmatmul.mubr.f32.gmra.mxu0 %v1525
        %v1731 = vpop.f32.mrf.mxu0
        %v1732 = vadd.f32 0.0, %v1731
        %v1733 = vpop.f32.mrf.mxu0
        %1734 = vmatprep.mubr.f32.mxu0 0.0
        %1735 = vmatmul.mubr.f32.gmra.mxu0 %v1528
        %v1736 = vpop.f32.mrf.mxu0
        %v1737 = vadd.f32 0.0, %v1736
        %v1738 = vpop.f32.mrf.mxu0
        %1739 = vmatprep.mubr.f32.mxu0 0.0
        %1740 = vmatmul.mubr.f32.gmra.mxu0 %v1531
        %v1741 = vpop.f32.mrf.mxu0
        %v1742 = vadd.f32 0.0, %v1741
        %v1743 = vpop.f32.mrf.mxu0
        %1744 = vmatprep.mubr.f32.mxu0 0.0
        %1745 = vmatmul.mubr.f32.gmra.mxu0 %v1534
        %v1746 = vpop.f32.mrf.mxu0
        %v1747 = vadd.f32 0.0, %v1746
        %v1748 = vpop.f32.mrf.mxu0
        %1749 = vmatprep.mubr.f32.mxu0 0.0
        %1750 = vmatmul.mubr.f32.gmra.mxu0 %v1537
        %v1751 = vpop.f32.mrf.mxu0
        %v1752 = vadd.f32 0.0, %v1751
        %v1753 = vpop.f32.mrf.mxu0
        %1754 = vmatprep.mubr.f32.mxu0 0.0
        %1755 = vmatmul.mubr.f32.gmra.mxu0 %v1540
        %v1756 = vpop.f32.mrf.mxu0
        %v1757 = vadd.f32 0.0, %v1756
        %v1758 = vpop.f32.mrf.mxu0
        %1759 = vmatprep.mubr.f32.mxu0 0.0
        %1760 = vmatmul.mubr.f32.gmra.mxu0 %v1543
        %v1761 = vpop.f32.mrf.mxu0
        %v1762 = vadd.f32 0.0, %v1761
        %v1763 = vpop.f32.mrf.mxu0
        %1764 = vmatprep.mubr.f32.mxu0 0.0
        %1765 = vmatmul.mubr.f32.gmra.mxu0 %v1546
        %v1766 = vpop.f32.mrf.mxu0
        %v1767 = vadd.f32 0.0, %v1766
        %v1768 = vpop.f32.mrf.mxu0
        %1769 = vmatprep.mubr.f32.mxu0 0.0
        %1770 = vmatmul.mubr.f32.gmra.mxu0 %v1549
        %v1771 = vpop.f32.mrf.mxu0
        %v1772 = vadd.f32 0.0, %v1771
        %v1773 = vpop.f32.mrf.mxu0
        %1774 = vmatprep.mubr.f32.mxu0 0.0
        %1775 = vmatmul.mubr.f32.gmra.mxu0 %v1552
        %v1776 = vpop.f32.mrf.mxu0
        %v1777 = vadd.f32 0.0, %v1776
        %v1778 = vpop.f32.mrf.mxu0
        %1779 = vmatprep.mubr.f32.mxu0 0.0
        %1780 = vmatmul.mubr.f32.gmra.mxu0 %v1555
        %v1781 = vpop.f32.mrf.mxu0
        %v1782 = vadd.f32 0.0, %v1781
        %v1783 = vpop.f32.mrf.mxu0
        %1784 = vdwg.mxu0
        %v1785 = vadd.f32 %v1396, %v1627
        %v1786 = vadd.f32 %v1397, %v1632
        %v1787 = vadd.f32 %v1398, %v1637
        %v1788 = vadd.f32 %v1399, %v1642
        %v1789 = vadd.f32 %v1400, %v1647
        %v1790 = vadd.f32 %v1401, %v1652
        %v1791 = vadd.f32 %v1402, %v1657
        %v1792 = vadd.f32 %v1403, %v1662
        %v1793 = vadd.f32 %v1404, %v1667
        %v1794 = vadd.f32 %v1405, %v1672
        %v1795 = vadd.f32 %v1406, %v1677
        %v1796 = vadd.f32 %v1407, %v1682
        %v1797 = vadd.f32 %v1408, %v1687
        %v1798 = vadd.f32 %v1409, %v1692
        %v1799 = vadd.f32 %v1410, %v1697
        %v1800 = vadd.f32 %v1411, %v1702
        %v1801 = vadd.f32 %v1412, %v1707
        %v1802 = vadd.f32 %v1413, %v1712
        %v1803 = vadd.f32 %v1414, %v1717
        %v1804 = vadd.f32 %v1415, %v1722
        %v1805 = vadd.f32 %v1416, %v1727
        %v1806 = vadd.f32 %v1417, %v1732
        %v1807 = vadd.f32 %v1418, %v1737
        %v1808 = vadd.f32 %v1419, %v1742
        %v1809 = vadd.f32 %v1420, %v1747
        %v1810 = vadd.f32 %v1421, %v1752
        %v1811 = vadd.f32 %v1422, %v1757
        %v1812 = vadd.f32 %v1423, %v1762
        %v1813 = vadd.f32 %v1424, %v1767
        %v1814 = vadd.f32 %v1425, %v1772
        %v1815 = vadd.f32 %v1426, %v1777
        %v1816 = vadd.f32 %v1427, %v1782
        %v1817 = vld [vmem:[%s258 + $0x1] sm:$0xff]
        %v1818 = vld [vmem:[%s258 + $0x9] sm:$0xff]
        %v1819 = vld [vmem:[%s258 + $0x19] sm:$0xff]
        %v1820 = vld [vmem:[%s258 + $0x21] sm:$0xff]
        %v1821 = vld [vmem:[%s258 + $0x31] sm:$0xff]
        %v1822 = vld [vmem:[%s258 + $0x39] sm:$0xff]
        %v1823 = vld [vmem:[%s258 + $0x49] sm:$0xff]
        %v1824 = vld [vmem:[%s258 + $0x51] sm:$0xff]
        %v1825 = vld [vmem:[%s258 + $0x61] sm:$0xff]
        %v1826 = vld [vmem:[%s258 + $0x69] sm:$0xff]
        %v1827 = vld [vmem:[%s258 + $0x79] sm:$0xff]
        %v1828 = vld [vmem:[%s258 + $0x81] sm:$0xff]
        %v1829 = vld [vmem:[%s258 + $0x91] sm:$0xff]
        %v1830 = vld [vmem:[%s258 + $0x99] sm:$0xff]
        %v1831 = vld [vmem:[%s258 + $0xa9] sm:$0xff]
        %v1832 = vld [vmem:[%s258 + $0xb1] sm:$0xff]
        %v1833 = vld [vmem:[%s258 + $0xc1] sm:$0xff]
        %v1834 = vld [vmem:[%s258 + $0xc9] sm:$0xff]
        %v1835 = vld [vmem:[%s258 + $0xd9] sm:$0xff]
        %v1836 = vld [vmem:[%s258 + $0xe1] sm:$0xff]
        %v1837 = vld [vmem:[%s258 + $0xf1] sm:$0xff]
        %v1838 = vld [vmem:[%s258 + $0xf9] sm:$0xff]
        %v1839 = vld [vmem:[%s258 + $0x109] sm:$0xff]
        %v1840 = vld [vmem:[%s258 + $0x111] sm:$0xff]
        %v1841 = vld [vmem:[%s258 + $0x121] sm:$0xff]
        %v1842 = vld [vmem:[%s258 + $0x129] sm:$0xff]
        %v1843 = vld [vmem:[%s258 + $0x139] sm:$0xff]
        %v1844 = vld [vmem:[%s258 + $0x141] sm:$0xff]
        %v1845 = vld [vmem:[%s258 + $0x151] sm:$0xff]
        %v1846 = vld [vmem:[%s258 + $0x159] sm:$0xff]
        %v1847 = vld [vmem:[%s258 + $0x169] sm:$0xff]
        %v1848 = vld [vmem:[%s258 + $0x171] sm:$0xff]
        %v1849 = vld [vmem:[%s1 + $0x10] sm:$0xf]
        %v1851 = vsel %vm249, %v1817, 0
        %v1854 = vsel %vm249, %v1818, 0
        %v1857 = vsel %vm249, %v1819, 0
        %v1860 = vsel %vm249, %v1820, 0
        %v1863 = vsel %vm249, %v1821, 0
        %v1866 = vsel %vm249, %v1822, 0
        %v1869 = vsel %vm249, %v1823, 0
        %v1872 = vsel %vm249, %v1824, 0
        %v1875 = vsel %vm249, %v1825, 0
        %v1878 = vsel %vm249, %v1826, 0
        %v1881 = vsel %vm249, %v1827, 0
        %v1884 = vsel %vm249, %v1828, 0
        %v1887 = vsel %vm249, %v1829, 0
        %v1890 = vsel %vm249, %v1830, 0
        %v1893 = vsel %vm249, %v1831, 0
        %v1896 = vsel %vm249, %v1832, 0
        %v1899 = vsel %vm249, %v1833, 0
        %v1902 = vsel %vm249, %v1834, 0
        %v1905 = vsel %vm249, %v1835, 0
        %v1908 = vsel %vm249, %v1836, 0
        %v1911 = vsel %vm249, %v1837, 0
        %v1914 = vsel %vm249, %v1838, 0
        %v1917 = vsel %vm249, %v1839, 0
        %v1920 = vsel %vm249, %v1840, 0
        %v1923 = vsel %vm249, %v1841, 0
        %v1926 = vsel %vm249, %v1842, 0
        %v1929 = vsel %vm249, %v1843, 0
        %v1932 = vsel %vm249, %v1844, 0
        %v1935 = vsel %vm249, %v1845, 0
        %v1938 = vsel %vm249, %v1846, 0
        %v1941 = vsel %vm249, %v1847, 0
        %v1944 = vsel %vm249, %v1848, 0
        %v1947 = vsel %vm486, %v1849, 0
        %1949 = vmatprep.subr.mxu0 0.0
        %1950 = vmatpush1.msra.mxu0 0.0
        %1951 = vmatprep.subr.mxu0 0.0
        %1952 = vmatpush1.msra.mxu0 0.0
        %1953 = vmatprep.subr.mxu0 0.0
        %1954 = vmatpush1.msra.mxu0 0.0
        %1955 = vmatprep.subr.mxu0 0.0
        %1956 = vmatpush1.msra.mxu0 0.0
        %1957 = vmatprep.subr.mxu0 0.0
        %1958 = vmatpush1.msra.mxu0 0.0
        %1959 = vmatprep.subr.mxu0 0.0
        %1960 = vmatpush1.msra.mxu0 0.0
        %1961 = vmatprep.subr.mxu0 0.0
        %1962 = vmatpush1.msra.mxu0 0.0
        %1963 = vmatprep.subr.mxu0 0.0
        %1964 = vmatpush1.msra.mxu0 0.0
        %1965 = vmatprep.subr.mxu0 0.0
        %1966 = vmatpush1.msra.mxu0 0.0
        %1967 = vmatprep.subr.mxu0 0.0
        %1968 = vmatpush1.msra.mxu0 0.0
        %1969 = vmatprep.subr.mxu0 0.0
        %1970 = vmatpush1.msra.mxu0 0.0
        %1971 = vmatprep.subr.mxu0 0.0
        %1972 = vmatpush1.msra.mxu0 0.0
        %1973 = vmatprep.subr.mxu0 0.0
        %1974 = vmatpush1.msra.mxu0 0.0
        %1975 = vmatprep.subr.mxu0 0.0
        %1976 = vmatpush1.msra.mxu0 0.0
        %1977 = vmatprep.subr.mxu0 0.0
        %1978 = vmatpush1.msra.mxu0 0.0
        %1979 = vmatprep.subr.mxu0 0.0
        %1980 = vmatpush1.msra.mxu0 %v1947
        %1981 = vmatprep.subr.mxu0 0.0
        %1982 = vmatpush2.msra.mxu0 0.0
        %1983 = vmatprep.subr.mxu0 0.0
        %1984 = vmatpush2.msra.mxu0 0.0
        %1985 = vmatprep.subr.mxu0 0.0
        %1986 = vmatpush2.msra.mxu0 0.0
        %1987 = vmatprep.subr.mxu0 0.0
        %1988 = vmatpush2.msra.mxu0 0.0
        %1989 = vmatprep.subr.mxu0 0.0
        %1990 = vmatpush2.msra.mxu0 0.0
        %1991 = vmatprep.subr.mxu0 0.0
        %1992 = vmatpush2.msra.mxu0 0.0
        %1993 = vmatprep.subr.mxu0 0.0
        %1994 = vmatpush2.msra.mxu0 0.0
        %1995 = vmatprep.subr.mxu0 0.0
        %1996 = vmatpush2.msra.mxu0 0.0
        %1997 = vmatprep.subr.mxu0 0.0
        %1998 = vmatpush2.msra.mxu0 0.0
        %1999 = vmatprep.subr.mxu0 0.0
        %2000 = vmatpush2.msra.mxu0 0.0
        %2001 = vmatprep.subr.mxu0 0.0
        %2002 = vmatpush2.msra.mxu0 0.0
        %2003 = vmatprep.subr.mxu0 0.0
        %2004 = vmatpush2.msra.mxu0 0.0
        %2005 = vmatprep.subr.mxu0 0.0
        %2006 = vmatpush2.msra.mxu0 0.0
        %2007 = vmatprep.subr.mxu0 0.0
        %2008 = vmatpush2.msra.mxu0 0.0
        %2009 = vmatprep.subr.mxu0 0.0
        %2010 = vmatpush2.msra.mxu0 0.0
        %2011 = vmatprep.subr.mxu0 0.0
        %2012 = vmatpush2.msra.mxu0 0.0
        %2013 = vmatprep.mubr.f32.mxu0 0.0
        %2014 = vmatmul.mubr.f32.gmra.mxu0 %v1851
        %v2015 = vpop.f32.mrf.mxu0
        %v2016 = vadd.f32 0.0, %v2015
        %v2017 = vpop.f32.mrf.mxu0
        %2018 = vmatprep.mubr.f32.mxu0 0.0
        %2019 = vmatmul.mubr.f32.gmra.mxu0 %v1854
        %v2020 = vpop.f32.mrf.mxu0
        %v2021 = vadd.f32 0.0, %v2020
        %v2022 = vpop.f32.mrf.mxu0
        %2023 = vmatprep.mubr.f32.mxu0 0.0
        %2024 = vmatmul.mubr.f32.gmra.mxu0 %v1857
        %v2025 = vpop.f32.mrf.mxu0
        %v2026 = vadd.f32 0.0, %v2025
        %v2027 = vpop.f32.mrf.mxu0
        %2028 = vmatprep.mubr.f32.mxu0 0.0
        %2029 = vmatmul.mubr.f32.gmra.mxu0 %v1860
        %v2030 = vpop.f32.mrf.mxu0
        %v2031 = vadd.f32 0.0, %v2030
        %v2032 = vpop.f32.mrf.mxu0
        %2033 = vmatprep.mubr.f32.mxu0 0.0
        %2034 = vmatmul.mubr.f32.gmra.mxu0 %v1863
        %v2035 = vpop.f32.mrf.mxu0
        %v2036 = vadd.f32 0.0, %v2035
        %v2037 = vpop.f32.mrf.mxu0
        %2038 = vmatprep.mubr.f32.mxu0 0.0
        %2039 = vmatmul.mubr.f32.gmra.mxu0 %v1866
        %v2040 = vpop.f32.mrf.mxu0
        %v2041 = vadd.f32 0.0, %v2040
        %v2042 = vpop.f32.mrf.mxu0
        %2043 = vmatprep.mubr.f32.mxu0 0.0
        %2044 = vmatmul.mubr.f32.gmra.mxu0 %v1869
        %v2045 = vpop.f32.mrf.mxu0
        %v2046 = vadd.f32 0.0, %v2045
        %v2047 = vpop.f32.mrf.mxu0
        %2048 = vmatprep.mubr.f32.mxu0 0.0
        %2049 = vmatmul.mubr.f32.gmra.mxu0 %v1872
        %v2050 = vpop.f32.mrf.mxu0
        %v2051 = vadd.f32 0.0, %v2050
        %v2052 = vpop.f32.mrf.mxu0
        %2053 = vmatprep.mubr.f32.mxu0 0.0
        %2054 = vmatmul.mubr.f32.gmra.mxu0 %v1875
        %v2055 = vpop.f32.mrf.mxu0
        %v2056 = vadd.f32 0.0, %v2055
        %v2057 = vpop.f32.mrf.mxu0
        %2058 = vmatprep.mubr.f32.mxu0 0.0
        %2059 = vmatmul.mubr.f32.gmra.mxu0 %v1878
        %v2060 = vpop.f32.mrf.mxu0
        %v2061 = vadd.f32 0.0, %v2060
        %v2062 = vpop.f32.mrf.mxu0
        %2063 = vmatprep.mubr.f32.mxu0 0.0
        %2064 = vmatmul.mubr.f32.gmra.mxu0 %v1881
        %v2065 = vpop.f32.mrf.mxu0
        %v2066 = vadd.f32 0.0, %v2065
        %v2067 = vpop.f32.mrf.mxu0
        %2068 = vmatprep.mubr.f32.mxu0 0.0
        %2069 = vmatmul.mubr.f32.gmra.mxu0 %v1884
        %v2070 = vpop.f32.mrf.mxu0
        %v2071 = vadd.f32 0.0, %v2070
        %v2072 = vpop.f32.mrf.mxu0
        %2073 = vmatprep.mubr.f32.mxu0 0.0
        %2074 = vmatmul.mubr.f32.gmra.mxu0 %v1887
        %v2075 = vpop.f32.mrf.mxu0
        %v2076 = vadd.f32 0.0, %v2075
        %v2077 = vpop.f32.mrf.mxu0
        %2078 = vmatprep.mubr.f32.mxu0 0.0
        %2079 = vmatmul.mubr.f32.gmra.mxu0 %v1890
        %v2080 = vpop.f32.mrf.mxu0
        %v2081 = vadd.f32 0.0, %v2080
        %v2082 = vpop.f32.mrf.mxu0
        %2083 = vmatprep.mubr.f32.mxu0 0.0
        %2084 = vmatmul.mubr.f32.gmra.mxu0 %v1893
        %v2085 = vpop.f32.mrf.mxu0
        %v2086 = vadd.f32 0.0, %v2085
        %v2087 = vpop.f32.mrf.mxu0
        %2088 = vmatprep.mubr.f32.mxu0 0.0
        %2089 = vmatmul.mubr.f32.gmra.mxu0 %v1896
        %v2090 = vpop.f32.mrf.mxu0
        %v2091 = vadd.f32 0.0, %v2090
        %v2092 = vpop.f32.mrf.mxu0
        %2093 = vmatprep.mubr.f32.mxu0 0.0
        %2094 = vmatmul.mubr.f32.gmra.mxu0 %v1899
        %v2095 = vpop.f32.mrf.mxu0
        %v2096 = vadd.f32 0.0, %v2095
        %v2097 = vpop.f32.mrf.mxu0
        %2098 = vmatprep.mubr.f32.mxu0 0.0
        %2099 = vmatmul.mubr.f32.gmra.mxu0 %v1902
        %v2100 = vpop.f32.mrf.mxu0
        %v2101 = vadd.f32 0.0, %v2100
        %v2102 = vpop.f32.mrf.mxu0
        %2103 = vmatprep.mubr.f32.mxu0 0.0
        %2104 = vmatmul.mubr.f32.gmra.mxu0 %v1905
        %v2105 = vpop.f32.mrf.mxu0
        %v2106 = vadd.f32 0.0, %v2105
        %v2107 = vpop.f32.mrf.mxu0
        %2108 = vmatprep.mubr.f32.mxu0 0.0
        %2109 = vmatmul.mubr.f32.gmra.mxu0 %v1908
        %v2110 = vpop.f32.mrf.mxu0
        %v2111 = vadd.f32 0.0, %v2110
        %v2112 = vpop.f32.mrf.mxu0
        %2113 = vmatprep.mubr.f32.mxu0 0.0
        %2114 = vmatmul.mubr.f32.gmra.mxu0 %v1911
        %v2115 = vpop.f32.mrf.mxu0
        %v2116 = vadd.f32 0.0, %v2115
        %v2117 = vpop.f32.mrf.mxu0
        %2118 = vmatprep.mubr.f32.mxu0 0.0
        %2119 = vmatmul.mubr.f32.gmra.mxu0 %v1914
        %v2120 = vpop.f32.mrf.mxu0
        %v2121 = vadd.f32 0.0, %v2120
        %v2122 = vpop.f32.mrf.mxu0
        %2123 = vmatprep.mubr.f32.mxu0 0.0
        %2124 = vmatmul.mubr.f32.gmra.mxu0 %v1917
        %v2125 = vpop.f32.mrf.mxu0
        %v2126 = vadd.f32 0.0, %v2125
        %v2127 = vpop.f32.mrf.mxu0
        %2128 = vmatprep.mubr.f32.mxu0 0.0
        %2129 = vmatmul.mubr.f32.gmra.mxu0 %v1920
        %v2130 = vpop.f32.mrf.mxu0
        %v2131 = vadd.f32 0.0, %v2130
        %v2132 = vpop.f32.mrf.mxu0
        %2133 = vmatprep.mubr.f32.mxu0 0.0
        %2134 = vmatmul.mubr.f32.gmra.mxu0 %v1923
        %v2135 = vpop.f32.mrf.mxu0
        %v2136 = vadd.f32 0.0, %v2135
        %v2137 = vpop.f32.mrf.mxu0
        %2138 = vmatprep.mubr.f32.mxu0 0.0
        %2139 = vmatmul.mubr.f32.gmra.mxu0 %v1926
        %v2140 = vpop.f32.mrf.mxu0
        %v2141 = vadd.f32 0.0, %v2140
        %v2142 = vpop.f32.mrf.mxu0
        %2143 = vmatprep.mubr.f32.mxu0 0.0
        %2144 = vmatmul.mubr.f32.gmra.mxu0 %v1929
        %v2145 = vpop.f32.mrf.mxu0
        %v2146 = vadd.f32 0.0, %v2145
        %v2147 = vpop.f32.mrf.mxu0
        %2148 = vmatprep.mubr.f32.mxu0 0.0
        %2149 = vmatmul.mubr.f32.gmra.mxu0 %v1932
        %v2150 = vpop.f32.mrf.mxu0
        %v2151 = vadd.f32 0.0, %v2150
        %v2152 = vpop.f32.mrf.mxu0
        %2153 = vmatprep.mubr.f32.mxu0 0.0
        %2154 = vmatmul.mubr.f32.gmra.mxu0 %v1935
        %v2155 = vpop.f32.mrf.mxu0
        %v2156 = vadd.f32 0.0, %v2155
        %v2157 = vpop.f32.mrf.mxu0
        %2158 = vmatprep.mubr.f32.mxu0 0.0
        %2159 = vmatmul.mubr.f32.gmra.mxu0 %v1938
        %v2160 = vpop.f32.mrf.mxu0
        %v2161 = vadd.f32 0.0, %v2160
        %v2162 = vpop.f32.mrf.mxu0
        %2163 = vmatprep.mubr.f32.mxu0 0.0
        %2164 = vmatmul.mubr.f32.gmra.mxu0 %v1941
        %v2165 = vpop.f32.mrf.mxu0
        %v2166 = vadd.f32 0.0, %v2165
        %v2167 = vpop.f32.mrf.mxu0
        %2168 = vmatprep.mubr.f32.mxu0 0.0
        %2169 = vmatmul.mubr.f32.gmra.mxu0 %v1944
        %v2170 = vpop.f32.mrf.mxu0
        %v2171 = vadd.f32 0.0, %v2170
        %v2172 = vpop.f32.mrf.mxu0
        %2173 = vdwg.mxu0
        %v2174 = vadd.f32 %v1785, %v2016
        %v2175 = vadd.f32 %v1786, %v2021
        %v2176 = vadd.f32 %v1787, %v2026
        %v2177 = vadd.f32 %v1788, %v2031
        %v2178 = vadd.f32 %v1789, %v2036
        %v2179 = vadd.f32 %v1790, %v2041
        %v2180 = vadd.f32 %v1791, %v2046
        %v2181 = vadd.f32 %v1792, %v2051
        %v2182 = vadd.f32 %v1793, %v2056
        %v2183 = vadd.f32 %v1794, %v2061
        %v2184 = vadd.f32 %v1795, %v2066
        %v2185 = vadd.f32 %v1796, %v2071
        %v2186 = vadd.f32 %v1797, %v2076
        %v2187 = vadd.f32 %v1798, %v2081
        %v2188 = vadd.f32 %v1799, %v2086
        %v2189 = vadd.f32 %v1800, %v2091
        %v2190 = vadd.f32 %v1801, %v2096
        %v2191 = vadd.f32 %v1802, %v2101
        %v2192 = vadd.f32 %v1803, %v2106
        %v2193 = vadd.f32 %v1804, %v2111
        %v2194 = vadd.f32 %v1805, %v2116
        %v2195 = vadd.f32 %v1806, %v2121
        %v2196 = vadd.f32 %v1807, %v2126
        %v2197 = vadd.f32 %v1808, %v2131
        %v2198 = vadd.f32 %v1809, %v2136
        %v2199 = vadd.f32 %v1810, %v2141
        %v2200 = vadd.f32 %v1811, %v2146
        %v2201 = vadd.f32 %v1812, %v2151
        %v2202 = vadd.f32 %v1813, %v2156
        %v2203 = vadd.f32 %v1814, %v2161
        %v2204 = vadd.f32 %v1815, %v2166
        %v2205 = vadd.f32 %v1816, %v2171
        %v2206 = vld [vmem:[%s258 + $0x2] sm:$0xff]
        %v2207 = vld [vmem:[%s258 + $0xa] sm:$0xff]
        %v2208 = vld [vmem:[%s258 + $0x1a] sm:$0xff]
        %v2209 = vld [vmem:[%s258 + $0x22] sm:$0xff]
        %v2210 = vld [vmem:[%s258 + $0x32] sm:$0xff]
        %v2211 = vld [vmem:[%s258 + $0x3a] sm:$0xff]
        %v2212 = vld [vmem:[%s258 + $0x4a] sm:$0xff]
        %v2213 = vld [vmem:[%s258 + $0x52] sm:$0xff]
        %v2214 = vld [vmem:[%s258 + $0x62] sm:$0xff]
        %v2215 = vld [vmem:[%s258 + $0x6a] sm:$0xff]
        %v2216 = vld [vmem:[%s258 + $0x7a] sm:$0xff]
        %v2217 = vld [vmem:[%s258 + $0x82] sm:$0xff]
        %v2218 = vld [vmem:[%s258 + $0x92] sm:$0xff]
        %v2219 = vld [vmem:[%s258 + $0x9a] sm:$0xff]
        %v2220 = vld [vmem:[%s258 + $0xaa] sm:$0xff]
        %v2221 = vld [vmem:[%s258 + $0xb2] sm:$0xff]
        %v2222 = vld [vmem:[%s258 + $0xc2] sm:$0xff]
        %v2223 = vld [vmem:[%s258 + $0xca] sm:$0xff]
        %v2224 = vld [vmem:[%s258 + $0xda] sm:$0xff]
        %v2225 = vld [vmem:[%s258 + $0xe2] sm:$0xff]
        %v2226 = vld [vmem:[%s258 + $0xf2] sm:$0xff]
        %v2227 = vld [vmem:[%s258 + $0xfa] sm:$0xff]
        %v2228 = vld [vmem:[%s258 + $0x10a] sm:$0xff]
        %v2229 = vld [vmem:[%s258 + $0x112] sm:$0xff]
        %v2230 = vld [vmem:[%s258 + $0x122] sm:$0xff]
        %v2231 = vld [vmem:[%s258 + $0x12a] sm:$0xff]
        %v2232 = vld [vmem:[%s258 + $0x13a] sm:$0xff]
        %v2233 = vld [vmem:[%s258 + $0x142] sm:$0xff]
        %v2234 = vld [vmem:[%s258 + $0x152] sm:$0xff]
        %v2235 = vld [vmem:[%s258 + $0x15a] sm:$0xff]
        %v2236 = vld [vmem:[%s258 + $0x16a] sm:$0xff]
        %v2237 = vld [vmem:[%s258 + $0x172] sm:$0xff]
        %v2238 = vld [vmem:[%s1 + $0x14] sm:$0xf]
        %v2240 = vsel %vm249, %v2206, 0
        %v2243 = vsel %vm249, %v2207, 0
        %v2246 = vsel %vm249, %v2208, 0
        %v2249 = vsel %vm249, %v2209, 0
        %v2252 = vsel %vm249, %v2210, 0
        %v2255 = vsel %vm249, %v2211, 0
        %v2258 = vsel %vm249, %v2212, 0
        %v2261 = vsel %vm249, %v2213, 0
        %v2264 = vsel %vm249, %v2214, 0
        %v2267 = vsel %vm249, %v2215, 0
        %v2270 = vsel %vm249, %v2216, 0
        %v2273 = vsel %vm249, %v2217, 0
        %v2276 = vsel %vm249, %v2218, 0
        %v2279 = vsel %vm249, %v2219, 0
        %v2282 = vsel %vm249, %v2220, 0
        %v2285 = vsel %vm249, %v2221, 0
        %v2288 = vsel %vm249, %v2222, 0
        %v2291 = vsel %vm249, %v2223, 0
        %v2294 = vsel %vm249, %v2224, 0
        %v2297 = vsel %vm249, %v2225, 0
        %v2300 = vsel %vm249, %v2226, 0
        %v2303 = vsel %vm249, %v2227, 0
        %v2306 = vsel %vm249, %v2228, 0
        %v2309 = vsel %vm249, %v2229, 0
        %v2312 = vsel %vm249, %v2230, 0
        %v2315 = vsel %vm249, %v2231, 0
        %v2318 = vsel %vm249, %v2232, 0
        %v2321 = vsel %vm249, %v2233, 0
        %v2324 = vsel %vm249, %v2234, 0
        %v2327 = vsel %vm249, %v2235, 0
        %v2330 = vsel %vm249, %v2236, 0
        %v2333 = vsel %vm249, %v2237, 0
        %v2336 = vsel %vm486, %v2238, 0
        %2338 = vmatprep.subr.mxu0 0.0
        %2339 = vmatpush1.msra.mxu0 0.0
        %2340 = vmatprep.subr.mxu0 0.0
        %2341 = vmatpush1.msra.mxu0 0.0
        %2342 = vmatprep.subr.mxu0 0.0
        %2343 = vmatpush1.msra.mxu0 0.0
        %2344 = vmatprep.subr.mxu0 0.0
        %2345 = vmatpush1.msra.mxu0 0.0
        %2346 = vmatprep.subr.mxu0 0.0
        %2347 = vmatpush1.msra.mxu0 0.0
        %2348 = vmatprep.subr.mxu0 0.0
        %2349 = vmatpush1.msra.mxu0 0.0
        %2350 = vmatprep.subr.mxu0 0.0
        %2351 = vmatpush1.msra.mxu0 0.0
        %2352 = vmatprep.subr.mxu0 0.0
        %2353 = vmatpush1.msra.mxu0 0.0
        %2354 = vmatprep.subr.mxu0 0.0
        %2355 = vmatpush1.msra.mxu0 0.0
        %2356 = vmatprep.subr.mxu0 0.0
        %2357 = vmatpush1.msra.mxu0 0.0
        %2358 = vmatprep.subr.mxu0 0.0
        %2359 = vmatpush1.msra.mxu0 0.0
        %2360 = vmatprep.subr.mxu0 0.0
        %2361 = vmatpush1.msra.mxu0 0.0
        %2362 = vmatprep.subr.mxu0 0.0
        %2363 = vmatpush1.msra.mxu0 0.0
        %2364 = vmatprep.subr.mxu0 0.0
        %2365 = vmatpush1.msra.mxu0 0.0
        %2366 = vmatprep.subr.mxu0 0.0
        %2367 = vmatpush1.msra.mxu0 0.0
        %2368 = vmatprep.subr.mxu0 0.0
        %2369 = vmatpush1.msra.mxu0 %v2336
        %2370 = vmatprep.subr.mxu0 0.0
        %2371 = vmatpush2.msra.mxu0 0.0
        %2372 = vmatprep.subr.mxu0 0.0
        %2373 = vmatpush2.msra.mxu0 0.0
        %2374 = vmatprep.subr.mxu0 0.0
        %2375 = vmatpush2.msra.mxu0 0.0
        %2376 = vmatprep.subr.mxu0 0.0
        %2377 = vmatpush2.msra.mxu0 0.0
        %2378 = vmatprep.subr.mxu0 0.0
        %2379 = vmatpush2.msra.mxu0 0.0
        %2380 = vmatprep.subr.mxu0 0.0
        %2381 = vmatpush2.msra.mxu0 0.0
        %2382 = vmatprep.subr.mxu0 0.0
        %2383 = vmatpush2.msra.mxu0 0.0
        %2384 = vmatprep.subr.mxu0 0.0
        %2385 = vmatpush2.msra.mxu0 0.0
        %2386 = vmatprep.subr.mxu0 0.0
        %2387 = vmatpush2.msra.mxu0 0.0
        %2388 = vmatprep.subr.mxu0 0.0
        %2389 = vmatpush2.msra.mxu0 0.0
        %2390 = vmatprep.subr.mxu0 0.0
        %2391 = vmatpush2.msra.mxu0 0.0
        %2392 = vmatprep.subr.mxu0 0.0
        %2393 = vmatpush2.msra.mxu0 0.0
        %2394 = vmatprep.subr.mxu0 0.0
        %2395 = vmatpush2.msra.mxu0 0.0
        %2396 = vmatprep.subr.mxu0 0.0
        %2397 = vmatpush2.msra.mxu0 0.0
        %2398 = vmatprep.subr.mxu0 0.0
        %2399 = vmatpush2.msra.mxu0 0.0
        %2400 = vmatprep.subr.mxu0 0.0
        %2401 = vmatpush2.msra.mxu0 0.0
        %2402 = vmatprep.mubr.f32.mxu0 0.0
        %2403 = vmatmul.mubr.f32.gmra.mxu0 %v2240
        %v2404 = vpop.f32.mrf.mxu0
        %v2405 = vadd.f32 0.0, %v2404
        %v2406 = vpop.f32.mrf.mxu0
        %2407 = vmatprep.mubr.f32.mxu0 0.0
        %2408 = vmatmul.mubr.f32.gmra.mxu0 %v2243
        %v2409 = vpop.f32.mrf.mxu0
        %v2410 = vadd.f32 0.0, %v2409
        %v2411 = vpop.f32.mrf.mxu0
        %2412 = vmatprep.mubr.f32.mxu0 0.0
        %2413 = vmatmul.mubr.f32.gmra.mxu0 %v2246
        %v2414 = vpop.f32.mrf.mxu0
        %v2415 = vadd.f32 0.0, %v2414
        %v2416 = vpop.f32.mrf.mxu0
        %2417 = vmatprep.mubr.f32.mxu0 0.0
        %2418 = vmatmul.mubr.f32.gmra.mxu0 %v2249
        %v2419 = vpop.f32.mrf.mxu0
        %v2420 = vadd.f32 0.0, %v2419
        %v2421 = vpop.f32.mrf.mxu0
        %2422 = vmatprep.mubr.f32.mxu0 0.0
        %2423 = vmatmul.mubr.f32.gmra.mxu0 %v2252
        %v2424 = vpop.f32.mrf.mxu0
        %v2425 = vadd.f32 0.0, %v2424
        %v2426 = vpop.f32.mrf.mxu0
        %2427 = vmatprep.mubr.f32.mxu0 0.0
        %2428 = vmatmul.mubr.f32.gmra.mxu0 %v2255
        %v2429 = vpop.f32.mrf.mxu0
        %v2430 = vadd.f32 0.0, %v2429
        %v2431 = vpop.f32.mrf.mxu0
        %2432 = vmatprep.mubr.f32.mxu0 0.0
        %2433 = vmatmul.mubr.f32.gmra.mxu0 %v2258
        %v2434 = vpop.f32.mrf.mxu0
        %v2435 = vadd.f32 0.0, %v2434
        %v2436 = vpop.f32.mrf.mxu0
        %2437 = vmatprep.mubr.f32.mxu0 0.0
        %2438 = vmatmul.mubr.f32.gmra.mxu0 %v2261
        %v2439 = vpop.f32.mrf.mxu0
        %v2440 = vadd.f32 0.0, %v2439
        %v2441 = vpop.f32.mrf.mxu0
        %2442 = vmatprep.mubr.f32.mxu0 0.0
        %2443 = vmatmul.mubr.f32.gmra.mxu0 %v2264
        %v2444 = vpop.f32.mrf.mxu0
        %v2445 = vadd.f32 0.0, %v2444
        %v2446 = vpop.f32.mrf.mxu0
        %2447 = vmatprep.mubr.f32.mxu0 0.0
        %2448 = vmatmul.mubr.f32.gmra.mxu0 %v2267
        %v2449 = vpop.f32.mrf.mxu0
        %v2450 = vadd.f32 0.0, %v2449
        %v2451 = vpop.f32.mrf.mxu0
        %2452 = vmatprep.mubr.f32.mxu0 0.0
        %2453 = vmatmul.mubr.f32.gmra.mxu0 %v2270
        %v2454 = vpop.f32.mrf.mxu0
        %v2455 = vadd.f32 0.0, %v2454
        %v2456 = vpop.f32.mrf.mxu0
        %2457 = vmatprep.mubr.f32.mxu0 0.0
        %2458 = vmatmul.mubr.f32.gmra.mxu0 %v2273
        %v2459 = vpop.f32.mrf.mxu0
        %v2460 = vadd.f32 0.0, %v2459
        %v2461 = vpop.f32.mrf.mxu0
        %2462 = vmatprep.mubr.f32.mxu0 0.0
        %2463 = vmatmul.mubr.f32.gmra.mxu0 %v2276
        %v2464 = vpop.f32.mrf.mxu0
        %v2465 = vadd.f32 0.0, %v2464
        %v2466 = vpop.f32.mrf.mxu0
        %2467 = vmatprep.mubr.f32.mxu0 0.0
        %2468 = vmatmul.mubr.f32.gmra.mxu0 %v2279
        %v2469 = vpop.f32.mrf.mxu0
        %v2470 = vadd.f32 0.0, %v2469
        %v2471 = vpop.f32.mrf.mxu0
        %2472 = vmatprep.mubr.f32.mxu0 0.0
        %2473 = vmatmul.mubr.f32.gmra.mxu0 %v2282
        %v2474 = vpop.f32.mrf.mxu0
        %v2475 = vadd.f32 0.0, %v2474
        %v2476 = vpop.f32.mrf.mxu0
        %2477 = vmatprep.mubr.f32.mxu0 0.0
        %2478 = vmatmul.mubr.f32.gmra.mxu0 %v2285
        %v2479 = vpop.f32.mrf.mxu0
        %v2480 = vadd.f32 0.0, %v2479
        %v2481 = vpop.f32.mrf.mxu0
        %2482 = vmatprep.mubr.f32.mxu0 0.0
        %2483 = vmatmul.mubr.f32.gmra.mxu0 %v2288
        %v2484 = vpop.f32.mrf.mxu0
        %v2485 = vadd.f32 0.0, %v2484
        %v2486 = vpop.f32.mrf.mxu0
        %2487 = vmatprep.mubr.f32.mxu0 0.0
        %2488 = vmatmul.mubr.f32.gmra.mxu0 %v2291
        %v2489 = vpop.f32.mrf.mxu0
        %v2490 = vadd.f32 0.0, %v2489
        %v2491 = vpop.f32.mrf.mxu0
        %2492 = vmatprep.mubr.f32.mxu0 0.0
        %2493 = vmatmul.mubr.f32.gmra.mxu0 %v2294
        %v2494 = vpop.f32.mrf.mxu0
        %v2495 = vadd.f32 0.0, %v2494
        %v2496 = vpop.f32.mrf.mxu0
        %2497 = vmatprep.mubr.f32.mxu0 0.0
        %2498 = vmatmul.mubr.f32.gmra.mxu0 %v2297
        %v2499 = vpop.f32.mrf.mxu0
        %v2500 = vadd.f32 0.0, %v2499
        %v2501 = vpop.f32.mrf.mxu0
        %2502 = vmatprep.mubr.f32.mxu0 0.0
        %2503 = vmatmul.mubr.f32.gmra.mxu0 %v2300
        %v2504 = vpop.f32.mrf.mxu0
        %v2505 = vadd.f32 0.0, %v2504
        %v2506 = vpop.f32.mrf.mxu0
        %2507 = vmatprep.mubr.f32.mxu0 0.0
        %2508 = vmatmul.mubr.f32.gmra.mxu0 %v2303
        %v2509 = vpop.f32.mrf.mxu0
        %v2510 = vadd.f32 0.0, %v2509
        %v2511 = vpop.f32.mrf.mxu0
        %2512 = vmatprep.mubr.f32.mxu0 0.0
        %2513 = vmatmul.mubr.f32.gmra.mxu0 %v2306
        %v2514 = vpop.f32.mrf.mxu0
        %v2515 = vadd.f32 0.0, %v2514
        %v2516 = vpop.f32.mrf.mxu0
        %2517 = vmatprep.mubr.f32.mxu0 0.0
        %2518 = vmatmul.mubr.f32.gmra.mxu0 %v2309
        %v2519 = vpop.f32.mrf.mxu0
        %v2520 = vadd.f32 0.0, %v2519
        %v2521 = vpop.f32.mrf.mxu0
        %2522 = vmatprep.mubr.f32.mxu0 0.0
        %2523 = vmatmul.mubr.f32.gmra.mxu0 %v2312
        %v2524 = vpop.f32.mrf.mxu0
        %v2525 = vadd.f32 0.0, %v2524
        %v2526 = vpop.f32.mrf.mxu0
        %2527 = vmatprep.mubr.f32.mxu0 0.0
        %2528 = vmatmul.mubr.f32.gmra.mxu0 %v2315
        %v2529 = vpop.f32.mrf.mxu0
        %v2530 = vadd.f32 0.0, %v2529
        %v2531 = vpop.f32.mrf.mxu0
        %2532 = vmatprep.mubr.f32.mxu0 0.0
        %2533 = vmatmul.mubr.f32.gmra.mxu0 %v2318
        %v2534 = vpop.f32.mrf.mxu0
        %v2535 = vadd.f32 0.0, %v2534
        %v2536 = vpop.f32.mrf.mxu0
        %2537 = vmatprep.mubr.f32.mxu0 0.0
        %2538 = vmatmul.mubr.f32.gmra.mxu0 %v2321
        %v2539 = vpop.f32.mrf.mxu0
        %v2540 = vadd.f32 0.0, %v2539
        %v2541 = vpop.f32.mrf.mxu0
        %2542 = vmatprep.mubr.f32.mxu0 0.0
        %2543 = vmatmul.mubr.f32.gmra.mxu0 %v2324
        %v2544 = vpop.f32.mrf.mxu0
        %v2545 = vadd.f32 0.0, %v2544
        %v2546 = vpop.f32.mrf.mxu0
        %2547 = vmatprep.mubr.f32.mxu0 0.0
        %2548 = vmatmul.mubr.f32.gmra.mxu0 %v2327
        %v2549 = vpop.f32.mrf.mxu0
        %v2550 = vadd.f32 0.0, %v2549
        %v2551 = vpop.f32.mrf.mxu0
        %2552 = vmatprep.mubr.f32.mxu0 0.0
        %2553 = vmatmul.mubr.f32.gmra.mxu0 %v2330
        %v2554 = vpop.f32.mrf.mxu0
        %v2555 = vadd.f32 0.0, %v2554
        %v2556 = vpop.f32.mrf.mxu0
        %2557 = vmatprep.mubr.f32.mxu0 0.0
        %2558 = vmatmul.mubr.f32.gmra.mxu0 %v2333
        %v2559 = vpop.f32.mrf.mxu0
        %v2560 = vadd.f32 0.0, %v2559
        %v2561 = vpop.f32.mrf.mxu0
        %2562 = vdwg.mxu0
        %v2563 = vadd.f32 %v2174, %v2405
        %v2564 = vadd.f32 %v2175, %v2410
        %v2565 = vadd.f32 %v2176, %v2415
        %v2566 = vadd.f32 %v2177, %v2420
        %v2567 = vadd.f32 %v2178, %v2425
        %v2568 = vadd.f32 %v2179, %v2430
        %v2569 = vadd.f32 %v2180, %v2435
        %v2570 = vadd.f32 %v2181, %v2440
        %v2571 = vadd.f32 %v2182, %v2445
        %v2572 = vadd.f32 %v2183, %v2450
        %v2573 = vadd.f32 %v2184, %v2455
        %v2574 = vadd.f32 %v2185, %v2460
        %v2575 = vadd.f32 %v2186, %v2465
        %v2576 = vadd.f32 %v2187, %v2470
        %v2577 = vadd.f32 %v2188, %v2475
        %v2578 = vadd.f32 %v2189, %v2480
        %v2579 = vadd.f32 %v2190, %v2485
        %v2580 = vadd.f32 %v2191, %v2490
        %v2581 = vadd.f32 %v2192, %v2495
        %v2582 = vadd.f32 %v2193, %v2500
        %v2583 = vadd.f32 %v2194, %v2505
        %v2584 = vadd.f32 %v2195, %v2510
        %v2585 = vadd.f32 %v2196, %v2515
        %v2586 = vadd.f32 %v2197, %v2520
        %v2587 = vadd.f32 %v2198, %v2525
        %v2588 = vadd.f32 %v2199, %v2530
        %v2589 = vadd.f32 %v2200, %v2535
        %v2590 = vadd.f32 %v2201, %v2540
        %v2591 = vadd.f32 %v2202, %v2545
        %v2592 = vadd.f32 %v2203, %v2550
        %v2593 = vadd.f32 %v2204, %v2555
        %v2594 = vadd.f32 %v2205, %v2560
        %s2595 = scalar_lea.vmem [#allocation2], 48
        %v2596 = vld [vmem:[%s2595] sm:$0xff]
        %v2597 = vld [vmem:[%s2595 + $0x8] sm:$0xff]
        %v2598 = vld [vmem:[%s2595 + $0x18] sm:$0xff]
        %v2599 = vld [vmem:[%s2595 + $0x20] sm:$0xff]
        %v2600 = vld [vmem:[%s2595 + $0x30] sm:$0xff]
        %v2601 = vld [vmem:[%s2595 + $0x38] sm:$0xff]
        %v2602 = vld [vmem:[%s2595 + $0x48] sm:$0xff]
        %v2603 = vld [vmem:[%s2595 + $0x50] sm:$0xff]
        %v2604 = vld [vmem:[%s2595 + $0x60] sm:$0xff]
        %v2605 = vld [vmem:[%s2595 + $0x68] sm:$0xff]
        %v2606 = vld [vmem:[%s2595 + $0x78] sm:$0xff]
        %v2607 = vld [vmem:[%s2595 + $0x80] sm:$0xff]
        %v2608 = vld [vmem:[%s2595 + $0x90] sm:$0xff]
        %v2609 = vld [vmem:[%s2595 + $0x98] sm:$0xff]
        %v2610 = vld [vmem:[%s2595 + $0xa8] sm:$0xff]
        %v2611 = vld [vmem:[%s2595 + $0xb0] sm:$0xff]
        %v2612 = vld [vmem:[%s2595 + $0xc0] sm:$0xff]
        %v2613 = vld [vmem:[%s2595 + $0xc8] sm:$0xff]
        %v2614 = vld [vmem:[%s2595 + $0xd8] sm:$0xff]
        %v2615 = vld [vmem:[%s2595 + $0xe0] sm:$0xff]
        %v2616 = vld [vmem:[%s2595 + $0xf0] sm:$0xff]
        %v2617 = vld [vmem:[%s2595 + $0xf8] sm:$0xff]
        %v2618 = vld [vmem:[%s2595 + $0x108] sm:$0xff]
        %v2619 = vld [vmem:[%s2595 + $0x110] sm:$0xff]
        %v2620 = vld [vmem:[%s2595 + $0x120] sm:$0xff]
        %v2621 = vld [vmem:[%s2595 + $0x128] sm:$0xff]
        %v2622 = vld [vmem:[%s2595 + $0x138] sm:$0xff]
        %v2623 = vld [vmem:[%s2595 + $0x140] sm:$0xff]
        %v2624 = vld [vmem:[%s2595 + $0x150] sm:$0xff]
        %v2625 = vld [vmem:[%s2595 + $0x158] sm:$0xff]
        %v2626 = vld [vmem:[%s2595 + $0x168] sm:$0xff]
        %v2627 = vld [vmem:[%s2595 + $0x170] sm:$0xff]
        %v2628 = vld [vmem:[%s1 + $0x18] sm:$0xf]
        %v2630 = vsel %vm249, %v2596, 0
        %v2633 = vsel %vm249, %v2597, 0
        %v2636 = vsel %vm249, %v2598, 0
        %v2639 = vsel %vm249, %v2599, 0
        %v2642 = vsel %vm249, %v2600, 0
        %v2645 = vsel %vm249, %v2601, 0
        %v2648 = vsel %vm249, %v2602, 0
        %v2651 = vsel %vm249, %v2603, 0
        %v2654 = vsel %vm249, %v2604, 0
        %v2657 = vsel %vm249, %v2605, 0
        %v2660 = vsel %vm249, %v2606, 0
        %v2663 = vsel %vm249, %v2607, 0
        %v2666 = vsel %vm249, %v2608, 0
        %v2669 = vsel %vm249, %v2609, 0
        %v2672 = vsel %vm249, %v2610, 0
        %v2675 = vsel %vm249, %v2611, 0
        %v2678 = vsel %vm249, %v2612, 0
        %v2681 = vsel %vm249, %v2613, 0
        %v2684 = vsel %vm249, %v2614, 0
        %v2687 = vsel %vm249, %v2615, 0
        %v2690 = vsel %vm249, %v2616, 0
        %v2693 = vsel %vm249, %v2617, 0
        %v2696 = vsel %vm249, %v2618, 0
        %v2699 = vsel %vm249, %v2619, 0
        %v2702 = vsel %vm249, %v2620, 0
        %v2705 = vsel %vm249, %v2621, 0
        %v2708 = vsel %vm249, %v2622, 0
        %v2711 = vsel %vm249, %v2623, 0
        %v2714 = vsel %vm249, %v2624, 0
        %v2717 = vsel %vm249, %v2625, 0
        %v2720 = vsel %vm249, %v2626, 0
        %v2723 = vsel %vm249, %v2627, 0
        %v2726 = vsel %vm486, %v2628, 0
        %2728 = vmatprep.subr.mxu0 0.0
        %2729 = vmatpush1.msra.mxu0 0.0
        %2730 = vmatprep.subr.mxu0 0.0
        %2731 = vmatpush1.msra.mxu0 0.0
        %2732 = vmatprep.subr.mxu0 0.0
        %2733 = vmatpush1.msra.mxu0 0.0
        %2734 = vmatprep.subr.mxu0 0.0
        %2735 = vmatpush1.msra.mxu0 0.0
        %2736 = vmatprep.subr.mxu0 0.0
        %2737 = vmatpush1.msra.mxu0 0.0
        %2738 = vmatprep.subr.mxu0 0.0
        %2739 = vmatpush1.msra.mxu0 0.0
        %2740 = vmatprep.subr.mxu0 0.0
        %2741 = vmatpush1.msra.mxu0 0.0
        %2742 = vmatprep.subr.mxu0 0.0
        %2743 = vmatpush1.msra.mxu0 0.0
        %2744 = vmatprep.subr.mxu0 0.0
        %2745 = vmatpush1.msra.mxu0 0.0
        %2746 = vmatprep.subr.mxu0 0.0
        %2747 = vmatpush1.msra.mxu0 0.0
        %2748 = vmatprep.subr.mxu0 0.0
        %2749 = vmatpush1.msra.mxu0 0.0
        %2750 = vmatprep.subr.mxu0 0.0
        %2751 = vmatpush1.msra.mxu0 0.0
        %2752 = vmatprep.subr.mxu0 0.0
        %2753 = vmatpush1.msra.mxu0 0.0
        %2754 = vmatprep.subr.mxu0 0.0
        %2755 = vmatpush1.msra.mxu0 0.0
        %2756 = vmatprep.subr.mxu0 0.0
        %2757 = vmatpush1.msra.mxu0 0.0
        %2758 = vmatprep.subr.mxu0 0.0
        %2759 = vmatpush1.msra.mxu0 %v2726
        %2760 = vmatprep.subr.mxu0 0.0
        %2761 = vmatpush2.msra.mxu0 0.0
        %2762 = vmatprep.subr.mxu0 0.0
        %2763 = vmatpush2.msra.mxu0 0.0
        %2764 = vmatprep.subr.mxu0 0.0
        %2765 = vmatpush2.msra.mxu0 0.0
        %2766 = vmatprep.subr.mxu0 0.0
        %2767 = vmatpush2.msra.mxu0 0.0
        %2768 = vmatprep.subr.mxu0 0.0
        %2769 = vmatpush2.msra.mxu0 0.0
        %2770 = vmatprep.subr.mxu0 0.0
        %2771 = vmatpush2.msra.mxu0 0.0
        %2772 = vmatprep.subr.mxu0 0.0
        %2773 = vmatpush2.msra.mxu0 0.0
        %2774 = vmatprep.subr.mxu0 0.0
        %2775 = vmatpush2.msra.mxu0 0.0
        %2776 = vmatprep.subr.mxu0 0.0
        %2777 = vmatpush2.msra.mxu0 0.0
        %2778 = vmatprep.subr.mxu0 0.0
        %2779 = vmatpush2.msra.mxu0 0.0
        %2780 = vmatprep.subr.mxu0 0.0
        %2781 = vmatpush2.msra.mxu0 0.0
        %2782 = vmatprep.subr.mxu0 0.0
        %2783 = vmatpush2.msra.mxu0 0.0
        %2784 = vmatprep.subr.mxu0 0.0
        %2785 = vmatpush2.msra.mxu0 0.0
        %2786 = vmatprep.subr.mxu0 0.0
        %2787 = vmatpush2.msra.mxu0 0.0
        %2788 = vmatprep.subr.mxu0 0.0
        %2789 = vmatpush2.msra.mxu0 0.0
        %2790 = vmatprep.subr.mxu0 0.0
        %2791 = vmatpush2.msra.mxu0 0.0
        %2792 = vmatprep.mubr.f32.mxu0 0.0
        %2793 = vmatmul.mubr.f32.gmra.mxu0 %v2630
        %v2794 = vpop.f32.mrf.mxu0
        %v2795 = vadd.f32 0.0, %v2794
        %v2796 = vpop.f32.mrf.mxu0
        %2797 = vmatprep.mubr.f32.mxu0 0.0
        %2798 = vmatmul.mubr.f32.gmra.mxu0 %v2633
        %v2799 = vpop.f32.mrf.mxu0
        %v2800 = vadd.f32 0.0, %v2799
        %v2801 = vpop.f32.mrf.mxu0
        %2802 = vmatprep.mubr.f32.mxu0 0.0
        %2803 = vmatmul.mubr.f32.gmra.mxu0 %v2636
        %v2804 = vpop.f32.mrf.mxu0
        %v2805 = vadd.f32 0.0, %v2804
        %v2806 = vpop.f32.mrf.mxu0
        %2807 = vmatprep.mubr.f32.mxu0 0.0
        %2808 = vmatmul.mubr.f32.gmra.mxu0 %v2639
        %v2809 = vpop.f32.mrf.mxu0
        %v2810 = vadd.f32 0.0, %v2809
        %v2811 = vpop.f32.mrf.mxu0
        %2812 = vmatprep.mubr.f32.mxu0 0.0
        %2813 = vmatmul.mubr.f32.gmra.mxu0 %v2642
        %v2814 = vpop.f32.mrf.mxu0
        %v2815 = vadd.f32 0.0, %v2814
        %v2816 = vpop.f32.mrf.mxu0
        %2817 = vmatprep.mubr.f32.mxu0 0.0
        %2818 = vmatmul.mubr.f32.gmra.mxu0 %v2645
        %v2819 = vpop.f32.mrf.mxu0
        %v2820 = vadd.f32 0.0, %v2819
        %v2821 = vpop.f32.mrf.mxu0
        %2822 = vmatprep.mubr.f32.mxu0 0.0
        %2823 = vmatmul.mubr.f32.gmra.mxu0 %v2648
        %v2824 = vpop.f32.mrf.mxu0
        %v2825 = vadd.f32 0.0, %v2824
        %v2826 = vpop.f32.mrf.mxu0
        %2827 = vmatprep.mubr.f32.mxu0 0.0
        %2828 = vmatmul.mubr.f32.gmra.mxu0 %v2651
        %v2829 = vpop.f32.mrf.mxu0
        %v2830 = vadd.f32 0.0, %v2829
        %v2831 = vpop.f32.mrf.mxu0
        %2832 = vmatprep.mubr.f32.mxu0 0.0
        %2833 = vmatmul.mubr.f32.gmra.mxu0 %v2654
        %v2834 = vpop.f32.mrf.mxu0
        %v2835 = vadd.f32 0.0, %v2834
        %v2836 = vpop.f32.mrf.mxu0
        %2837 = vmatprep.mubr.f32.mxu0 0.0
        %2838 = vmatmul.mubr.f32.gmra.mxu0 %v2657
        %v2839 = vpop.f32.mrf.mxu0
        %v2840 = vadd.f32 0.0, %v2839
        %v2841 = vpop.f32.mrf.mxu0
        %2842 = vmatprep.mubr.f32.mxu0 0.0
        %2843 = vmatmul.mubr.f32.gmra.mxu0 %v2660
        %v2844 = vpop.f32.mrf.mxu0
        %v2845 = vadd.f32 0.0, %v2844
        %v2846 = vpop.f32.mrf.mxu0
        %2847 = vmatprep.mubr.f32.mxu0 0.0
        %2848 = vmatmul.mubr.f32.gmra.mxu0 %v2663
        %v2849 = vpop.f32.mrf.mxu0
        %v2850 = vadd.f32 0.0, %v2849
        %v2851 = vpop.f32.mrf.mxu0
        %2852 = vmatprep.mubr.f32.mxu0 0.0
        %2853 = vmatmul.mubr.f32.gmra.mxu0 %v2666
        %v2854 = vpop.f32.mrf.mxu0
        %v2855 = vadd.f32 0.0, %v2854
        %v2856 = vpop.f32.mrf.mxu0
        %2857 = vmatprep.mubr.f32.mxu0 0.0
        %2858 = vmatmul.mubr.f32.gmra.mxu0 %v2669
        %v2859 = vpop.f32.mrf.mxu0
        %v2860 = vadd.f32 0.0, %v2859
        %v2861 = vpop.f32.mrf.mxu0
        %2862 = vmatprep.mubr.f32.mxu0 0.0
        %2863 = vmatmul.mubr.f32.gmra.mxu0 %v2672
        %v2864 = vpop.f32.mrf.mxu0
        %v2865 = vadd.f32 0.0, %v2864
        %v2866 = vpop.f32.mrf.mxu0
        %2867 = vmatprep.mubr.f32.mxu0 0.0
        %2868 = vmatmul.mubr.f32.gmra.mxu0 %v2675
        %v2869 = vpop.f32.mrf.mxu0
        %v2870 = vadd.f32 0.0, %v2869
        %v2871 = vpop.f32.mrf.mxu0
        %2872 = vmatprep.mubr.f32.mxu0 0.0
        %2873 = vmatmul.mubr.f32.gmra.mxu0 %v2678
        %v2874 = vpop.f32.mrf.mxu0
        %v2875 = vadd.f32 0.0, %v2874
        %v2876 = vpop.f32.mrf.mxu0
        %2877 = vmatprep.mubr.f32.mxu0 0.0
        %2878 = vmatmul.mubr.f32.gmra.mxu0 %v2681
        %v2879 = vpop.f32.mrf.mxu0
        %v2880 = vadd.f32 0.0, %v2879
        %v2881 = vpop.f32.mrf.mxu0
        %2882 = vmatprep.mubr.f32.mxu0 0.0
        %2883 = vmatmul.mubr.f32.gmra.mxu0 %v2684
        %v2884 = vpop.f32.mrf.mxu0
        %v2885 = vadd.f32 0.0, %v2884
        %v2886 = vpop.f32.mrf.mxu0
        %2887 = vmatprep.mubr.f32.mxu0 0.0
        %2888 = vmatmul.mubr.f32.gmra.mxu0 %v2687
        %v2889 = vpop.f32.mrf.mxu0
        %v2890 = vadd.f32 0.0, %v2889
        %v2891 = vpop.f32.mrf.mxu0
        %2892 = vmatprep.mubr.f32.mxu0 0.0
        %2893 = vmatmul.mubr.f32.gmra.mxu0 %v2690
        %v2894 = vpop.f32.mrf.mxu0
        %v2895 = vadd.f32 0.0, %v2894
        %v2896 = vpop.f32.mrf.mxu0
        %2897 = vmatprep.mubr.f32.mxu0 0.0
        %2898 = vmatmul.mubr.f32.gmra.mxu0 %v2693
        %v2899 = vpop.f32.mrf.mxu0
        %v2900 = vadd.f32 0.0, %v2899
        %v2901 = vpop.f32.mrf.mxu0
        %2902 = vmatprep.mubr.f32.mxu0 0.0
        %2903 = vmatmul.mubr.f32.gmra.mxu0 %v2696
        %v2904 = vpop.f32.mrf.mxu0
        %v2905 = vadd.f32 0.0, %v2904
        %v2906 = vpop.f32.mrf.mxu0
        %2907 = vmatprep.mubr.f32.mxu0 0.0
        %2908 = vmatmul.mubr.f32.gmra.mxu0 %v2699
        %v2909 = vpop.f32.mrf.mxu0
        %v2910 = vadd.f32 0.0, %v2909
        %v2911 = vpop.f32.mrf.mxu0
        %2912 = vmatprep.mubr.f32.mxu0 0.0
        %2913 = vmatmul.mubr.f32.gmra.mxu0 %v2702
        %v2914 = vpop.f32.mrf.mxu0
        %v2915 = vadd.f32 0.0, %v2914
        %v2916 = vpop.f32.mrf.mxu0
        %2917 = vmatprep.mubr.f32.mxu0 0.0
        %2918 = vmatmul.mubr.f32.gmra.mxu0 %v2705
        %v2919 = vpop.f32.mrf.mxu0
        %v2920 = vadd.f32 0.0, %v2919
        %v2921 = vpop.f32.mrf.mxu0
        %2922 = vmatprep.mubr.f32.mxu0 0.0
        %2923 = vmatmul.mubr.f32.gmra.mxu0 %v2708
        %v2924 = vpop.f32.mrf.mxu0
        %v2925 = vadd.f32 0.0, %v2924
        %v2926 = vpop.f32.mrf.mxu0
        %2927 = vmatprep.mubr.f32.mxu0 0.0
        %2928 = vmatmul.mubr.f32.gmra.mxu0 %v2711
        %v2929 = vpop.f32.mrf.mxu0
        %v2930 = vadd.f32 0.0, %v2929
        %v2931 = vpop.f32.mrf.mxu0
        %2932 = vmatprep.mubr.f32.mxu0 0.0
        %2933 = vmatmul.mubr.f32.gmra.mxu0 %v2714
        %v2934 = vpop.f32.mrf.mxu0
        %v2935 = vadd.f32 0.0, %v2934
        %v2936 = vpop.f32.mrf.mxu0
        %2937 = vmatprep.mubr.f32.mxu0 0.0
        %2938 = vmatmul.mubr.f32.gmra.mxu0 %v2717
        %v2939 = vpop.f32.mrf.mxu0
        %v2940 = vadd.f32 0.0, %v2939
        %v2941 = vpop.f32.mrf.mxu0
        %2942 = vmatprep.mubr.f32.mxu0 0.0
        %2943 = vmatmul.mubr.f32.gmra.mxu0 %v2720
        %v2944 = vpop.f32.mrf.mxu0
        %v2945 = vadd.f32 0.0, %v2944
        %v2946 = vpop.f32.mrf.mxu0
        %2947 = vmatprep.mubr.f32.mxu0 0.0
        %2948 = vmatmul.mubr.f32.gmra.mxu0 %v2723
        %v2949 = vpop.f32.mrf.mxu0
        %v2950 = vadd.f32 0.0, %v2949
        %v2951 = vpop.f32.mrf.mxu0
        %2952 = vdwg.mxu0
        %v2953 = vadd.f32 %v2563, %v2795
        %v2954 = vadd.f32 %v2564, %v2800
        %v2955 = vadd.f32 %v2565, %v2805
        %v2956 = vadd.f32 %v2566, %v2810
        %v2957 = vadd.f32 %v2567, %v2815
        %v2958 = vadd.f32 %v2568, %v2820
        %v2959 = vadd.f32 %v2569, %v2825
        %v2960 = vadd.f32 %v2570, %v2830
        %v2961 = vadd.f32 %v2571, %v2835
        %v2962 = vadd.f32 %v2572, %v2840
        %v2963 = vadd.f32 %v2573, %v2845
        %v2964 = vadd.f32 %v2574, %v2850
        %v2965 = vadd.f32 %v2575, %v2855
        %v2966 = vadd.f32 %v2576, %v2860
        %v2967 = vadd.f32 %v2577, %v2865
        %v2968 = vadd.f32 %v2578, %v2870
        %v2969 = vadd.f32 %v2579, %v2875
        %v2970 = vadd.f32 %v2580, %v2880
        %v2971 = vadd.f32 %v2581, %v2885
        %v2972 = vadd.f32 %v2582, %v2890
        %v2973 = vadd.f32 %v2583, %v2895
        %v2974 = vadd.f32 %v2584, %v2900
        %v2975 = vadd.f32 %v2585, %v2905
        %v2976 = vadd.f32 %v2586, %v2910
        %v2977 = vadd.f32 %v2587, %v2915
        %v2978 = vadd.f32 %v2588, %v2920
        %v2979 = vadd.f32 %v2589, %v2925
        %v2980 = vadd.f32 %v2590, %v2930
        %v2981 = vadd.f32 %v2591, %v2935
        %v2982 = vadd.f32 %v2592, %v2940
        %v2983 = vadd.f32 %v2593, %v2945
        %v2984 = vadd.f32 %v2594, %v2950
        %v2985 = vld [vmem:[%s2595 + $0x1] sm:$0xff]
        %v2986 = vld [vmem:[%s2595 + $0x9] sm:$0xff]
        %v2987 = vld [vmem:[%s2595 + $0x19] sm:$0xff]
        %v2988 = vld [vmem:[%s2595 + $0x21] sm:$0xff]
        %v2989 = vld [vmem:[%s2595 + $0x31] sm:$0xff]
        %v2990 = vld [vmem:[%s2595 + $0x39] sm:$0xff]
        %v2991 = vld [vmem:[%s2595 + $0x49] sm:$0xff]
        %v2992 = vld [vmem:[%s2595 + $0x51] sm:$0xff]
        %v2993 = vld [vmem:[%s2595 + $0x61] sm:$0xff]
        %v2994 = vld [vmem:[%s2595 + $0x69] sm:$0xff]
        %v2995 = vld [vmem:[%s2595 + $0x79] sm:$0xff]
        %v2996 = vld [vmem:[%s2595 + $0x81] sm:$0xff]
        %v2997 = vld [vmem:[%s2595 + $0x91] sm:$0xff]
        %v2998 = vld [vmem:[%s2595 + $0x99] sm:$0xff]
        %v2999 = vld [vmem:[%s2595 + $0xa9] sm:$0xff]
        %v3000 = vld [vmem:[%s2595 + $0xb1] sm:$0xff]
        %v3001 = vld [vmem:[%s2595 + $0xc1] sm:$0xff]
        %v3002 = vld [vmem:[%s2595 + $0xc9] sm:$0xff]
        %v3003 = vld [vmem:[%s2595 + $0xd9] sm:$0xff]
        %v3004 = vld [vmem:[%s2595 + $0xe1] sm:$0xff]
        %v3005 = vld [vmem:[%s2595 + $0xf1] sm:$0xff]
        %v3006 = vld [vmem:[%s2595 + $0xf9] sm:$0xff]
        %v3007 = vld [vmem:[%s2595 + $0x109] sm:$0xff]
        %v3008 = vld [vmem:[%s2595 + $0x111] sm:$0xff]
        %v3009 = vld [vmem:[%s2595 + $0x121] sm:$0xff]
        %v3010 = vld [vmem:[%s2595 + $0x129] sm:$0xff]
        %v3011 = vld [vmem:[%s2595 + $0x139] sm:$0xff]
        %v3012 = vld [vmem:[%s2595 + $0x141] sm:$0xff]
        %v3013 = vld [vmem:[%s2595 + $0x151] sm:$0xff]
        %v3014 = vld [vmem:[%s2595 + $0x159] sm:$0xff]
        %v3015 = vld [vmem:[%s2595 + $0x169] sm:$0xff]
        %v3016 = vld [vmem:[%s2595 + $0x171] sm:$0xff]
        %v3017 = vld [vmem:[%s1 + $0x1c] sm:$0xf]
        %v3019 = vsel %vm249, %v2985, 0
        %v3022 = vsel %vm249, %v2986, 0
        %v3025 = vsel %vm249, %v2987, 0
        %v3028 = vsel %vm249, %v2988, 0
        %v3031 = vsel %vm249, %v2989, 0
        %v3034 = vsel %vm249, %v2990, 0
        %v3037 = vsel %vm249, %v2991, 0
        %v3040 = vsel %vm249, %v2992, 0
        %v3043 = vsel %vm249, %v2993, 0
        %v3046 = vsel %vm249, %v2994, 0
        %v3049 = vsel %vm249, %v2995, 0
        %v3052 = vsel %vm249, %v2996, 0
        %v3055 = vsel %vm249, %v2997, 0
        %v3058 = vsel %vm249, %v2998, 0
        %v3061 = vsel %vm249, %v2999, 0
        %v3064 = vsel %vm249, %v3000, 0
        %v3067 = vsel %vm249, %v3001, 0
        %v3070 = vsel %vm249, %v3002, 0
        %v3073 = vsel %vm249, %v3003, 0
        %v3076 = vsel %vm249, %v3004, 0
        %v3079 = vsel %vm249, %v3005, 0
        %v3082 = vsel %vm249, %v3006, 0
        %v3085 = vsel %vm249, %v3007, 0
        %v3088 = vsel %vm249, %v3008, 0
        %v3091 = vsel %vm249, %v3009, 0
        %v3094 = vsel %vm249, %v3010, 0
        %v3097 = vsel %vm249, %v3011, 0
        %v3100 = vsel %vm249, %v3012, 0
        %v3103 = vsel %vm249, %v3013, 0
        %v3106 = vsel %vm249, %v3014, 0
        %v3109 = vsel %vm249, %v3015, 0
        %v3112 = vsel %vm249, %v3016, 0
        %v3115 = vsel %vm486, %v3017, 0
        %3117 = vmatprep.subr.mxu0 0.0
        %3118 = vmatpush1.msra.mxu0 0.0
        %3119 = vmatprep.subr.mxu0 0.0
        %3120 = vmatpush1.msra.mxu0 0.0
        %3121 = vmatprep.subr.mxu0 0.0
        %3122 = vmatpush1.msra.mxu0 0.0
        %3123 = vmatprep.subr.mxu0 0.0
        %3124 = vmatpush1.msra.mxu0 0.0
        %3125 = vmatprep.subr.mxu0 0.0
        %3126 = vmatpush1.msra.mxu0 0.0
        %3127 = vmatprep.subr.mxu0 0.0
        %3128 = vmatpush1.msra.mxu0 0.0
        %3129 = vmatprep.subr.mxu0 0.0
        %3130 = vmatpush1.msra.mxu0 0.0
        %3131 = vmatprep.subr.mxu0 0.0
        %3132 = vmatpush1.msra.mxu0 0.0
        %3133 = vmatprep.subr.mxu0 0.0
        %3134 = vmatpush1.msra.mxu0 0.0
        %3135 = vmatprep.subr.mxu0 0.0
        %3136 = vmatpush1.msra.mxu0 0.0
        %3137 = vmatprep.subr.mxu0 0.0
        %3138 = vmatpush1.msra.mxu0 0.0
        %3139 = vmatprep.subr.mxu0 0.0
        %3140 = vmatpush1.msra.mxu0 0.0
        %3141 = vmatprep.subr.mxu0 0.0
        %3142 = vmatpush1.msra.mxu0 0.0
        %3143 = vmatprep.subr.mxu0 0.0
        %3144 = vmatpush1.msra.mxu0 0.0
        %3145 = vmatprep.subr.mxu0 0.0
        %3146 = vmatpush1.msra.mxu0 0.0
        %3147 = vmatprep.subr.mxu0 0.0
        %3148 = vmatpush1.msra.mxu0 %v3115
        %3149 = vmatprep.subr.mxu0 0.0
        %3150 = vmatpush2.msra.mxu0 0.0
        %3151 = vmatprep.subr.mxu0 0.0
        %3152 = vmatpush2.msra.mxu0 0.0
        %3153 = vmatprep.subr.mxu0 0.0
        %3154 = vmatpush2.msra.mxu0 0.0
        %3155 = vmatprep.subr.mxu0 0.0
        %3156 = vmatpush2.msra.mxu0 0.0
        %3157 = vmatprep.subr.mxu0 0.0
        %3158 = vmatpush2.msra.mxu0 0.0
        %3159 = vmatprep.subr.mxu0 0.0
        %3160 = vmatpush2.msra.mxu0 0.0
        %3161 = vmatprep.subr.mxu0 0.0
        %3162 = vmatpush2.msra.mxu0 0.0
        %3163 = vmatprep.subr.mxu0 0.0
        %3164 = vmatpush2.msra.mxu0 0.0
        %3165 = vmatprep.subr.mxu0 0.0
        %3166 = vmatpush2.msra.mxu0 0.0
        %3167 = vmatprep.subr.mxu0 0.0
        %3168 = vmatpush2.msra.mxu0 0.0
        %3169 = vmatprep.subr.mxu0 0.0
        %3170 = vmatpush2.msra.mxu0 0.0
        %3171 = vmatprep.subr.mxu0 0.0
        %3172 = vmatpush2.msra.mxu0 0.0
        %3173 = vmatprep.subr.mxu0 0.0
        %3174 = vmatpush2.msra.mxu0 0.0
        %3175 = vmatprep.subr.mxu0 0.0
        %3176 = vmatpush2.msra.mxu0 0.0
        %3177 = vmatprep.subr.mxu0 0.0
        %3178 = vmatpush2.msra.mxu0 0.0
        %3179 = vmatprep.subr.mxu0 0.0
        %3180 = vmatpush2.msra.mxu0 0.0
        %3181 = vmatprep.mubr.f32.mxu0 0.0
        %3182 = vmatmul.mubr.f32.gmra.mxu0 %v3019
        %v3183 = vpop.f32.mrf.mxu0
        %v3184 = vadd.f32 0.0, %v3183
        %v3185 = vpop.f32.mrf.mxu0
        %3186 = vmatprep.mubr.f32.mxu0 0.0
        %3187 = vmatmul.mubr.f32.gmra.mxu0 %v3022
        %v3188 = vpop.f32.mrf.mxu0
        %v3189 = vadd.f32 0.0, %v3188
        %v3190 = vpop.f32.mrf.mxu0
        %3191 = vmatprep.mubr.f32.mxu0 0.0
        %3192 = vmatmul.mubr.f32.gmra.mxu0 %v3025
        %v3193 = vpop.f32.mrf.mxu0
        %v3194 = vadd.f32 0.0, %v3193
        %v3195 = vpop.f32.mrf.mxu0
        %3196 = vmatprep.mubr.f32.mxu0 0.0
        %3197 = vmatmul.mubr.f32.gmra.mxu0 %v3028
        %v3198 = vpop.f32.mrf.mxu0
        %v3199 = vadd.f32 0.0, %v3198
        %v3200 = vpop.f32.mrf.mxu0
        %3201 = vmatprep.mubr.f32.mxu0 0.0
        %3202 = vmatmul.mubr.f32.gmra.mxu0 %v3031
        %v3203 = vpop.f32.mrf.mxu0
        %v3204 = vadd.f32 0.0, %v3203
        %v3205 = vpop.f32.mrf.mxu0
        %3206 = vmatprep.mubr.f32.mxu0 0.0
        %3207 = vmatmul.mubr.f32.gmra.mxu0 %v3034
        %v3208 = vpop.f32.mrf.mxu0
        %v3209 = vadd.f32 0.0, %v3208
        %v3210 = vpop.f32.mrf.mxu0
        %3211 = vmatprep.mubr.f32.mxu0 0.0
        %3212 = vmatmul.mubr.f32.gmra.mxu0 %v3037
        %v3213 = vpop.f32.mrf.mxu0
        %v3214 = vadd.f32 0.0, %v3213
        %v3215 = vpop.f32.mrf.mxu0
        %3216 = vmatprep.mubr.f32.mxu0 0.0
        %3217 = vmatmul.mubr.f32.gmra.mxu0 %v3040
        %v3218 = vpop.f32.mrf.mxu0
        %v3219 = vadd.f32 0.0, %v3218
        %v3220 = vpop.f32.mrf.mxu0
        %3221 = vmatprep.mubr.f32.mxu0 0.0
        %3222 = vmatmul.mubr.f32.gmra.mxu0 %v3043
        %v3223 = vpop.f32.mrf.mxu0
        %v3224 = vadd.f32 0.0, %v3223
        %v3225 = vpop.f32.mrf.mxu0
        %3226 = vmatprep.mubr.f32.mxu0 0.0
        %3227 = vmatmul.mubr.f32.gmra.mxu0 %v3046
        %v3228 = vpop.f32.mrf.mxu0
        %v3229 = vadd.f32 0.0, %v3228
        %v3230 = vpop.f32.mrf.mxu0
        %3231 = vmatprep.mubr.f32.mxu0 0.0
        %3232 = vmatmul.mubr.f32.gmra.mxu0 %v3049
        %v3233 = vpop.f32.mrf.mxu0
        %v3234 = vadd.f32 0.0, %v3233
        %v3235 = vpop.f32.mrf.mxu0
        %3236 = vmatprep.mubr.f32.mxu0 0.0
        %3237 = vmatmul.mubr.f32.gmra.mxu0 %v3052
        %v3238 = vpop.f32.mrf.mxu0
        %v3239 = vadd.f32 0.0, %v3238
        %v3240 = vpop.f32.mrf.mxu0
        %3241 = vmatprep.mubr.f32.mxu0 0.0
        %3242 = vmatmul.mubr.f32.gmra.mxu0 %v3055
        %v3243 = vpop.f32.mrf.mxu0
        %v3244 = vadd.f32 0.0, %v3243
        %v3245 = vpop.f32.mrf.mxu0
        %3246 = vmatprep.mubr.f32.mxu0 0.0
        %3247 = vmatmul.mubr.f32.gmra.mxu0 %v3058
        %v3248 = vpop.f32.mrf.mxu0
        %v3249 = vadd.f32 0.0, %v3248
        %v3250 = vpop.f32.mrf.mxu0
        %3251 = vmatprep.mubr.f32.mxu0 0.0
        %3252 = vmatmul.mubr.f32.gmra.mxu0 %v3061
        %v3253 = vpop.f32.mrf.mxu0
        %v3254 = vadd.f32 0.0, %v3253
        %v3255 = vpop.f32.mrf.mxu0
        %3256 = vmatprep.mubr.f32.mxu0 0.0
        %3257 = vmatmul.mubr.f32.gmra.mxu0 %v3064
        %v3258 = vpop.f32.mrf.mxu0
        %v3259 = vadd.f32 0.0, %v3258
        %v3260 = vpop.f32.mrf.mxu0
        %3261 = vmatprep.mubr.f32.mxu0 0.0
        %3262 = vmatmul.mubr.f32.gmra.mxu0 %v3067
        %v3263 = vpop.f32.mrf.mxu0
        %v3264 = vadd.f32 0.0, %v3263
        %v3265 = vpop.f32.mrf.mxu0
        %3266 = vmatprep.mubr.f32.mxu0 0.0
        %3267 = vmatmul.mubr.f32.gmra.mxu0 %v3070
        %v3268 = vpop.f32.mrf.mxu0
        %v3269 = vadd.f32 0.0, %v3268
        %v3270 = vpop.f32.mrf.mxu0
        %3271 = vmatprep.mubr.f32.mxu0 0.0
        %3272 = vmatmul.mubr.f32.gmra.mxu0 %v3073
        %v3273 = vpop.f32.mrf.mxu0
        %v3274 = vadd.f32 0.0, %v3273
        %v3275 = vpop.f32.mrf.mxu0
        %3276 = vmatprep.mubr.f32.mxu0 0.0
        %3277 = vmatmul.mubr.f32.gmra.mxu0 %v3076
        %v3278 = vpop.f32.mrf.mxu0
        %v3279 = vadd.f32 0.0, %v3278
        %v3280 = vpop.f32.mrf.mxu0
        %3281 = vmatprep.mubr.f32.mxu0 0.0
        %3282 = vmatmul.mubr.f32.gmra.mxu0 %v3079
        %v3283 = vpop.f32.mrf.mxu0
        %v3284 = vadd.f32 0.0, %v3283
        %v3285 = vpop.f32.mrf.mxu0
        %3286 = vmatprep.mubr.f32.mxu0 0.0
        %3287 = vmatmul.mubr.f32.gmra.mxu0 %v3082
        %v3288 = vpop.f32.mrf.mxu0
        %v3289 = vadd.f32 0.0, %v3288
        %v3290 = vpop.f32.mrf.mxu0
        %3291 = vmatprep.mubr.f32.mxu0 0.0
        %3292 = vmatmul.mubr.f32.gmra.mxu0 %v3085
        %v3293 = vpop.f32.mrf.mxu0
        %v3294 = vadd.f32 0.0, %v3293
        %v3295 = vpop.f32.mrf.mxu0
        %3296 = vmatprep.mubr.f32.mxu0 0.0
        %3297 = vmatmul.mubr.f32.gmra.mxu0 %v3088
        %v3298 = vpop.f32.mrf.mxu0
        %v3299 = vadd.f32 0.0, %v3298
        %v3300 = vpop.f32.mrf.mxu0
        %3301 = vmatprep.mubr.f32.mxu0 0.0
        %3302 = vmatmul.mubr.f32.gmra.mxu0 %v3091
        %v3303 = vpop.f32.mrf.mxu0
        %v3304 = vadd.f32 0.0, %v3303
        %v3305 = vpop.f32.mrf.mxu0
        %3306 = vmatprep.mubr.f32.mxu0 0.0
        %3307 = vmatmul.mubr.f32.gmra.mxu0 %v3094
        %v3308 = vpop.f32.mrf.mxu0
        %v3309 = vadd.f32 0.0, %v3308
        %v3310 = vpop.f32.mrf.mxu0
        %3311 = vmatprep.mubr.f32.mxu0 0.0
        %3312 = vmatmul.mubr.f32.gmra.mxu0 %v3097
        %v3313 = vpop.f32.mrf.mxu0
        %v3314 = vadd.f32 0.0, %v3313
        %v3315 = vpop.f32.mrf.mxu0
        %3316 = vmatprep.mubr.f32.mxu0 0.0
        %3317 = vmatmul.mubr.f32.gmra.mxu0 %v3100
        %v3318 = vpop.f32.mrf.mxu0
        %v3319 = vadd.f32 0.0, %v3318
        %v3320 = vpop.f32.mrf.mxu0
        %3321 = vmatprep.mubr.f32.mxu0 0.0
        %3322 = vmatmul.mubr.f32.gmra.mxu0 %v3103
        %v3323 = vpop.f32.mrf.mxu0
        %v3324 = vadd.f32 0.0, %v3323
        %v3325 = vpop.f32.mrf.mxu0
        %3326 = vmatprep.mubr.f32.mxu0 0.0
        %3327 = vmatmul.mubr.f32.gmra.mxu0 %v3106
        %v3328 = vpop.f32.mrf.mxu0
        %v3329 = vadd.f32 0.0, %v3328
        %v3330 = vpop.f32.mrf.mxu0
        %3331 = vmatprep.mubr.f32.mxu0 0.0
        %3332 = vmatmul.mubr.f32.gmra.mxu0 %v3109
        %v3333 = vpop.f32.mrf.mxu0
        %v3334 = vadd.f32 0.0, %v3333
        %v3335 = vpop.f32.mrf.mxu0
        %3336 = vmatprep.mubr.f32.mxu0 0.0
        %3337 = vmatmul.mubr.f32.gmra.mxu0 %v3112
        %v3338 = vpop.f32.mrf.mxu0
        %v3339 = vadd.f32 0.0, %v3338
        %v3340 = vpop.f32.mrf.mxu0
        %3341 = vdwg.mxu0
        %v3342 = vadd.f32 %v2953, %v3184
        %v3343 = vadd.f32 %v2954, %v3189
        %v3344 = vadd.f32 %v2955, %v3194
        %v3345 = vadd.f32 %v2956, %v3199
        %v3346 = vadd.f32 %v2957, %v3204
        %v3347 = vadd.f32 %v2958, %v3209
        %v3348 = vadd.f32 %v2959, %v3214
        %v3349 = vadd.f32 %v2960, %v3219
        %v3350 = vadd.f32 %v2961, %v3224
        %v3351 = vadd.f32 %v2962, %v3229
        %v3352 = vadd.f32 %v2963, %v3234
        %v3353 = vadd.f32 %v2964, %v3239
        %v3354 = vadd.f32 %v2965, %v3244
        %v3355 = vadd.f32 %v2966, %v3249
        %v3356 = vadd.f32 %v2967, %v3254
        %v3357 = vadd.f32 %v2968, %v3259
        %v3358 = vadd.f32 %v2969, %v3264
        %v3359 = vadd.f32 %v2970, %v3269
        %v3360 = vadd.f32 %v2971, %v3274
        %v3361 = vadd.f32 %v2972, %v3279
        %v3362 = vadd.f32 %v2973, %v3284
        %v3363 = vadd.f32 %v2974, %v3289
        %v3364 = vadd.f32 %v2975, %v3294
        %v3365 = vadd.f32 %v2976, %v3299
        %v3366 = vadd.f32 %v2977, %v3304
        %v3367 = vadd.f32 %v2978, %v3309
        %v3368 = vadd.f32 %v2979, %v3314
        %v3369 = vadd.f32 %v2980, %v3319
        %v3370 = vadd.f32 %v2981, %v3324
        %v3371 = vadd.f32 %v2982, %v3329
        %v3372 = vadd.f32 %v2983, %v3334
        %v3373 = vadd.f32 %v2984, %v3339
        %v3374 = vld [vmem:[%s2595 + $0x2] sm:$0xff]
        %v3375 = vld [vmem:[%s2595 + $0xa] sm:$0xff]
        %v3376 = vld [vmem:[%s2595 + $0x1a] sm:$0xff]
        %v3377 = vld [vmem:[%s2595 + $0x22] sm:$0xff]
        %v3378 = vld [vmem:[%s2595 + $0x32] sm:$0xff]
        %v3379 = vld [vmem:[%s2595 + $0x3a] sm:$0xff]
        %v3380 = vld [vmem:[%s2595 + $0x4a] sm:$0xff]
        %v3381 = vld [vmem:[%s2595 + $0x52] sm:$0xff]
        %v3382 = vld [vmem:[%s2595 + $0x62] sm:$0xff]
        %v3383 = vld [vmem:[%s2595 + $0x6a] sm:$0xff]
        %v3384 = vld [vmem:[%s2595 + $0x7a] sm:$0xff]
        %v3385 = vld [vmem:[%s2595 + $0x82] sm:$0xff]
        %v3386 = vld [vmem:[%s2595 + $0x92] sm:$0xff]
        %v3387 = vld [vmem:[%s2595 + $0x9a] sm:$0xff]
        %v3388 = vld [vmem:[%s2595 + $0xaa] sm:$0xff]
        %v3389 = vld [vmem:[%s2595 + $0xb2] sm:$0xff]
        %v3390 = vld [vmem:[%s2595 + $0xc2] sm:$0xff]
        %v3391 = vld [vmem:[%s2595 + $0xca] sm:$0xff]
        %v3392 = vld [vmem:[%s2595 + $0xda] sm:$0xff]
        %v3393 = vld [vmem:[%s2595 + $0xe2] sm:$0xff]
        %v3394 = vld [vmem:[%s2595 + $0xf2] sm:$0xff]
        %v3395 = vld [vmem:[%s2595 + $0xfa] sm:$0xff]
        %v3396 = vld [vmem:[%s2595 + $0x10a] sm:$0xff]
        %v3397 = vld [vmem:[%s2595 + $0x112] sm:$0xff]
        %v3398 = vld [vmem:[%s2595 + $0x122] sm:$0xff]
        %v3399 = vld [vmem:[%s2595 + $0x12a] sm:$0xff]
        %v3400 = vld [vmem:[%s2595 + $0x13a] sm:$0xff]
        %v3401 = vld [vmem:[%s2595 + $0x142] sm:$0xff]
        %v3402 = vld [vmem:[%s2595 + $0x152] sm:$0xff]
        %v3403 = vld [vmem:[%s2595 + $0x15a] sm:$0xff]
        %v3404 = vld [vmem:[%s2595 + $0x16a] sm:$0xff]
        %v3405 = vld [vmem:[%s2595 + $0x172] sm:$0xff]
        %v3406 = vld [vmem:[%s1 + $0x20] sm:$0xf]
        %v3408 = vsel %vm249, %v3374, 0
        %v3411 = vsel %vm249, %v3375, 0
        %v3414 = vsel %vm249, %v3376, 0
        %v3417 = vsel %vm249, %v3377, 0
        %v3420 = vsel %vm249, %v3378, 0
        %v3423 = vsel %vm249, %v3379, 0
        %v3426 = vsel %vm249, %v3380, 0
        %v3429 = vsel %vm249, %v3381, 0
        %v3432 = vsel %vm249, %v3382, 0
        %v3435 = vsel %vm249, %v3383, 0
        %v3438 = vsel %vm249, %v3384, 0
        %v3441 = vsel %vm249, %v3385, 0
        %v3444 = vsel %vm249, %v3386, 0
        %v3447 = vsel %vm249, %v3387, 0
        %v3450 = vsel %vm249, %v3388, 0
        %v3453 = vsel %vm249, %v3389, 0
        %v3456 = vsel %vm249, %v3390, 0
        %v3459 = vsel %vm249, %v3391, 0
        %v3462 = vsel %vm249, %v3392, 0
        %v3465 = vsel %vm249, %v3393, 0
        %v3468 = vsel %vm249, %v3394, 0
        %v3471 = vsel %vm249, %v3395, 0
        %v3474 = vsel %vm249, %v3396, 0
        %v3477 = vsel %vm249, %v3397, 0
        %v3480 = vsel %vm249, %v3398, 0
        %v3483 = vsel %vm249, %v3399, 0
        %v3486 = vsel %vm249, %v3400, 0
        %v3489 = vsel %vm249, %v3401, 0
        %v3492 = vsel %vm249, %v3402, 0
        %v3495 = vsel %vm249, %v3403, 0
        %v3498 = vsel %vm249, %v3404, 0
        %v3501 = vsel %vm249, %v3405, 0
        %v3504 = vsel %vm486, %v3406, 0
        %3506 = vmatprep.subr.mxu0 0.0
        %3507 = vmatpush1.msra.mxu0 0.0
        %3508 = vmatprep.subr.mxu0 0.0
        %3509 = vmatpush1.msra.mxu0 0.0
        %3510 = vmatprep.subr.mxu0 0.0
        %3511 = vmatpush1.msra.mxu0 0.0
        %3512 = vmatprep.subr.mxu0 0.0
        %3513 = vmatpush1.msra.mxu0 0.0
        %3514 = vmatprep.subr.mxu0 0.0
        %3515 = vmatpush1.msra.mxu0 0.0
        %3516 = vmatprep.subr.mxu0 0.0
        %3517 = vmatpush1.msra.mxu0 0.0
        %3518 = vmatprep.subr.mxu0 0.0
        %3519 = vmatpush1.msra.mxu0 0.0
        %3520 = vmatprep.subr.mxu0 0.0
        %3521 = vmatpush1.msra.mxu0 0.0
        %3522 = vmatprep.subr.mxu0 0.0
        %3523 = vmatpush1.msra.mxu0 0.0
        %3524 = vmatprep.subr.mxu0 0.0
        %3525 = vmatpush1.msra.mxu0 0.0
        %3526 = vmatprep.subr.mxu0 0.0
        %3527 = vmatpush1.msra.mxu0 0.0
        %3528 = vmatprep.subr.mxu0 0.0
        %3529 = vmatpush1.msra.mxu0 0.0
        %3530 = vmatprep.subr.mxu0 0.0
        %3531 = vmatpush1.msra.mxu0 0.0
        %3532 = vmatprep.subr.mxu0 0.0
        %3533 = vmatpush1.msra.mxu0 0.0
        %3534 = vmatprep.subr.mxu0 0.0
        %3535 = vmatpush1.msra.mxu0 0.0
        %3536 = vmatprep.subr.mxu0 0.0
        %3537 = vmatpush1.msra.mxu0 %v3504
        %3538 = vmatprep.subr.mxu0 0.0
        %3539 = vmatpush2.msra.mxu0 0.0
        %3540 = vmatprep.subr.mxu0 0.0
        %3541 = vmatpush2.msra.mxu0 0.0
        %3542 = vmatprep.subr.mxu0 0.0
        %3543 = vmatpush2.msra.mxu0 0.0
        %3544 = vmatprep.subr.mxu0 0.0
        %3545 = vmatpush2.msra.mxu0 0.0
        %3546 = vmatprep.subr.mxu0 0.0
        %3547 = vmatpush2.msra.mxu0 0.0
        %3548 = vmatprep.subr.mxu0 0.0
        %3549 = vmatpush2.msra.mxu0 0.0
        %3550 = vmatprep.subr.mxu0 0.0
        %3551 = vmatpush2.msra.mxu0 0.0
        %3552 = vmatprep.subr.mxu0 0.0
        %3553 = vmatpush2.msra.mxu0 0.0
        %3554 = vmatprep.subr.mxu0 0.0
        %3555 = vmatpush2.msra.mxu0 0.0
        %3556 = vmatprep.subr.mxu0 0.0
        %3557 = vmatpush2.msra.mxu0 0.0
        %3558 = vmatprep.subr.mxu0 0.0
        %3559 = vmatpush2.msra.mxu0 0.0
        %3560 = vmatprep.subr.mxu0 0.0
        %3561 = vmatpush2.msra.mxu0 0.0
        %3562 = vmatprep.subr.mxu0 0.0
        %3563 = vmatpush2.msra.mxu0 0.0
        %3564 = vmatprep.subr.mxu0 0.0
        %3565 = vmatpush2.msra.mxu0 0.0
        %3566 = vmatprep.subr.mxu0 0.0
        %3567 = vmatpush2.msra.mxu0 0.0
        %3568 = vmatprep.subr.mxu0 0.0
        %3569 = vmatpush2.msra.mxu0 0.0
        %3570 = vmatprep.mubr.f32.mxu0 0.0
        %3571 = vmatmul.mubr.f32.gmra.mxu0 %v3408
        %v3572 = vpop.f32.mrf.mxu0
        %v3573 = vadd.f32 0.0, %v3572
        %v3574 = vpop.f32.mrf.mxu0
        %3575 = vmatprep.mubr.f32.mxu0 0.0
        %3576 = vmatmul.mubr.f32.gmra.mxu0 %v3411
        %v3577 = vpop.f32.mrf.mxu0
        %v3578 = vadd.f32 0.0, %v3577
        %v3579 = vpop.f32.mrf.mxu0
        %3580 = vmatprep.mubr.f32.mxu0 0.0
        %3581 = vmatmul.mubr.f32.gmra.mxu0 %v3414
        %v3582 = vpop.f32.mrf.mxu0
        %v3583 = vadd.f32 0.0, %v3582
        %v3584 = vpop.f32.mrf.mxu0
        %3585 = vmatprep.mubr.f32.mxu0 0.0
        %3586 = vmatmul.mubr.f32.gmra.mxu0 %v3417
        %v3587 = vpop.f32.mrf.mxu0
        %v3588 = vadd.f32 0.0, %v3587
        %v3589 = vpop.f32.mrf.mxu0
        %3590 = vmatprep.mubr.f32.mxu0 0.0
        %3591 = vmatmul.mubr.f32.gmra.mxu0 %v3420
        %v3592 = vpop.f32.mrf.mxu0
        %v3593 = vadd.f32 0.0, %v3592
        %v3594 = vpop.f32.mrf.mxu0
        %3595 = vmatprep.mubr.f32.mxu0 0.0
        %3596 = vmatmul.mubr.f32.gmra.mxu0 %v3423
        %v3597 = vpop.f32.mrf.mxu0
        %v3598 = vadd.f32 0.0, %v3597
        %v3599 = vpop.f32.mrf.mxu0
        %3600 = vmatprep.mubr.f32.mxu0 0.0
        %3601 = vmatmul.mubr.f32.gmra.mxu0 %v3426
        %v3602 = vpop.f32.mrf.mxu0
        %v3603 = vadd.f32 0.0, %v3602
        %v3604 = vpop.f32.mrf.mxu0
        %3605 = vmatprep.mubr.f32.mxu0 0.0
        %3606 = vmatmul.mubr.f32.gmra.mxu0 %v3429
        %v3607 = vpop.f32.mrf.mxu0
        %v3608 = vadd.f32 0.0, %v3607
        %v3609 = vpop.f32.mrf.mxu0
        %3610 = vmatprep.mubr.f32.mxu0 0.0
        %3611 = vmatmul.mubr.f32.gmra.mxu0 %v3432
        %v3612 = vpop.f32.mrf.mxu0
        %v3613 = vadd.f32 0.0, %v3612
        %v3614 = vpop.f32.mrf.mxu0
        %3615 = vmatprep.mubr.f32.mxu0 0.0
        %3616 = vmatmul.mubr.f32.gmra.mxu0 %v3435
        %v3617 = vpop.f32.mrf.mxu0
        %v3618 = vadd.f32 0.0, %v3617
        %v3619 = vpop.f32.mrf.mxu0
        %3620 = vmatprep.mubr.f32.mxu0 0.0
        %3621 = vmatmul.mubr.f32.gmra.mxu0 %v3438
        %v3622 = vpop.f32.mrf.mxu0
        %v3623 = vadd.f32 0.0, %v3622
        %v3624 = vpop.f32.mrf.mxu0
        %3625 = vmatprep.mubr.f32.mxu0 0.0
        %3626 = vmatmul.mubr.f32.gmra.mxu0 %v3441
        %v3627 = vpop.f32.mrf.mxu0
        %v3628 = vadd.f32 0.0, %v3627
        %v3629 = vpop.f32.mrf.mxu0
        %3630 = vmatprep.mubr.f32.mxu0 0.0
        %3631 = vmatmul.mubr.f32.gmra.mxu0 %v3444
        %v3632 = vpop.f32.mrf.mxu0
        %v3633 = vadd.f32 0.0, %v3632
        %v3634 = vpop.f32.mrf.mxu0
        %3635 = vmatprep.mubr.f32.mxu0 0.0
        %3636 = vmatmul.mubr.f32.gmra.mxu0 %v3447
        %v3637 = vpop.f32.mrf.mxu0
        %v3638 = vadd.f32 0.0, %v3637
        %v3639 = vpop.f32.mrf.mxu0
        %3640 = vmatprep.mubr.f32.mxu0 0.0
        %3641 = vmatmul.mubr.f32.gmra.mxu0 %v3450
        %v3642 = vpop.f32.mrf.mxu0
        %v3643 = vadd.f32 0.0, %v3642
        %v3644 = vpop.f32.mrf.mxu0
        %3645 = vmatprep.mubr.f32.mxu0 0.0
        %3646 = vmatmul.mubr.f32.gmra.mxu0 %v3453
        %v3647 = vpop.f32.mrf.mxu0
        %v3648 = vadd.f32 0.0, %v3647
        %v3649 = vpop.f32.mrf.mxu0
        %3650 = vmatprep.mubr.f32.mxu0 0.0
        %3651 = vmatmul.mubr.f32.gmra.mxu0 %v3456
        %v3652 = vpop.f32.mrf.mxu0
        %v3653 = vadd.f32 0.0, %v3652
        %v3654 = vpop.f32.mrf.mxu0
        %3655 = vmatprep.mubr.f32.mxu0 0.0
        %3656 = vmatmul.mubr.f32.gmra.mxu0 %v3459
        %v3657 = vpop.f32.mrf.mxu0
        %v3658 = vadd.f32 0.0, %v3657
        %v3659 = vpop.f32.mrf.mxu0
        %3660 = vmatprep.mubr.f32.mxu0 0.0
        %3661 = vmatmul.mubr.f32.gmra.mxu0 %v3462
        %v3662 = vpop.f32.mrf.mxu0
        %v3663 = vadd.f32 0.0, %v3662
        %v3664 = vpop.f32.mrf.mxu0
        %3665 = vmatprep.mubr.f32.mxu0 0.0
        %3666 = vmatmul.mubr.f32.gmra.mxu0 %v3465
        %v3667 = vpop.f32.mrf.mxu0
        %v3668 = vadd.f32 0.0, %v3667
        %v3669 = vpop.f32.mrf.mxu0
        %3670 = vmatprep.mubr.f32.mxu0 0.0
        %3671 = vmatmul.mubr.f32.gmra.mxu0 %v3468
        %v3672 = vpop.f32.mrf.mxu0
        %v3673 = vadd.f32 0.0, %v3672
        %v3674 = vpop.f32.mrf.mxu0
        %3675 = vmatprep.mubr.f32.mxu0 0.0
        %3676 = vmatmul.mubr.f32.gmra.mxu0 %v3471
        %v3677 = vpop.f32.mrf.mxu0
        %v3678 = vadd.f32 0.0, %v3677
        %v3679 = vpop.f32.mrf.mxu0
        %3680 = vmatprep.mubr.f32.mxu0 0.0
        %3681 = vmatmul.mubr.f32.gmra.mxu0 %v3474
        %v3682 = vpop.f32.mrf.mxu0
        %v3683 = vadd.f32 0.0, %v3682
        %v3684 = vpop.f32.mrf.mxu0
        %3685 = vmatprep.mubr.f32.mxu0 0.0
        %3686 = vmatmul.mubr.f32.gmra.mxu0 %v3477
        %v3687 = vpop.f32.mrf.mxu0
        %v3688 = vadd.f32 0.0, %v3687
        %v3689 = vpop.f32.mrf.mxu0
        %3690 = vmatprep.mubr.f32.mxu0 0.0
        %3691 = vmatmul.mubr.f32.gmra.mxu0 %v3480
        %v3692 = vpop.f32.mrf.mxu0
        %v3693 = vadd.f32 0.0, %v3692
        %v3694 = vpop.f32.mrf.mxu0
        %3695 = vmatprep.mubr.f32.mxu0 0.0
        %3696 = vmatmul.mubr.f32.gmra.mxu0 %v3483
        %v3697 = vpop.f32.mrf.mxu0
        %v3698 = vadd.f32 0.0, %v3697
        %v3699 = vpop.f32.mrf.mxu0
        %3700 = vmatprep.mubr.f32.mxu0 0.0
        %3701 = vmatmul.mubr.f32.gmra.mxu0 %v3486
        %v3702 = vpop.f32.mrf.mxu0
        %v3703 = vadd.f32 0.0, %v3702
        %v3704 = vpop.f32.mrf.mxu0
        %3705 = vmatprep.mubr.f32.mxu0 0.0
        %3706 = vmatmul.mubr.f32.gmra.mxu0 %v3489
        %v3707 = vpop.f32.mrf.mxu0
        %v3708 = vadd.f32 0.0, %v3707
        %v3709 = vpop.f32.mrf.mxu0
        %3710 = vmatprep.mubr.f32.mxu0 0.0
        %3711 = vmatmul.mubr.f32.gmra.mxu0 %v3492
        %v3712 = vpop.f32.mrf.mxu0
        %v3713 = vadd.f32 0.0, %v3712
        %v3714 = vpop.f32.mrf.mxu0
        %3715 = vmatprep.mubr.f32.mxu0 0.0
        %3716 = vmatmul.mubr.f32.gmra.mxu0 %v3495
        %v3717 = vpop.f32.mrf.mxu0
        %v3718 = vadd.f32 0.0, %v3717
        %v3719 = vpop.f32.mrf.mxu0
        %3720 = vmatprep.mubr.f32.mxu0 0.0
        %3721 = vmatmul.mubr.f32.gmra.mxu0 %v3498
        %v3722 = vpop.f32.mrf.mxu0
        %v3723 = vadd.f32 0.0, %v3722
        %v3724 = vpop.f32.mrf.mxu0
        %3725 = vmatprep.mubr.f32.mxu0 0.0
        %3726 = vmatmul.mubr.f32.gmra.mxu0 %v3501
        %v3727 = vpop.f32.mrf.mxu0
        %v3728 = vadd.f32 0.0, %v3727
        %v3729 = vpop.f32.mrf.mxu0
        %3730 = vdwg.mxu0
        %v3731 = vadd.f32 %v3342, %v3573
        %v3732 = vadd.f32 %v3343, %v3578
        %v3733 = vadd.f32 %v3344, %v3583
        %v3734 = vadd.f32 %v3345, %v3588
        %v3735 = vadd.f32 %v3346, %v3593
        %v3736 = vadd.f32 %v3347, %v3598
        %v3737 = vadd.f32 %v3348, %v3603
        %v3738 = vadd.f32 %v3349, %v3608
        %v3739 = vadd.f32 %v3350, %v3613
        %v3740 = vadd.f32 %v3351, %v3618
        %v3741 = vadd.f32 %v3352, %v3623
        %v3742 = vadd.f32 %v3353, %v3628
        %v3743 = vadd.f32 %v3354, %v3633
        %v3744 = vadd.f32 %v3355, %v3638
        %v3745 = vadd.f32 %v3356, %v3643
        %v3746 = vadd.f32 %v3357, %v3648
        %v3747 = vadd.f32 %v3358, %v3653
        %v3748 = vadd.f32 %v3359, %v3658
        %v3749 = vadd.f32 %v3360, %v3663
        %v3750 = vadd.f32 %v3361, %v3668
        %v3751 = vadd.f32 %v3362, %v3673
        %v3752 = vadd.f32 %v3363, %v3678
        %v3753 = vadd.f32 %v3364, %v3683
        %v3754 = vadd.f32 %v3365, %v3688
        %v3755 = vadd.f32 %v3366, %v3693
        %v3756 = vadd.f32 %v3367, %v3698
        %v3757 = vadd.f32 %v3368, %v3703
        %v3758 = vadd.f32 %v3369, %v3708
        %v3759 = vadd.f32 %v3370, %v3713
        %v3760 = vadd.f32 %v3371, %v3718
        %v3761 = vadd.f32 %v3372, %v3723
        %v3762 = vadd.f32 %v3373, %v3728
        %3763 = vst.msk [vmem:[%s216] sm:$0xff] %vm249, %v3731
        %3764 = vst.msk [vmem:[%s216 + $0x8] sm:$0xff] %vm249, %v3732
        %3765 = vst.msk [vmem:[%s216 + $0x10] sm:$0xff] %vm249, %v3733
        %3766 = vst.msk [vmem:[%s216 + $0x18] sm:$0xff] %vm249, %v3734
        %3767 = vst.msk [vmem:[%s216 + $0x20] sm:$0xff] %vm249, %v3735
        %3768 = vst.msk [vmem:[%s216 + $0x28] sm:$0xff] %vm249, %v3736
        %3769 = vst.msk [vmem:[%s216 + $0x30] sm:$0xff] %vm249, %v3737
        %3770 = vst.msk [vmem:[%s216 + $0x38] sm:$0xff] %vm249, %v3738
        %3771 = vst.msk [vmem:[%s216 + $0x40] sm:$0xff] %vm249, %v3739
        %3772 = vst.msk [vmem:[%s216 + $0x48] sm:$0xff] %vm249, %v3740
        %3773 = vst.msk [vmem:[%s216 + $0x50] sm:$0xff] %vm249, %v3741
        %3774 = vst.msk [vmem:[%s216 + $0x58] sm:$0xff] %vm249, %v3742
        %3775 = vst.msk [vmem:[%s216 + $0x60] sm:$0xff] %vm249, %v3743
        %3776 = vst.msk [vmem:[%s216 + $0x68] sm:$0xff] %vm249, %v3744
        %3777 = vst.msk [vmem:[%s216 + $0x70] sm:$0xff] %vm249, %v3745
        %3778 = vst.msk [vmem:[%s216 + $0x78] sm:$0xff] %vm249, %v3746
        %3779 = vst.msk [vmem:[%s216 + $0x80] sm:$0xff] %vm249, %v3747
        %3780 = vst.msk [vmem:[%s216 + $0x88] sm:$0xff] %vm249, %v3748
        %3781 = vst.msk [vmem:[%s216 + $0x90] sm:$0xff] %vm249, %v3749
        %3782 = vst.msk [vmem:[%s216 + $0x98] sm:$0xff] %vm249, %v3750
        %3783 = vst.msk [vmem:[%s216 + $0xa0] sm:$0xff] %vm249, %v3751
        %3784 = vst.msk [vmem:[%s216 + $0xa8] sm:$0xff] %vm249, %v3752
        %3785 = vst.msk [vmem:[%s216 + $0xb0] sm:$0xff] %vm249, %v3753
        %3786 = vst.msk [vmem:[%s216 + $0xb8] sm:$0xff] %vm249, %v3754
        %3787 = vst.msk [vmem:[%s216 + $0xc0] sm:$0xff] %vm249, %v3755
        %3788 = vst.msk [vmem:[%s216 + $0xc8] sm:$0xff] %vm249, %v3756
        %3789 = vst.msk [vmem:[%s216 + $0xd0] sm:$0xff] %vm249, %v3757
        %3790 = vst.msk [vmem:[%s216 + $0xd8] sm:$0xff] %vm249, %v3758
        %3791 = vst.msk [vmem:[%s216 + $0xe0] sm:$0xff] %vm249, %v3759
        %3792 = vst.msk [vmem:[%s216 + $0xe8] sm:$0xff] %vm249, %v3760
        %3793 = vst.msk [vmem:[%s216 + $0xf0] sm:$0xff] %vm249, %v3761
        %3794 = vst.msk [vmem:[%s216 + $0xf8] sm:$0xff] %vm249, %v3762
        %v3795 = vsel %vm249, %v3731, 0.0
        %v3796 = vsel %vm249, %v3732, 0.0
        %v3797 = vadd.f32 %v3795, %v3796
        %v3798 = vsel %vm249, %v3733, 0.0
        %v3799 = vadd.f32 %v3797, %v3798
        %v3800 = vsel %vm249, %v3734, 0.0
        %v3801 = vadd.f32 %v3799, %v3800
        %v3802 = vsel %vm249, %v3735, 0.0
        %v3803 = vadd.f32 %v3801, %v3802
        %v3804 = vsel %vm249, %v3736, 0.0
        %v3805 = vadd.f32 %v3803, %v3804
        %v3806 = vsel %vm249, %v3737, 0.0
        %v3807 = vadd.f32 %v3805, %v3806
        %v3808 = vsel %vm249, %v3738, 0.0
        %v3809 = vadd.f32 %v3807, %v3808
        %v3810 = vsel %vm249, %v3739, 0.0
        %v3811 = vadd.f32 %v3809, %v3810
        %v3812 = vsel %vm249, %v3740, 0.0
        %v3813 = vadd.f32 %v3811, %v3812
        %v3814 = vsel %vm249, %v3741, 0.0
        %v3815 = vadd.f32 %v3813, %v3814
        %v3816 = vsel %vm249, %v3742, 0.0
        %v3817 = vadd.f32 %v3815, %v3816
        %v3818 = vsel %vm249, %v3743, 0.0
        %v3819 = vadd.f32 %v3817, %v3818
        %v3820 = vsel %vm249, %v3744, 0.0
        %v3821 = vadd.f32 %v3819, %v3820
        %v3822 = vsel %vm249, %v3745, 0.0
        %v3823 = vadd.f32 %v3821, %v3822
        %v3824 = vsel %vm249, %v3746, 0.0
        %v3825 = vadd.f32 %v3823, %v3824
        %v3826 = vsel %vm249, %v3747, 0.0
        %v3827 = vadd.f32 %v3825, %v3826
        %v3828 = vsel %vm249, %v3748, 0.0
        %v3829 = vadd.f32 %v3827, %v3828
        %v3830 = vsel %vm249, %v3749, 0.0
        %v3831 = vadd.f32 %v3829, %v3830
        %v3832 = vsel %vm249, %v3750, 0.0
        %v3833 = vadd.f32 %v3831, %v3832
        %v3834 = vsel %vm249, %v3751, 0.0
        %v3835 = vadd.f32 %v3833, %v3834
        %v3836 = vsel %vm249, %v3752, 0.0
        %v3837 = vadd.f32 %v3835, %v3836
        %v3838 = vsel %vm249, %v3753, 0.0
        %v3839 = vadd.f32 %v3837, %v3838
        %v3840 = vsel %vm249, %v3754, 0.0
        %v3841 = vadd.f32 %v3839, %v3840
        %v3842 = vsel %vm249, %v3755, 0.0
        %v3843 = vadd.f32 %v3841, %v3842
        %v3844 = vsel %vm249, %v3756, 0.0
        %v3845 = vadd.f32 %v3843, %v3844
        %v3846 = vsel %vm249, %v3757, 0.0
        %v3847 = vadd.f32 %v3845, %v3846
        %v3848 = vsel %vm249, %v3758, 0.0
        %v3849 = vadd.f32 %v3847, %v3848
        %v3850 = vsel %vm249, %v3759, 0.0
        %v3851 = vadd.f32 %v3849, %v3850
        %v3852 = vsel %vm249, %v3760, 0.0
        %v3853 = vadd.f32 %v3851, %v3852
        %v3854 = vsel %vm249, %v3761, 0.0
        %v3855 = vadd.f32 %v3853, %v3854
        %v3856 = vsel %vm249, %v3762, 0.0
        %v3857 = vadd.f32 %v3855, %v3856
        %v3858 = vrot.slane %v3857, 4
        %v3859 = vadd.f32 %v3857, %v3858
        %v3860 = vrot.slane %v3859, 2
        %v3861 = vadd.f32 %v3859, %v3860
        %v3862 = vrot.slane %v3861, 1
        %v3863 = vadd.f32 %v3861, %v3862
        %v3864 = vmul.f32 %v3863, 0.00390625
        %v3865 = vsub.f32 %v3731, %v3864
        %v3866 = vsub.f32 %v3732, %v3864
        %v3867 = vsub.f32 %v3733, %v3864
        %v3868 = vsub.f32 %v3734, %v3864
        %v3869 = vsub.f32 %v3735, %v3864
        %v3870 = vsub.f32 %v3736, %v3864
        %v3871 = vsub.f32 %v3737, %v3864
        %v3872 = vsub.f32 %v3738, %v3864
        %v3873 = vsub.f32 %v3739, %v3864
        %v3874 = vsub.f32 %v3740, %v3864
        %v3875 = vsub.f32 %v3741, %v3864
        %v3876 = vsub.f32 %v3742, %v3864
        %v3877 = vsub.f32 %v3743, %v3864
        %v3878 = vsub.f32 %v3744, %v3864
        %v3879 = vsub.f32 %v3745, %v3864
        %v3880 = vsub.f32 %v3746, %v3864
        %v3881 = vsub.f32 %v3747, %v3864
        %v3882 = vsub.f32 %v3748, %v3864
        %v3883 = vsub.f32 %v3749, %v3864
        %v3884 = vsub.f32 %v3750, %v3864
        %v3885 = vsub.f32 %v3751, %v3864
        %v3886 = vsub.f32 %v3752, %v3864
        %v3887 = vsub.f32 %v3753, %v3864
        %v3888 = vsub.f32 %v3754, %v3864
        %v3889 = vsub.f32 %v3755, %v3864
        %v3890 = vsub.f32 %v3756, %v3864
        %v3891 = vsub.f32 %v3757, %v3864
        %v3892 = vsub.f32 %v3758, %v3864
        %v3893 = vsub.f32 %v3759, %v3864
        %v3894 = vsub.f32 %v3760, %v3864
        %v3895 = vsub.f32 %v3761, %v3864
        %v3896 = vsub.f32 %v3762, %v3864
        %v3897 = vmul.f32 %v3865, %v3865
        %v3898 = vmul.f32 %v3866, %v3866
        %v3899 = vmul.f32 %v3867, %v3867
        %v3900 = vmul.f32 %v3868, %v3868
        %v3901 = vmul.f32 %v3869, %v3869
        %v3902 = vmul.f32 %v3870, %v3870
        %v3903 = vmul.f32 %v3871, %v3871
        %v3904 = vmul.f32 %v3872, %v3872
        %v3905 = vmul.f32 %v3873, %v3873
        %v3906 = vmul.f32 %v3874, %v3874
        %v3907 = vmul.f32 %v3875, %v3875
        %v3908 = vmul.f32 %v3876, %v3876
        %v3909 = vmul.f32 %v3877, %v3877
        %v3910 = vmul.f32 %v3878, %v3878
        %v3911 = vmul.f32 %v3879, %v3879
        %v3912 = vmul.f32 %v3880, %v3880
        %v3913 = vmul.f32 %v3881, %v3881
        %v3914 = vmul.f32 %v3882, %v3882
        %v3915 = vmul.f32 %v3883, %v3883
        %v3916 = vmul.f32 %v3884, %v3884
        %v3917 = vmul.f32 %v3885, %v3885
        %v3918 = vmul.f32 %v3886, %v3886
        %v3919 = vmul.f32 %v3887, %v3887
        %v3920 = vmul.f32 %v3888, %v3888
        %v3921 = vmul.f32 %v3889, %v3889
        %v3922 = vmul.f32 %v3890, %v3890
        %v3923 = vmul.f32 %v3891, %v3891
        %v3924 = vmul.f32 %v3892, %v3892
        %v3925 = vmul.f32 %v3893, %v3893
        %v3926 = vmul.f32 %v3894, %v3894
        %v3927 = vmul.f32 %v3895, %v3895
        %v3928 = vmul.f32 %v3896, %v3896
        %v3929 = vsel %vm249, %v3897, 0.0
        %v3930 = vsel %vm249, %v3898, 0.0
        %v3931 = vadd.f32 %v3929, %v3930
        %v3932 = vsel %vm249, %v3899, 0.0
        %v3933 = vadd.f32 %v3931, %v3932
        %v3934 = vsel %vm249, %v3900, 0.0
        %v3935 = vadd.f32 %v3933, %v3934
        %v3936 = vsel %vm249, %v3901, 0.0
        %v3937 = vadd.f32 %v3935, %v3936
        %v3938 = vsel %vm249, %v3902, 0.0
        %v3939 = vadd.f32 %v3937, %v3938
        %v3940 = vsel %vm249, %v3903, 0.0
        %v3941 = vadd.f32 %v3939, %v3940
        %v3942 = vsel %vm249, %v3904, 0.0
        %v3943 = vadd.f32 %v3941, %v3942
        %v3944 = vsel %vm249, %v3905, 0.0
        %v3945 = vadd.f32 %v3943, %v3944
        %v3946 = vsel %vm249, %v3906, 0.0
        %v3947 = vadd.f32 %v3945, %v3946
        %v3948 = vsel %vm249, %v3907, 0.0
        %v3949 = vadd.f32 %v3947, %v3948
        %v3950 = vsel %vm249, %v3908, 0.0
        %v3951 = vadd.f32 %v3949, %v3950
        %v3952 = vsel %vm249, %v3909, 0.0
        %v3953 = vadd.f32 %v3951, %v3952
        %v3954 = vsel %vm249, %v3910, 0.0
        %v3955 = vadd.f32 %v3953, %v3954
        %v3956 = vsel %vm249, %v3911, 0.0
        %v3957 = vadd.f32 %v3955, %v3956
        %v3958 = vsel %vm249, %v3912, 0.0
        %v3959 = vadd.f32 %v3957, %v3958
        %v3960 = vsel %vm249, %v3913, 0.0
        %v3961 = vadd.f32 %v3959, %v3960
        %v3962 = vsel %vm249, %v3914, 0.0
        %v3963 = vadd.f32 %v3961, %v3962
        %v3964 = vsel %vm249, %v3915, 0.0
        %v3965 = vadd.f32 %v3963, %v3964
        %v3966 = vsel %vm249, %v3916, 0.0
        %v3967 = vadd.f32 %v3965, %v3966
        %v3968 = vsel %vm249, %v3917, 0.0
        %v3969 = vadd.f32 %v3967, %v3968
        %v3970 = vsel %vm249, %v3918, 0.0
        %v3971 = vadd.f32 %v3969, %v3970
        %v3972 = vsel %vm249, %v3919, 0.0
        %v3973 = vadd.f32 %v3971, %v3972
        %v3974 = vsel %vm249, %v3920, 0.0
        %v3975 = vadd.f32 %v3973, %v3974
        %v3976 = vsel %vm249, %v3921, 0.0
        %v3977 = vadd.f32 %v3975, %v3976
        %v3978 = vsel %vm249, %v3922, 0.0
        %v3979 = vadd.f32 %v3977, %v3978
        %v3980 = vsel %vm249, %v3923, 0.0
        %v3981 = vadd.f32 %v3979, %v3980
        %v3982 = vsel %vm249, %v3924, 0.0
        %v3983 = vadd.f32 %v3981, %v3982
        %v3984 = vsel %vm249, %v3925, 0.0
        %v3985 = vadd.f32 %v3983, %v3984
        %v3986 = vsel %vm249, %v3926, 0.0
        %v3987 = vadd.f32 %v3985, %v3986
        %v3988 = vsel %vm249, %v3927, 0.0
        %v3989 = vadd.f32 %v3987, %v3988
        %v3990 = vsel %vm249, %v3928, 0.0
        %v3991 = vadd.f32 %v3989, %v3990
        %v3992 = vrot.slane %v3991, 4
        %v3993 = vadd.f32 %v3991, %v3992
        %v3994 = vrot.slane %v3993, 2
        %v3995 = vadd.f32 %v3993, %v3994
        %v3996 = vrot.slane %v3995, 1
        %v3997 = vadd.f32 %v3995, %v3996
        %3998 = vst.msk [vmem:[%s200] sm:$0x1] %vm259, %v3863
        %3999 = vst.msk [vmem:[%s206] sm:$0x1] %vm259, %v3997
        %p4000 = scmp.lt.s32.totalorder %s22, 1
        %s4001 = scalar_select %p4000, %s22, 1
        %s4002 = smul.addr %s4001, 32
        %s4003 = smul.addr %s4002, 8
        %s4004 = scalar_lea.vmem %s2, %s4003
        %s4005 = sand.u32 %s103, 1
        %s4006 = scalar_lea.sflag [#allocation4], %s4005
        %s4007 = sand.u32 %s103, 1
        %s4008 = scalar_lea.vmem [#allocation3], %s4007
        %s4009 = sand.u32 %s129, 1
        %s4010 = scalar_lea.sflag [#allocation6], %s4009
        %s4011 = sand.u32 %s129, 1
        %s4012 = scalar_lea.vmem [#allocation5], %s4011
        // Predicated region
        $region29: #{tpu_custom_call.1} parent=27 // pred_check
          %p4013 = pneg %p87
        $region30: #{tpu_custom_call.1} parent=27 // pred_check_branch
          %4015 = sbr.rel (%p4013) target = $region32
        $region31: #{tpu_custom_call.1} parent=27 // pred_region
          _
        $region32: #{tpu_custom_call.1} parent=27 // pred_fallthru
          _
        // Predicated region
        $region33: #{tpu_custom_call.1} parent=27 // pred_check
          %p4016 = pneg %p113
        $region34: #{tpu_custom_call.1} parent=27 // pred_check_branch
          %4018 = sbr.rel (%p4016) target = $region36
        $region35: #{tpu_custom_call.1} parent=27 // pred_region
          %s4020 = ssub.s32 16, 16
          %4021 = vsyncadd %s4006, %s4020
          %s4022 = smul.addr %s22, 16
          %s4023 = scalar_lea.hbm %s3, %s4022
          %s4025 = sshll.u32 %s4008, 4
          %s4026 = int_to_ptr.vmem [resolvable:$true] %s4025
          %4028 = dma.vmem_to_hbm [thread:$0]  %s4026, 16, %s4023, %s4006
        $region36: #{tpu_custom_call.1} parent=27 // pred_fallthru
          _
        // Predicated region
        $region37: #{tpu_custom_call.1} parent=27 // pred_check
          %p4029 = pneg %p139
        $region38: #{tpu_custom_call.1} parent=27 // pred_check_branch
          %4031 = sbr.rel (%p4029) target = $region40
        $region39: #{tpu_custom_call.1} parent=27 // pred_region
          %s4033 = ssub.s32 16, 16
          %4034 = vsyncadd %s4010, %s4033
          %s4035 = smul.addr %s22, 16
          %s4036 = scalar_lea.hbm %s4, %s4035
          %s4038 = sshll.u32 %s4012, 4
          %s4039 = int_to_ptr.vmem [resolvable:$true] %s4038
          %4041 = dma.vmem_to_hbm [thread:$0]  %s4039, 16, %s4036, %s4010
        $region40: #{tpu_custom_call.1} parent=27 // pred_fallthru
          _
      $region28: #{tpu_custom_call.1} parent=5 // pred_fallthru
        _
      %p4042 = scmp.le.s32.totalorder 2, %s17
      // Predicated region
      $region41: #{tpu_custom_call.1} parent=5 // pred_check
        %p4043 = pneg %p4042
      $region42: #{tpu_custom_call.1} parent=5 // pred_check_branch
        %4045 = sbr.rel (%p4043) target = $region44
      $region43: #{tpu_custom_call.1} parent=5 // pred_region
        %s4046 = ssub.s32 %s17, 2
        // Predicated region
        $region45: #{tpu_custom_call.1} parent=43 // pred_check
          %p4047 = pneg %p93
        $region46: #{tpu_custom_call.1} parent=43 // pred_check_branch
          %4049 = sbr.rel (%p4047) target = $region48
        $region47: #{tpu_custom_call.1} parent=43 // pred_region
          %p4050 = scmp.lt.s32.totalorder %s23, 1
          %s4051 = scalar_select %p4050, %s23, 1
          %s4052 = smul.addr %s4051, 32
          %s4053 = smul.addr %s4052, 8
          %s4054 = scalar_lea.vmem %s2, %s4053
        $region48: #{tpu_custom_call.1} parent=43 // pred_fallthru
          _
        // Predicated region
        $region49: #{tpu_custom_call.1} parent=43 // pred_check
          %p4055 = pneg %p119
        $region50: #{tpu_custom_call.1} parent=43 // pred_check_branch
          %4057 = sbr.rel (%p4055) target = $region52
        $region51: #{tpu_custom_call.1} parent=43 // pred_region
          %s4058 = sand.u32 %s104, 1
          %s4059 = scalar_lea.sflag [#allocation4], %s4058
          %s4060 = sand.u32 %s104, 1
          %s4061 = scalar_lea.vmem [#allocation3], %s4060
          %4062 = dma.done %s4059, 16
        $region52: #{tpu_custom_call.1} parent=43 // pred_fallthru
          _
        // Predicated region
        $region53: #{tpu_custom_call.1} parent=43 // pred_check
          %p4063 = pneg %p145
        $region54: #{tpu_custom_call.1} parent=43 // pred_check_branch
          %4065 = sbr.rel (%p4063) target = $region56
        $region55: #{tpu_custom_call.1} parent=43 // pred_region
          %s4066 = sand.u32 %s130, 1
          %s4067 = scalar_lea.sflag [#allocation6], %s4066
          %s4068 = sand.u32 %s130, 1
          %s4069 = scalar_lea.vmem [#allocation5], %s4068
          %4070 = dma.done %s4067, 16
        $region56: #{tpu_custom_call.1} parent=43 // pred_fallthru
          _
      $region44: #{tpu_custom_call.1} parent=5 // pred_fallthru
        _
    $region6: #{tpu_custom_call.1} parent=1 // loop_footer
      %s21 = sadd.s32 1, %s17
    $region7: #{tpu_custom_call.1} parent=1 // loop_footer_branch
      %16 = sbr.rel target = $region3
    $region8: #{tpu_custom_call.1} parent=1 // loop_exit
      _
    %4071 = vsyncpa [#allocation4], 1
    %s4072 = scalar_lea.sflag [#allocation4], 1
    %4073 = vsyncpa %s4072, 1
    %4074 = vsyncpa [#allocation6], 1
    %s4075 = scalar_lea.sflag [#allocation6], 1
    %4076 = vsyncpa %s4075, 1

</llo_original>
